<compile_context>
chip_gen: v7x
topology: tpu7x:2x2x1
jax: 0.10.0
libtpu: 0.0.40
codegen_flags: <defaults>
</compile_context>

<pallas_src>
import jax
import jax.numpy as jnp
from jax.experimental import pallas as pl
from jax.experimental.pallas import tpu as pltpu

EPS_MSG = 1e-7        # GENConv message eps
EPS_SOFTMAX = 1e-16   # pyg softmax denominator eps
BN_EPS = 1e-5         # BatchNorm1d eps
DROP_P = 0.2
LANES = 128

LAYER_DIMS = [(4, 8), (12, 16), (20, 32), (36, 64), (68, 32), (36, 16), (20, 8)]
N_GEN = len(LAYER_DIMS)
REFS_PER_GEN = 6      # w_sd, w1, gamma, beta, w2, b2


# ---------------------------------------------------------------------------
# Fused Pallas kernel: entire forward pass in one call
# ---------------------------------------------------------------------------
def _gcn_kernel(ts_ref, x_ref, x0s_ref, mask_ref, adj_ref, invdeg_ref, *rest):
    out_ref = rest[-1]
    wrefs = rest[:-1]
    n_gen = (len(wrefs) - 2) // REFS_PER_GEN

    adj = adj_ref[...]                     # bf16 [N, N], A[dst, src]
    x = x_ref[...]                         # f32  [N, 128], data.x in lanes 0..3

    for i in range(n_gen):                 # fully unrolled: per-layer weights
        w_sd, w1, gamma, beta, w2, b2 = wrefs[REFS_PER_GEN * i: REFS_PER_GEN * (i + 1)]
        t = ts_ref[i]                      # learnable softmax temperature

        # --- fused lin_src | lin_dst (weights padded to 128-lane blocks) ---
        h_all = jnp.dot(x.astype(jnp.bfloat16), w_sd[...],
                        preferred_element_type=jnp.float32)          # [N, 256]
        h = h_all[:, :LANES]                                          # lin_src(x)
        h_dst = h_all[:, LANES:]                                      # lin_dst(x)

        # message + softmax aggregation over incoming edges (per feature).
        # Softmax is shift-invariant -> subtract global per-feature max.
        m = jnp.maximum(h, 0.0) + EPS_MSG
        a = m * t
        a = a - jnp.max(a, axis=0, keepdims=True)
        e = jnp.exp(a)
        rhs = jnp.concatenate([e * m, e], axis=1).astype(jnp.bfloat16)  # 128-bound
        agg = jnp.dot(adj, rhs, preferred_element_type=jnp.float32)     # [N, 256]
        out = agg[:, :LANES] / (agg[:, LANES:] + EPS_SOFTMAX) + h_dst

        # --- MLP: Linear -> BatchNorm (training-mode stats) -> ReLU -> Linear
        # (the Linear bias b1 cancels exactly under mean subtraction: dropped)
        h1 = jnp.dot(out.astype(jnp.bfloat16), w1[...],
                     preferred_element_type=jnp.float32)              # [N, 128]
        stats = jnp.mean(jnp.concatenate([h1, h1 * h1], axis=1),      # single
                         axis=0, keepdims=True)                       # reduction
        mean = stats[:, :LANES]
        var = jnp.maximum(stats[:, LANES:] - mean * mean, 0.0)
        h1 = (h1 - mean) * jax.lax.rsqrt(var + BN_EPS) * gamma[...] + beta[...]
        h1 = jnp.maximum(h1, 0.0)
        xl = jnp.dot(h1.astype(jnp.bfloat16), w2[...],
                     preferred_element_type=jnp.float32) + b2[...]

        # --- concat(data.x) as an add into pre-shifted lanes, then dropout ---
        # TODO(synk): torch's dropout RNG stream cannot be reproduced bit-exactly.
        x = (xl + x0s_ref[i]) * mask_ref[i]

    # --- final SAGEConv (mean aggr), fused lin_l | lin_r, lane-dense output ---
    w_lr, b_sage = wrefs[-2], wrefs[-1]
    xb = x.astype(jnp.bfloat16)
    nb = jnp.dot(adj, xb, preferred_element_type=jnp.float32) * invdeg_ref[...]
    cat = jnp.concatenate([nb.astype(jnp.bfloat16), xb], axis=1)      # [N, 256]
    out_ref[...] = jnp.dot(cat, w_lr[...],
                           preferred_element_type=jnp.float32) + b_sage[...]


# ---------------------------------------------------------------------------
# Wrapper
# ---------------------------------------------------------------------------
def _vmem():
    return pl.BlockSpec(memory_space=pltpu.MemorySpace.VMEM)


def _smem():
    return pl.BlockSpec(memory_space=pltpu.MemorySpace.SMEM)


def _pad2(a, rows, cols, dtype=None):
    a = jnp.pad(a, ((0, rows - a.shape[0]), (0, cols - a.shape[1])))
    return a.astype(dtype) if dtype is not None else a


@jax.jit
def gcn_forward(params, x0, adj, drop_key):
    """Full GCN forward. adj: dense A[dst, src]; drop_key: dropout PRNG key."""
    n, c0 = x0.shape
    x0 = x0.astype(jnp.float32)
    adj_bf16 = adj.astype(jnp.bfloat16)

    # ---- pack parameters: bf16 pre-cast + zero-pad to 128-lane blocks ----
    flat, ts = [], []
    for p, (c_in, c_out) in zip(params["gen"], LAYER_DIMS):
        w_sd = jnp.concatenate(
            [_pad2(p["w_src"], LANES, LANES), _pad2(p["w_dst"], LANES, LANES)],
            axis=1).astype(jnp.bfloat16)                               # [128, 256]
        flat += [
            w_sd,
            _pad2(p["w1"], LANES, LANES, jnp.bfloat16),                # [128, 128]
            _pad2(p["gamma"], 1, LANES),                               # f32 [1,128]
            _pad2(p["beta"], 1, LANES),
            _pad2(p["w2"], LANES, LANES, jnp.bfloat16),
            _pad2(p["b2"], 1, LANES),
        ]
        ts.append(p["t"])
    ts = jnp.stack(ts).astype(jnp.float32)                             # SMEM [7]

    sp = params["sage"]
    w_lr = jnp.concatenate(
        [_pad2(sp["w_l"], LANES, LANES), _pad2(sp["w_r"], LANES, LANES)],
        axis=0).astype(jnp.bfloat16)                                   # [256, 128]
    b_sage = _pad2(sp["b_l"], 1, LANES)
    flat += [w_lr, b_sage]

    # ---- lane-padded activations, per-layer data.x slabs, dropout masks ----
    x_init = _pad2(x0, n, LANES)                                       # lanes 0..3
    x0_slabs = jnp.stack(
        [jnp.pad(x0, ((0, 0), (c_out, LANES - c_out - c0)))
         for (_, c_out) in LAYER_DIMS])                                # [7, N, 128]

    keep = jax.random.bernoulli(drop_key, 1.0 - DROP_P, (N_GEN, n, LANES))
    masks = keep.astype(jnp.float32) * (1.0 / (1.0 - DROP_P))          # [7, N, 128]

    deg = jnp.sum(adj.astype(jnp.float32), axis=1, keepdims=True)      # in-degree
    inv_deg = jnp.broadcast_to(1.0 / jnp.maximum(deg, 1.0), (n, LANES))

    # rough cost hint for the XLA scheduler (advisory only)
    flops = 0
    for _ in LAYER_DIMS:
        flops += 2 * n * LANES * 2 * LANES        # x @ [w_src | w_dst]
        flops += 2 * n * n * 2 * LANES            # adj @ [e*m | e]
        flops += 2 * 2 * n * LANES * LANES        # the two MLP matmuls
    flops += 2 * n * n * LANES + 2 * n * 2 * LANES * LANES             # SAGE
    bytes_accessed = sum(int(a.size) * a.dtype.itemsize for a in
                         [ts, x_init, x0_slabs, masks, adj_bf16, inv_deg, *flat])
    bytes_accessed += n * LANES * 4                                    # output

    out = pl.pallas_call(
        _gcn_kernel,
        out_shape=jax.ShapeDtypeStruct((n, LANES), jnp.float32),
        in_specs=[_smem()] + [_vmem()] * (5 + len(flat)),
        out_specs=_vmem(),
        compiler_params=pltpu.CompilerParams(vmem_limit_bytes=32 * 1024 * 1024),
        cost_estimate=pl.CostEstimate(flops=flops,
                                      transcendentals=N_GEN * n * LANES,
                                      bytes_accessed=bytes_accessed),
    )(ts, x_init, x0_slabs, masks, adj_bf16, inv_deg, *flat)
    return out[:, :1]                                                  # SAGE width = 1


# ---------------------------------------------------------------------------
# Parameter init (deterministic, synthetic)
# ---------------------------------------------------------------------------
def init_genconv(key, c_in, c_out):
    ks = jax.random.split(key, 4)
    hidden = 2 * c_out
    rnd = lambda k, shp: 0.1 * jax.random.normal(k, shp, jnp.float32)
    return {
        "w_src": rnd(ks[0], (c_in, c_out)),      # lin_src (stored transposed)
        "w_dst": rnd(ks[1], (c_in, c_out)),      # lin_dst (stored transposed)
        "t": jnp.float32(1.0),                   # learnable temperature, init 1.0
        "w1": rnd(ks[2], (c_out, hidden)),
        "b1": jnp.zeros((1, hidden), jnp.float32),   # cancels in train-mode BN;
                                                     # kept for fidelity, not shipped
        "gamma": jnp.ones((1, hidden), jnp.float32),
        "beta": jnp.zeros((1, hidden), jnp.float32),
        "w2": rnd(ks[3], (hidden, c_out)),
        "b2": jnp.zeros((1, c_out), jnp.float32),
    }


def init_sageconv(key, c_in, c_out):
    ks = jax.random.split(key, 2)
    rnd = lambda k, shp: 0.1 * jax.random.normal(k, shp, jnp.float32)
    return {
        "w_l": rnd(ks[0], (c_in, c_out)),
        "b_l": jnp.zeros((1, c_out), jnp.float32),
        "w_r": rnd(ks[1], (c_in, c_out)),
    }


def init_gcn_params(key):
    keys = jax.random.split(key, N_GEN + 1)
    gen = [init_genconv(k, ci, co) for k, (ci, co) in zip(keys[:-1], LAYER_DIMS)]
    sage = init_sageconv(keys[-1], 12, 1)
    return {"gen": gen, "sage": sage}


def edge_index_to_dense_adj(edge_index, num_nodes):
    # NOTE: duplicate edges collapse to 1.0 (fine for the ring graph used here).
    src, dst = edge_index[0], edge_index[1]
    adj = jnp.zeros((num_nodes, num_nodes), jnp.float32)
    return adj.at[dst, src].set(1.0)             # A[dst, src] = 1 (src -> dst messages)


# ---------------------------------------------------------------------------
if __name__ == "__main__":
    key = jax.random.PRNGKey(0)
    k_param, k_x, k_drop = jax.random.split(key, 3)

    N = 16
    x = jax.random.normal(k_x, (N, 4), jnp.float32)            # data.x

    # deterministic bidirectional ring graph: edge_index [2, 2N]
    idx = jnp.arange(N)
    src = jnp.concatenate([idx, (idx + 1) % N])
    dst = jnp.concatenate([(idx + 1) % N, idx])
    edge_index = jnp.stack([src, dst])                          # [2, 32]
    adj = edge_index_to_dense_adj(edge_index, N)

    params = init_gcn_params(k_param)

    out = jax.block_until_ready(gcn_forward(params, x, adj, k_drop))
    assert out.shape == (N, 1), out.shape
    assert bool(jnp.all(jnp.isfinite(out)))
    print("KERNEL_OK")
</pallas_src>

<mosaic_0001>
module attributes {stable_mosaic.version = 11 : i64} {
  func.func @_gcn_kernel(%arg0: memref<7xf32, #tpu.memory_space<smem>>, %arg1: memref<16x128xf32, #tpu.memory_space<vmem>>, %arg2: memref<7x16x128xf32, #tpu.memory_space<vmem>>, %arg3: memref<7x16x128xf32, #tpu.memory_space<vmem>>, %arg4: memref<16x16xbf16, #tpu.memory_space<vmem>>, %arg5: memref<16x128xf32, #tpu.memory_space<vmem>>, %arg6: memref<128x256xbf16, #tpu.memory_space<vmem>>, %arg7: memref<128x128xbf16, #tpu.memory_space<vmem>>, %arg8: memref<1x128xf32, #tpu.memory_space<vmem>>, %arg9: memref<1x128xf32, #tpu.memory_space<vmem>>, %arg10: memref<128x128xbf16, #tpu.memory_space<vmem>>, %arg11: memref<1x128xf32, #tpu.memory_space<vmem>>, %arg12: memref<128x256xbf16, #tpu.memory_space<vmem>>, %arg13: memref<128x128xbf16, #tpu.memory_space<vmem>>, %arg14: memref<1x128xf32, #tpu.memory_space<vmem>>, %arg15: memref<1x128xf32, #tpu.memory_space<vmem>>, %arg16: memref<128x128xbf16, #tpu.memory_space<vmem>>, %arg17: memref<1x128xf32, #tpu.memory_space<vmem>>, %arg18: memref<128x256xbf16, #tpu.memory_space<vmem>>, %arg19: memref<128x128xbf16, #tpu.memory_space<vmem>>, %arg20: memref<1x128xf32, #tpu.memory_space<vmem>>, %arg21: memref<1x128xf32, #tpu.memory_space<vmem>>, %arg22: memref<128x128xbf16, #tpu.memory_space<vmem>>, %arg23: memref<1x128xf32, #tpu.memory_space<vmem>>, %arg24: memref<128x256xbf16, #tpu.memory_space<vmem>>, %arg25: memref<128x128xbf16, #tpu.memory_space<vmem>>, %arg26: memref<1x128xf32, #tpu.memory_space<vmem>>, %arg27: memref<1x128xf32, #tpu.memory_space<vmem>>, %arg28: memref<128x128xbf16, #tpu.memory_space<vmem>>, %arg29: memref<1x128xf32, #tpu.memory_space<vmem>>, %arg30: memref<128x256xbf16, #tpu.memory_space<vmem>>, %arg31: memref<128x128xbf16, #tpu.memory_space<vmem>>, %arg32: memref<1x128xf32, #tpu.memory_space<vmem>>, %arg33: memref<1x128xf32, #tpu.memory_space<vmem>>, %arg34: memref<128x128xbf16, #tpu.memory_space<vmem>>, %arg35: memref<1x128xf32, #tpu.memory_space<vmem>>, %arg36: memref<128x256xbf16, #tpu.memory_space<vmem>>, %arg37: memref<128x128xbf16, #tpu.memory_space<vmem>>, %arg38: memref<1x128xf32, #tpu.memory_space<vmem>>, %arg39: memref<1x128xf32, #tpu.memory_space<vmem>>, %arg40: memref<128x128xbf16, #tpu.memory_space<vmem>>, %arg41: memref<1x128xf32, #tpu.memory_space<vmem>>, %arg42: memref<128x256xbf16, #tpu.memory_space<vmem>>, %arg43: memref<128x128xbf16, #tpu.memory_space<vmem>>, %arg44: memref<1x128xf32, #tpu.memory_space<vmem>>, %arg45: memref<1x128xf32, #tpu.memory_space<vmem>>, %arg46: memref<128x128xbf16, #tpu.memory_space<vmem>>, %arg47: memref<1x128xf32, #tpu.memory_space<vmem>>, %arg48: memref<256x128xbf16, #tpu.memory_space<vmem>>, %arg49: memref<1x128xf32, #tpu.memory_space<vmem>>, %arg50: memref<16x128xf32, #tpu.memory_space<vmem>>) attributes {dimension_semantics = [], scalar_prefetch = 0 : i64, scratch_operands = 0 : i64, tpu.core_type = #tpu.core_type<tc>} {
    %c0 = arith.constant 0 : index
    %c0_0 = arith.constant 0 : index
    %0 = vector.load %arg4[%c0, %c0_0] : memref<16x16xbf16, #tpu.memory_space<vmem>>, vector<16x16xbf16>
    %c0_1 = arith.constant 0 : index
    %c0_2 = arith.constant 0 : index
    %1 = vector.load %arg1[%c0_1, %c0_2] : memref<16x128xf32, #tpu.memory_space<vmem>>, vector<16x128xf32>
    %c0_3 = arith.constant 0 : index
    %2 = memref.load %arg0[%c0_3] : memref<7xf32, #tpu.memory_space<smem>>
    %3 = arith.truncf %1 : vector<16x128xf32> to vector<16x128xbf16>
    %c0_4 = arith.constant 0 : index
    %c0_5 = arith.constant 0 : index
    %4 = vector.load %arg6[%c0_4, %c0_5] : memref<128x256xbf16, #tpu.memory_space<vmem>>, vector<128x256xbf16>
    %cst = arith.constant dense<0.000000e+00> : vector<16x256xf32>
    %5 = tpu.matmul %3, %4, %cst {dimension_numbers = #tpu.dot_dimension_numbers<[1], [0], [0], [1], [0, 0, 1, 1], [], []>} : vector<16x128xbf16>, vector<128x256xbf16>, vector<16x256xf32> -> vector<16x256xf32>
    %6 = vector.extract_strided_slice %5 {offsets = [0, 0], sizes = [16, 128], strides = [1, 1]} : vector<16x256xf32> to vector<16x128xf32>
    %7 = vector.extract_strided_slice %5 {offsets = [0, 128], sizes = [16, 128], strides = [1, 1]} : vector<16x256xf32> to vector<16x128xf32>
    %cst_6 = arith.constant 0.000000e+00 : f32
    %8 = vector.broadcast %cst_6 : f32 to vector<16x128xf32>
    %9 = arith.maximumf %6, %8 : vector<16x128xf32>
    %cst_7 = arith.constant 1.000000e-07 : f32
    %10 = vector.broadcast %cst_7 : f32 to vector<16x128xf32>
    %11 = arith.addf %9, %10 : vector<16x128xf32>
    %12 = vector.broadcast %2 : f32 to vector<16x128xf32>
    %13 = arith.mulf %11, %12 : vector<16x128xf32>
    %cst_8 = arith.constant dense<0xFF800000> : vector<128xf32>
    %14 = vector.multi_reduction <maximumf>, %13, %cst_8 [0] : vector<16x128xf32> to vector<128xf32>
    %15 = vector.shape_cast %14 : vector<128xf32> to vector<1x128xf32>
    %16 = vector.broadcast %15 : vector<1x128xf32> to vector<16x128xf32>
    %17 = arith.subf %13, %16 : vector<16x128xf32>
    %18 = math.exp %17 : vector<16x128xf32>
    %19 = arith.mulf %18, %11 : vector<16x128xf32>
    %20 = tpu.concatenate %19, %18 in 1 : vector<16x128xf32>, vector<16x128xf32> -> vector<16x256xf32>
    %21 = arith.truncf %20 : vector<16x256xf32> to vector<16x256xbf16>
    %cst_9 = arith.constant dense<0.000000e+00> : vector<16x256xf32>
    %22 = tpu.matmul %0, %21, %cst_9 {dimension_numbers = #tpu.dot_dimension_numbers<[1], [0], [0], [1], [0, 0, 1, 1], [], []>} : vector<16x16xbf16>, vector<16x256xbf16>, vector<16x256xf32> -> vector<16x256xf32>
    %23 = vector.extract_strided_slice %22 {offsets = [0, 0], sizes = [16, 128], strides = [1, 1]} : vector<16x256xf32> to vector<16x128xf32>
    %24 = vector.extract_strided_slice %22 {offsets = [0, 128], sizes = [16, 128], strides = [1, 1]} : vector<16x256xf32> to vector<16x128xf32>
    %cst_10 = arith.constant 1.000000e-16 : f32
    %25 = vector.broadcast %cst_10 : f32 to vector<16x128xf32>
    %26 = arith.addf %24, %25 : vector<16x128xf32>
    %27 = arith.divf %23, %26 : vector<16x128xf32>
    %28 = arith.addf %27, %7 : vector<16x128xf32>
    %29 = arith.truncf %28 : vector<16x128xf32> to vector<16x128xbf16>
    %c0_11 = arith.constant 0 : index
    %c0_12 = arith.constant 0 : index
    %30 = vector.load %arg7[%c0_11, %c0_12] : memref<128x128xbf16, #tpu.memory_space<vmem>>, vector<128x128xbf16>
    %cst_13 = arith.constant dense<0.000000e+00> : vector<16x128xf32>
    %31 = tpu.matmul %29, %30, %cst_13 {dimension_numbers = #tpu.dot_dimension_numbers<[1], [0], [0], [1], [0, 0, 1, 1], [], []>} : vector<16x128xbf16>, vector<128x128xbf16>, vector<16x128xf32> -> vector<16x128xf32>
    %32 = arith.mulf %31, %31 : vector<16x128xf32>
    %33 = tpu.concatenate %31, %32 in 1 : vector<16x128xf32>, vector<16x128xf32> -> vector<16x256xf32>
    %cst_14 = arith.constant dense<0.000000e+00> : vector<256xf32>
    %34 = vector.multi_reduction <add>, %33, %cst_14 [0] : vector<16x256xf32> to vector<256xf32>
    %35 = vector.shape_cast %34 : vector<256xf32> to vector<1x256xf32>
    %cst_15 = arith.constant 1.600000e+01 : f32
    %36 = vector.broadcast %cst_15 : f32 to vector<1x256xf32>
    %37 = arith.divf %35, %36 : vector<1x256xf32>
    %38 = vector.extract_strided_slice %37 {offsets = [0, 0], sizes = [1, 128], strides = [1, 1]} : vector<1x256xf32> to vector<1x128xf32>
    %39 = vector.extract_strided_slice %37 {offsets = [0, 128], sizes = [1, 128], strides = [1, 1]} : vector<1x256xf32> to vector<1x128xf32>
    %40 = arith.mulf %38, %38 : vector<1x128xf32>
    %41 = arith.subf %39, %40 : vector<1x128xf32>
    %cst_16 = arith.constant 0.000000e+00 : f32
    %42 = vector.broadcast %cst_16 : f32 to vector<1x128xf32>
    %43 = arith.maximumf %41, %42 : vector<1x128xf32>
    %44 = vector.broadcast %38 : vector<1x128xf32> to vector<16x128xf32>
    %45 = arith.subf %31, %44 : vector<16x128xf32>
    %cst_17 = arith.constant 9.99999974E-6 : f32
    %46 = vector.broadcast %cst_17 : f32 to vector<1x128xf32>
    %47 = arith.addf %43, %46 : vector<1x128xf32>
    %48 = math.rsqrt %47 : vector<1x128xf32>
    %49 = vector.broadcast %48 : vector<1x128xf32> to vector<16x128xf32>
    %50 = arith.mulf %45, %49 : vector<16x128xf32>
    %c0_18 = arith.constant 0 : index
    %c0_19 = arith.constant 0 : index
    %51 = vector.load %arg8[%c0_18, %c0_19] : memref<1x128xf32, #tpu.memory_space<vmem>>, vector<1x128xf32>
    %52 = vector.broadcast %51 : vector<1x128xf32> to vector<16x128xf32>
    %53 = arith.mulf %50, %52 : vector<16x128xf32>
    %c0_20 = arith.constant 0 : index
    %c0_21 = arith.constant 0 : index
    %54 = vector.load %arg9[%c0_20, %c0_21] : memref<1x128xf32, #tpu.memory_space<vmem>>, vector<1x128xf32>
    %55 = vector.broadcast %54 : vector<1x128xf32> to vector<16x128xf32>
    %56 = arith.addf %53, %55 : vector<16x128xf32>
    %cst_22 = arith.constant 0.000000e+00 : f32
    %57 = vector.broadcast %cst_22 : f32 to vector<16x128xf32>
    %58 = arith.maximumf %56, %57 : vector<16x128xf32>
    %59 = arith.truncf %58 : vector<16x128xf32> to vector<16x128xbf16>
    %c0_23 = arith.constant 0 : index
    %c0_24 = arith.constant 0 : index
    %60 = vector.load %arg10[%c0_23, %c0_24] : memref<128x128xbf16, #tpu.memory_space<vmem>>, vector<128x128xbf16>
    %cst_25 = arith.constant dense<0.000000e+00> : vector<16x128xf32>
    %61 = tpu.matmul %59, %60, %cst_25 {dimension_numbers = #tpu.dot_dimension_numbers<[1], [0], [0], [1], [0, 0, 1, 1], [], []>} : vector<16x128xbf16>, vector<128x128xbf16>, vector<16x128xf32> -> vector<16x128xf32>
    %c0_26 = arith.constant 0 : index
    %c0_27 = arith.constant 0 : index
    %62 = vector.load %arg11[%c0_26, %c0_27] : memref<1x128xf32, #tpu.memory_space<vmem>>, vector<1x128xf32>
    %63 = vector.broadcast %62 : vector<1x128xf32> to vector<16x128xf32>
    %64 = arith.addf %61, %63 : vector<16x128xf32>
    %c0_28 = arith.constant 0 : index
    %c0_29 = arith.constant 0 : index
    %c0_30 = arith.constant 0 : index
    %65 = vector.load %arg2[%c0_28, %c0_29, %c0_30] : memref<7x16x128xf32, #tpu.memory_space<vmem>>, vector<1x16x128xf32>
    %66 = vector.shape_cast %65 : vector<1x16x128xf32> to vector<16x128xf32>
    %67 = arith.addf %64, %66 : vector<16x128xf32>
    %c0_31 = arith.constant 0 : index
    %c0_32 = arith.constant 0 : index
    %c0_33 = arith.constant 0 : index
    %68 = vector.load %arg3[%c0_31, %c0_32, %c0_33] : memref<7x16x128xf32, #tpu.memory_space<vmem>>, vector<1x16x128xf32>
    %69 = vector.shape_cast %68 : vector<1x16x128xf32> to vector<16x128xf32>
    %70 = arith.mulf %67, %69 : vector<16x128xf32>
    %c1 = arith.constant 1 : index
    %71 = memref.load %arg0[%c1] : memref<7xf32, #tpu.memory_space<smem>>
    %72 = arith.truncf %70 : vector<16x128xf32> to vector<16x128xbf16>
    %c0_34 = arith.constant 0 : index
    %c0_35 = arith.constant 0 : index
    %73 = vector.load %arg12[%c0_34, %c0_35] : memref<128x256xbf16, #tpu.memory_space<vmem>>, vector<128x256xbf16>
    %cst_36 = arith.constant dense<0.000000e+00> : vector<16x256xf32>
    %74 = tpu.matmul %72, %73, %cst_36 {dimension_numbers = #tpu.dot_dimension_numbers<[1], [0], [0], [1], [0, 0, 1, 1], [], []>} : vector<16x128xbf16>, vector<128x256xbf16>, vector<16x256xf32> -> vector<16x256xf32>
    %75 = vector.extract_strided_slice %74 {offsets = [0, 0], sizes = [16, 128], strides = [1, 1]} : vector<16x256xf32> to vector<16x128xf32>
    %76 = vector.extract_strided_slice %74 {offsets = [0, 128], sizes = [16, 128], strides = [1, 1]} : vector<16x256xf32> to vector<16x128xf32>
    %cst_37 = arith.constant 0.000000e+00 : f32
    %77 = vector.broadcast %cst_37 : f32 to vector<16x128xf32>
    %78 = arith.maximumf %75, %77 : vector<16x128xf32>
    %cst_38 = arith.constant 1.000000e-07 : f32
    %79 = vector.broadcast %cst_38 : f32 to vector<16x128xf32>
    %80 = arith.addf %78, %79 : vector<16x128xf32>
    %81 = vector.broadcast %71 : f32 to vector<16x128xf32>
    %82 = arith.mulf %80, %81 : vector<16x128xf32>
    %cst_39 = arith.constant dense<0xFF800000> : vector<128xf32>
    %83 = vector.multi_reduction <maximumf>, %82, %cst_39 [0] : vector<16x128xf32> to vector<128xf32>
    %84 = vector.shape_cast %83 : vector<128xf32> to vector<1x128xf32>
    %85 = vector.broadcast %84 : vector<1x128xf32> to vector<16x128xf32>
    %86 = arith.subf %82, %85 : vector<16x128xf32>
    %87 = math.exp %86 : vector<16x128xf32>
    %88 = arith.mulf %87, %80 : vector<16x128xf32>
    %89 = tpu.concatenate %88, %87 in 1 : vector<16x128xf32>, vector<16x128xf32> -> vector<16x256xf32>
    %90 = arith.truncf %89 : vector<16x256xf32> to vector<16x256xbf16>
    %cst_40 = arith.constant dense<0.000000e+00> : vector<16x256xf32>
    %91 = tpu.matmul %0, %90, %cst_40 {dimension_numbers = #tpu.dot_dimension_numbers<[1], [0], [0], [1], [0, 0, 1, 1], [], []>} : vector<16x16xbf16>, vector<16x256xbf16>, vector<16x256xf32> -> vector<16x256xf32>
    %92 = vector.extract_strided_slice %91 {offsets = [0, 0], sizes = [16, 128], strides = [1, 1]} : vector<16x256xf32> to vector<16x128xf32>
    %93 = vector.extract_strided_slice %91 {offsets = [0, 128], sizes = [16, 128], strides = [1, 1]} : vector<16x256xf32> to vector<16x128xf32>
    %cst_41 = arith.constant 1.000000e-16 : f32
    %94 = vector.broadcast %cst_41 : f32 to vector<16x128xf32>
    %95 = arith.addf %93, %94 : vector<16x128xf32>
    %96 = arith.divf %92, %95 : vector<16x128xf32>
    %97 = arith.addf %96, %76 : vector<16x128xf32>
    %98 = arith.truncf %97 : vector<16x128xf32> to vector<16x128xbf16>
    %c0_42 = arith.constant 0 : index
    %c0_43 = arith.constant 0 : index
    %99 = vector.load %arg13[%c0_42, %c0_43] : memref<128x128xbf16, #tpu.memory_space<vmem>>, vector<128x128xbf16>
    %cst_44 = arith.constant dense<0.000000e+00> : vector<16x128xf32>
    %100 = tpu.matmul %98, %99, %cst_44 {dimension_numbers = #tpu.dot_dimension_numbers<[1], [0], [0], [1], [0, 0, 1, 1], [], []>} : vector<16x128xbf16>, vector<128x128xbf16>, vector<16x128xf32> -> vector<16x128xf32>
    %101 = arith.mulf %100, %100 : vector<16x128xf32>
    %102 = tpu.concatenate %100, %101 in 1 : vector<16x128xf32>, vector<16x128xf32> -> vector<16x256xf32>
    %cst_45 = arith.constant dense<0.000000e+00> : vector<256xf32>
    %103 = vector.multi_reduction <add>, %102, %cst_45 [0] : vector<16x256xf32> to vector<256xf32>
    %104 = vector.shape_cast %103 : vector<256xf32> to vector<1x256xf32>
    %cst_46 = arith.constant 1.600000e+01 : f32
    %105 = vector.broadcast %cst_46 : f32 to vector<1x256xf32>
    %106 = arith.divf %104, %105 : vector<1x256xf32>
    %107 = vector.extract_strided_slice %106 {offsets = [0, 0], sizes = [1, 128], strides = [1, 1]} : vector<1x256xf32> to vector<1x128xf32>
    %108 = vector.extract_strided_slice %106 {offsets = [0, 128], sizes = [1, 128], strides = [1, 1]} : vector<1x256xf32> to vector<1x128xf32>
    %109 = arith.mulf %107, %107 : vector<1x128xf32>
    %110 = arith.subf %108, %109 : vector<1x128xf32>
    %cst_47 = arith.constant 0.000000e+00 : f32
    %111 = vector.broadcast %cst_47 : f32 to vector<1x128xf32>
    %112 = arith.maximumf %110, %111 : vector<1x128xf32>
    %113 = vector.broadcast %107 : vector<1x128xf32> to vector<16x128xf32>
    %114 = arith.subf %100, %113 : vector<16x128xf32>
    %cst_48 = arith.constant 9.99999974E-6 : f32
    %115 = vector.broadcast %cst_48 : f32 to vector<1x128xf32>
    %116 = arith.addf %112, %115 : vector<1x128xf32>
    %117 = math.rsqrt %116 : vector<1x128xf32>
    %118 = vector.broadcast %117 : vector<1x128xf32> to vector<16x128xf32>
    %119 = arith.mulf %114, %118 : vector<16x128xf32>
    %c0_49 = arith.constant 0 : index
    %c0_50 = arith.constant 0 : index
    %120 = vector.load %arg14[%c0_49, %c0_50] : memref<1x128xf32, #tpu.memory_space<vmem>>, vector<1x128xf32>
    %121 = vector.broadcast %120 : vector<1x128xf32> to vector<16x128xf32>
    %122 = arith.mulf %119, %121 : vector<16x128xf32>
    %c0_51 = arith.constant 0 : index
    %c0_52 = arith.constant 0 : index
    %123 = vector.load %arg15[%c0_51, %c0_52] : memref<1x128xf32, #tpu.memory_space<vmem>>, vector<1x128xf32>
    %124 = vector.broadcast %123 : vector<1x128xf32> to vector<16x128xf32>
    %125 = arith.addf %122, %124 : vector<16x128xf32>
    %cst_53 = arith.constant 0.000000e+00 : f32
    %126 = vector.broadcast %cst_53 : f32 to vector<16x128xf32>
    %127 = arith.maximumf %125, %126 : vector<16x128xf32>
    %128 = arith.truncf %127 : vector<16x128xf32> to vector<16x128xbf16>
    %c0_54 = arith.constant 0 : index
    %c0_55 = arith.constant 0 : index
    %129 = vector.load %arg16[%c0_54, %c0_55] : memref<128x128xbf16, #tpu.memory_space<vmem>>, vector<128x128xbf16>
    %cst_56 = arith.constant dense<0.000000e+00> : vector<16x128xf32>
    %130 = tpu.matmul %128, %129, %cst_56 {dimension_numbers = #tpu.dot_dimension_numbers<[1], [0], [0], [1], [0, 0, 1, 1], [], []>} : vector<16x128xbf16>, vector<128x128xbf16>, vector<16x128xf32> -> vector<16x128xf32>
    %c0_57 = arith.constant 0 : index
    %c0_58 = arith.constant 0 : index
    %131 = vector.load %arg17[%c0_57, %c0_58] : memref<1x128xf32, #tpu.memory_space<vmem>>, vector<1x128xf32>
    %132 = vector.broadcast %131 : vector<1x128xf32> to vector<16x128xf32>
    %133 = arith.addf %130, %132 : vector<16x128xf32>
    %c1_59 = arith.constant 1 : index
    %c0_60 = arith.constant 0 : index
    %c0_61 = arith.constant 0 : index
    %134 = vector.load %arg2[%c1_59, %c0_60, %c0_61] : memref<7x16x128xf32, #tpu.memory_space<vmem>>, vector<1x16x128xf32>
    %135 = vector.shape_cast %134 : vector<1x16x128xf32> to vector<16x128xf32>
    %136 = arith.addf %133, %135 : vector<16x128xf32>
    %c1_62 = arith.constant 1 : index
    %c0_63 = arith.constant 0 : index
    %c0_64 = arith.constant 0 : index
    %137 = vector.load %arg3[%c1_62, %c0_63, %c0_64] : memref<7x16x128xf32, #tpu.memory_space<vmem>>, vector<1x16x128xf32>
    %138 = vector.shape_cast %137 : vector<1x16x128xf32> to vector<16x128xf32>
    %139 = arith.mulf %136, %138 : vector<16x128xf32>
    %c2 = arith.constant 2 : index
    %140 = memref.load %arg0[%c2] : memref<7xf32, #tpu.memory_space<smem>>
    %141 = arith.truncf %139 : vector<16x128xf32> to vector<16x128xbf16>
    %c0_65 = arith.constant 0 : index
    %c0_66 = arith.constant 0 : index
    %142 = vector.load %arg18[%c0_65, %c0_66] : memref<128x256xbf16, #tpu.memory_space<vmem>>, vector<128x256xbf16>
    %cst_67 = arith.constant dense<0.000000e+00> : vector<16x256xf32>
    %143 = tpu.matmul %141, %142, %cst_67 {dimension_numbers = #tpu.dot_dimension_numbers<[1], [0], [0], [1], [0, 0, 1, 1], [], []>} : vector<16x128xbf16>, vector<128x256xbf16>, vector<16x256xf32> -> vector<16x256xf32>
    %144 = vector.extract_strided_slice %143 {offsets = [0, 0], sizes = [16, 128], strides = [1, 1]} : vector<16x256xf32> to vector<16x128xf32>
    %145 = vector.extract_strided_slice %143 {offsets = [0, 128], sizes = [16, 128], strides = [1, 1]} : vector<16x256xf32> to vector<16x128xf32>
    %cst_68 = arith.constant 0.000000e+00 : f32
    %146 = vector.broadcast %cst_68 : f32 to vector<16x128xf32>
    %147 = arith.maximumf %144, %146 : vector<16x128xf32>
    %cst_69 = arith.constant 1.000000e-07 : f32
    %148 = vector.broadcast %cst_69 : f32 to vector<16x128xf32>
    %149 = arith.addf %147, %148 : vector<16x128xf32>
    %150 = vector.broadcast %140 : f32 to vector<16x128xf32>
    %151 = arith.mulf %149, %150 : vector<16x128xf32>
    %cst_70 = arith.constant dense<0xFF800000> : vector<128xf32>
    %152 = vector.multi_reduction <maximumf>, %151, %cst_70 [0] : vector<16x128xf32> to vector<128xf32>
    %153 = vector.shape_cast %152 : vector<128xf32> to vector<1x128xf32>
    %154 = vector.broadcast %153 : vector<1x128xf32> to vector<16x128xf32>
    %155 = arith.subf %151, %154 : vector<16x128xf32>
    %156 = math.exp %155 : vector<16x128xf32>
    %157 = arith.mulf %156, %149 : vector<16x128xf32>
    %158 = tpu.concatenate %157, %156 in 1 : vector<16x128xf32>, vector<16x128xf32> -> vector<16x256xf32>
    %159 = arith.truncf %158 : vector<16x256xf32> to vector<16x256xbf16>
    %cst_71 = arith.constant dense<0.000000e+00> : vector<16x256xf32>
    %160 = tpu.matmul %0, %159, %cst_71 {dimension_numbers = #tpu.dot_dimension_numbers<[1], [0], [0], [1], [0, 0, 1, 1], [], []>} : vector<16x16xbf16>, vector<16x256xbf16>, vector<16x256xf32> -> vector<16x256xf32>
    %161 = vector.extract_strided_slice %160 {offsets = [0, 0], sizes = [16, 128], strides = [1, 1]} : vector<16x256xf32> to vector<16x128xf32>
    %162 = vector.extract_strided_slice %160 {offsets = [0, 128], sizes = [16, 128], strides = [1, 1]} : vector<16x256xf32> to vector<16x128xf32>
    %cst_72 = arith.constant 1.000000e-16 : f32
    %163 = vector.broadcast %cst_72 : f32 to vector<16x128xf32>
    %164 = arith.addf %162, %163 : vector<16x128xf32>
    %165 = arith.divf %161, %164 : vector<16x128xf32>
    %166 = arith.addf %165, %145 : vector<16x128xf32>
    %167 = arith.truncf %166 : vector<16x128xf32> to vector<16x128xbf16>
    %c0_73 = arith.constant 0 : index
    %c0_74 = arith.constant 0 : index
    %168 = vector.load %arg19[%c0_73, %c0_74] : memref<128x128xbf16, #tpu.memory_space<vmem>>, vector<128x128xbf16>
    %cst_75 = arith.constant dense<0.000000e+00> : vector<16x128xf32>
    %169 = tpu.matmul %167, %168, %cst_75 {dimension_numbers = #tpu.dot_dimension_numbers<[1], [0], [0], [1], [0, 0, 1, 1], [], []>} : vector<16x128xbf16>, vector<128x128xbf16>, vector<16x128xf32> -> vector<16x128xf32>
    %170 = arith.mulf %169, %169 : vector<16x128xf32>
    %171 = tpu.concatenate %169, %170 in 1 : vector<16x128xf32>, vector<16x128xf32> -> vector<16x256xf32>
    %cst_76 = arith.constant dense<0.000000e+00> : vector<256xf32>
    %172 = vector.multi_reduction <add>, %171, %cst_76 [0] : vector<16x256xf32> to vector<256xf32>
    %173 = vector.shape_cast %172 : vector<256xf32> to vector<1x256xf32>
    %cst_77 = arith.constant 1.600000e+01 : f32
    %174 = vector.broadcast %cst_77 : f32 to vector<1x256xf32>
    %175 = arith.divf %173, %174 : vector<1x256xf32>
    %176 = vector.extract_strided_slice %175 {offsets = [0, 0], sizes = [1, 128], strides = [1, 1]} : vector<1x256xf32> to vector<1x128xf32>
    %177 = vector.extract_strided_slice %175 {offsets = [0, 128], sizes = [1, 128], strides = [1, 1]} : vector<1x256xf32> to vector<1x128xf32>
    %178 = arith.mulf %176, %176 : vector<1x128xf32>
    %179 = arith.subf %177, %178 : vector<1x128xf32>
    %cst_78 = arith.constant 0.000000e+00 : f32
    %180 = vector.broadcast %cst_78 : f32 to vector<1x128xf32>
    %181 = arith.maximumf %179, %180 : vector<1x128xf32>
    %182 = vector.broadcast %176 : vector<1x128xf32> to vector<16x128xf32>
    %183 = arith.subf %169, %182 : vector<16x128xf32>
    %cst_79 = arith.constant 9.99999974E-6 : f32
    %184 = vector.broadcast %cst_79 : f32 to vector<1x128xf32>
    %185 = arith.addf %181, %184 : vector<1x128xf32>
    %186 = math.rsqrt %185 : vector<1x128xf32>
    %187 = vector.broadcast %186 : vector<1x128xf32> to vector<16x128xf32>
    %188 = arith.mulf %183, %187 : vector<16x128xf32>
    %c0_80 = arith.constant 0 : index
    %c0_81 = arith.constant 0 : index
    %189 = vector.load %arg20[%c0_80, %c0_81] : memref<1x128xf32, #tpu.memory_space<vmem>>, vector<1x128xf32>
    %190 = vector.broadcast %189 : vector<1x128xf32> to vector<16x128xf32>
    %191 = arith.mulf %188, %190 : vector<16x128xf32>
    %c0_82 = arith.constant 0 : index
    %c0_83 = arith.constant 0 : index
    %192 = vector.load %arg21[%c0_82, %c0_83] : memref<1x128xf32, #tpu.memory_space<vmem>>, vector<1x128xf32>
    %193 = vector.broadcast %192 : vector<1x128xf32> to vector<16x128xf32>
    %194 = arith.addf %191, %193 : vector<16x128xf32>
    %cst_84 = arith.constant 0.000000e+00 : f32
    %195 = vector.broadcast %cst_84 : f32 to vector<16x128xf32>
    %196 = arith.maximumf %194, %195 : vector<16x128xf32>
    %197 = arith.truncf %196 : vector<16x128xf32> to vector<16x128xbf16>
    %c0_85 = arith.constant 0 : index
    %c0_86 = arith.constant 0 : index
    %198 = vector.load %arg22[%c0_85, %c0_86] : memref<128x128xbf16, #tpu.memory_space<vmem>>, vector<128x128xbf16>
    %cst_87 = arith.constant dense<0.000000e+00> : vector<16x128xf32>
    %199 = tpu.matmul %197, %198, %cst_87 {dimension_numbers = #tpu.dot_dimension_numbers<[1], [0], [0], [1], [0, 0, 1, 1], [], []>} : vector<16x128xbf16>, vector<128x128xbf16>, vector<16x128xf32> -> vector<16x128xf32>
    %c0_88 = arith.constant 0 : index
    %c0_89 = arith.constant 0 : index
    %200 = vector.load %arg23[%c0_88, %c0_89] : memref<1x128xf32, #tpu.memory_space<vmem>>, vector<1x128xf32>
    %201 = vector.broadcast %200 : vector<1x128xf32> to vector<16x128xf32>
    %202 = arith.addf %199, %201 : vector<16x128xf32>
    %c2_90 = arith.constant 2 : index
    %c0_91 = arith.constant 0 : index
    %c0_92 = arith.constant 0 : index
    %203 = vector.load %arg2[%c2_90, %c0_91, %c0_92] : memref<7x16x128xf32, #tpu.memory_space<vmem>>, vector<1x16x128xf32>
    %204 = vector.shape_cast %203 : vector<1x16x128xf32> to vector<16x128xf32>
    %205 = arith.addf %202, %204 : vector<16x128xf32>
    %c2_93 = arith.constant 2 : index
    %c0_94 = arith.constant 0 : index
    %c0_95 = arith.constant 0 : index
    %206 = vector.load %arg3[%c2_93, %c0_94, %c0_95] : memref<7x16x128xf32, #tpu.memory_space<vmem>>, vector<1x16x128xf32>
    %207 = vector.shape_cast %206 : vector<1x16x128xf32> to vector<16x128xf32>
    %208 = arith.mulf %205, %207 : vector<16x128xf32>
    %c3 = arith.constant 3 : index
    %209 = memref.load %arg0[%c3] : memref<7xf32, #tpu.memory_space<smem>>
    %210 = arith.truncf %208 : vector<16x128xf32> to vector<16x128xbf16>
    %c0_96 = arith.constant 0 : index
    %c0_97 = arith.constant 0 : index
    %211 = vector.load %arg24[%c0_96, %c0_97] : memref<128x256xbf16, #tpu.memory_space<vmem>>, vector<128x256xbf16>
    %cst_98 = arith.constant dense<0.000000e+00> : vector<16x256xf32>
    %212 = tpu.matmul %210, %211, %cst_98 {dimension_numbers = #tpu.dot_dimension_numbers<[1], [0], [0], [1], [0, 0, 1, 1], [], []>} : vector<16x128xbf16>, vector<128x256xbf16>, vector<16x256xf32> -> vector<16x256xf32>
    %213 = vector.extract_strided_slice %212 {offsets = [0, 0], sizes = [16, 128], strides = [1, 1]} : vector<16x256xf32> to vector<16x128xf32>
    %214 = vector.extract_strided_slice %212 {offsets = [0, 128], sizes = [16, 128], strides = [1, 1]} : vector<16x256xf32> to vector<16x128xf32>
    %cst_99 = arith.constant 0.000000e+00 : f32
    %215 = vector.broadcast %cst_99 : f32 to vector<16x128xf32>
    %216 = arith.maximumf %213, %215 : vector<16x128xf32>
    %cst_100 = arith.constant 1.000000e-07 : f32
    %217 = vector.broadcast %cst_100 : f32 to vector<16x128xf32>
    %218 = arith.addf %216, %217 : vector<16x128xf32>
    %219 = vector.broadcast %209 : f32 to vector<16x128xf32>
    %220 = arith.mulf %218, %219 : vector<16x128xf32>
    %cst_101 = arith.constant dense<0xFF800000> : vector<128xf32>
    %221 = vector.multi_reduction <maximumf>, %220, %cst_101 [0] : vector<16x128xf32> to vector<128xf32>
    %222 = vector.shape_cast %221 : vector<128xf32> to vector<1x128xf32>
    %223 = vector.broadcast %222 : vector<1x128xf32> to vector<16x128xf32>
    %224 = arith.subf %220, %223 : vector<16x128xf32>
    %225 = math.exp %224 : vector<16x128xf32>
    %226 = arith.mulf %225, %218 : vector<16x128xf32>
    %227 = tpu.concatenate %226, %225 in 1 : vector<16x128xf32>, vector<16x128xf32> -> vector<16x256xf32>
    %228 = arith.truncf %227 : vector<16x256xf32> to vector<16x256xbf16>
    %cst_102 = arith.constant dense<0.000000e+00> : vector<16x256xf32>
    %229 = tpu.matmul %0, %228, %cst_102 {dimension_numbers = #tpu.dot_dimension_numbers<[1], [0], [0], [1], [0, 0, 1, 1], [], []>} : vector<16x16xbf16>, vector<16x256xbf16>, vector<16x256xf32> -> vector<16x256xf32>
    %230 = vector.extract_strided_slice %229 {offsets = [0, 0], sizes = [16, 128], strides = [1, 1]} : vector<16x256xf32> to vector<16x128xf32>
    %231 = vector.extract_strided_slice %229 {offsets = [0, 128], sizes = [16, 128], strides = [1, 1]} : vector<16x256xf32> to vector<16x128xf32>
    %cst_103 = arith.constant 1.000000e-16 : f32
    %232 = vector.broadcast %cst_103 : f32 to vector<16x128xf32>
    %233 = arith.addf %231, %232 : vector<16x128xf32>
    %234 = arith.divf %230, %233 : vector<16x128xf32>
    %235 = arith.addf %234, %214 : vector<16x128xf32>
    %236 = arith.truncf %235 : vector<16x128xf32> to vector<16x128xbf16>
    %c0_104 = arith.constant 0 : index
    %c0_105 = arith.constant 0 : index
    %237 = vector.load %arg25[%c0_104, %c0_105] : memref<128x128xbf16, #tpu.memory_space<vmem>>, vector<128x128xbf16>
    %cst_106 = arith.constant dense<0.000000e+00> : vector<16x128xf32>
    %238 = tpu.matmul %236, %237, %cst_106 {dimension_numbers = #tpu.dot_dimension_numbers<[1], [0], [0], [1], [0, 0, 1, 1], [], []>} : vector<16x128xbf16>, vector<128x128xbf16>, vector<16x128xf32> -> vector<16x128xf32>
    %239 = arith.mulf %238, %238 : vector<16x128xf32>
    %240 = tpu.concatenate %238, %239 in 1 : vector<16x128xf32>, vector<16x128xf32> -> vector<16x256xf32>
    %cst_107 = arith.constant dense<0.000000e+00> : vector<256xf32>
    %241 = vector.multi_reduction <add>, %240, %cst_107 [0] : vector<16x256xf32> to vector<256xf32>
    %242 = vector.shape_cast %241 : vector<256xf32> to vector<1x256xf32>
    %cst_108 = arith.constant 1.600000e+01 : f32
    %243 = vector.broadcast %cst_108 : f32 to vector<1x256xf32>
    %244 = arith.divf %242, %243 : vector<1x256xf32>
    %245 = vector.extract_strided_slice %244 {offsets = [0, 0], sizes = [1, 128], strides = [1, 1]} : vector<1x256xf32> to vector<1x128xf32>
    %246 = vector.extract_strided_slice %244 {offsets = [0, 128], sizes = [1, 128], strides = [1, 1]} : vector<1x256xf32> to vector<1x128xf32>
    %247 = arith.mulf %245, %245 : vector<1x128xf32>
    %248 = arith.subf %246, %247 : vector<1x128xf32>
    %cst_109 = arith.constant 0.000000e+00 : f32
    %249 = vector.broadcast %cst_109 : f32 to vector<1x128xf32>
    %250 = arith.maximumf %248, %249 : vector<1x128xf32>
    %251 = vector.broadcast %245 : vector<1x128xf32> to vector<16x128xf32>
    %252 = arith.subf %238, %251 : vector<16x128xf32>
    %cst_110 = arith.constant 9.99999974E-6 : f32
    %253 = vector.broadcast %cst_110 : f32 to vector<1x128xf32>
    %254 = arith.addf %250, %253 : vector<1x128xf32>
    %255 = math.rsqrt %254 : vector<1x128xf32>
    %256 = vector.broadcast %255 : vector<1x128xf32> to vector<16x128xf32>
    %257 = arith.mulf %252, %256 : vector<16x128xf32>
    %c0_111 = arith.constant 0 : index
    %c0_112 = arith.constant 0 : index
    %258 = vector.load %arg26[%c0_111, %c0_112] : memref<1x128xf32, #tpu.memory_space<vmem>>, vector<1x128xf32>
    %259 = vector.broadcast %258 : vector<1x128xf32> to vector<16x128xf32>
    %260 = arith.mulf %257, %259 : vector<16x128xf32>
    %c0_113 = arith.constant 0 : index
    %c0_114 = arith.constant 0 : index
    %261 = vector.load %arg27[%c0_113, %c0_114] : memref<1x128xf32, #tpu.memory_space<vmem>>, vector<1x128xf32>
    %262 = vector.broadcast %261 : vector<1x128xf32> to vector<16x128xf32>
    %263 = arith.addf %260, %262 : vector<16x128xf32>
    %cst_115 = arith.constant 0.000000e+00 : f32
    %264 = vector.broadcast %cst_115 : f32 to vector<16x128xf32>
    %265 = arith.maximumf %263, %264 : vector<16x128xf32>
    %266 = arith.truncf %265 : vector<16x128xf32> to vector<16x128xbf16>
    %c0_116 = arith.constant 0 : index
    %c0_117 = arith.constant 0 : index
    %267 = vector.load %arg28[%c0_116, %c0_117] : memref<128x128xbf16, #tpu.memory_space<vmem>>, vector<128x128xbf16>
    %cst_118 = arith.constant dense<0.000000e+00> : vector<16x128xf32>
    %268 = tpu.matmul %266, %267, %cst_118 {dimension_numbers = #tpu.dot_dimension_numbers<[1], [0], [0], [1], [0, 0, 1, 1], [], []>} : vector<16x128xbf16>, vector<128x128xbf16>, vector<16x128xf32> -> vector<16x128xf32>
    %c0_119 = arith.constant 0 : index
    %c0_120 = arith.constant 0 : index
    %269 = vector.load %arg29[%c0_119, %c0_120] : memref<1x128xf32, #tpu.memory_space<vmem>>, vector<1x128xf32>
    %270 = vector.broadcast %269 : vector<1x128xf32> to vector<16x128xf32>
    %271 = arith.addf %268, %270 : vector<16x128xf32>
    %c3_121 = arith.constant 3 : index
    %c0_122 = arith.constant 0 : index
    %c0_123 = arith.constant 0 : index
    %272 = vector.load %arg2[%c3_121, %c0_122, %c0_123] : memref<7x16x128xf32, #tpu.memory_space<vmem>>, vector<1x16x128xf32>
    %273 = vector.shape_cast %272 : vector<1x16x128xf32> to vector<16x128xf32>
    %274 = arith.addf %271, %273 : vector<16x128xf32>
    %c3_124 = arith.constant 3 : index
    %c0_125 = arith.constant 0 : index
    %c0_126 = arith.constant 0 : index
    %275 = vector.load %arg3[%c3_124, %c0_125, %c0_126] : memref<7x16x128xf32, #tpu.memory_space<vmem>>, vector<1x16x128xf32>
    %276 = vector.shape_cast %275 : vector<1x16x128xf32> to vector<16x128xf32>
    %277 = arith.mulf %274, %276 : vector<16x128xf32>
    %c4 = arith.constant 4 : index
    %278 = memref.load %arg0[%c4] : memref<7xf32, #tpu.memory_space<smem>>
    %279 = arith.truncf %277 : vector<16x128xf32> to vector<16x128xbf16>
    %c0_127 = arith.constant 0 : index
    %c0_128 = arith.constant 0 : index
    %280 = vector.load %arg30[%c0_127, %c0_128] : memref<128x256xbf16, #tpu.memory_space<vmem>>, vector<128x256xbf16>
    %cst_129 = arith.constant dense<0.000000e+00> : vector<16x256xf32>
    %281 = tpu.matmul %279, %280, %cst_129 {dimension_numbers = #tpu.dot_dimension_numbers<[1], [0], [0], [1], [0, 0, 1, 1], [], []>} : vector<16x128xbf16>, vector<128x256xbf16>, vector<16x256xf32> -> vector<16x256xf32>
    %282 = vector.extract_strided_slice %281 {offsets = [0, 0], sizes = [16, 128], strides = [1, 1]} : vector<16x256xf32> to vector<16x128xf32>
    %283 = vector.extract_strided_slice %281 {offsets = [0, 128], sizes = [16, 128], strides = [1, 1]} : vector<16x256xf32> to vector<16x128xf32>
    %cst_130 = arith.constant 0.000000e+00 : f32
    %284 = vector.broadcast %cst_130 : f32 to vector<16x128xf32>
    %285 = arith.maximumf %282, %284 : vector<16x128xf32>
    %cst_131 = arith.constant 1.000000e-07 : f32
    %286 = vector.broadcast %cst_131 : f32 to vector<16x128xf32>
    %287 = arith.addf %285, %286 : vector<16x128xf32>
    %288 = vector.broadcast %278 : f32 to vector<16x128xf32>
    %289 = arith.mulf %287, %288 : vector<16x128xf32>
    %cst_132 = arith.constant dense<0xFF800000> : vector<128xf32>
    %290 = vector.multi_reduction <maximumf>, %289, %cst_132 [0] : vector<16x128xf32> to vector<128xf32>
    %291 = vector.shape_cast %290 : vector<128xf32> to vector<1x128xf32>
    %292 = vector.broadcast %291 : vector<1x128xf32> to vector<16x128xf32>
    %293 = arith.subf %289, %292 : vector<16x128xf32>
    %294 = math.exp %293 : vector<16x128xf32>
    %295 = arith.mulf %294, %287 : vector<16x128xf32>
    %296 = tpu.concatenate %295, %294 in 1 : vector<16x128xf32>, vector<16x128xf32> -> vector<16x256xf32>
    %297 = arith.truncf %296 : vector<16x256xf32> to vector<16x256xbf16>
    %cst_133 = arith.constant dense<0.000000e+00> : vector<16x256xf32>
    %298 = tpu.matmul %0, %297, %cst_133 {dimension_numbers = #tpu.dot_dimension_numbers<[1], [0], [0], [1], [0, 0, 1, 1], [], []>} : vector<16x16xbf16>, vector<16x256xbf16>, vector<16x256xf32> -> vector<16x256xf32>
    %299 = vector.extract_strided_slice %298 {offsets = [0, 0], sizes = [16, 128], strides = [1, 1]} : vector<16x256xf32> to vector<16x128xf32>
    %300 = vector.extract_strided_slice %298 {offsets = [0, 128], sizes = [16, 128], strides = [1, 1]} : vector<16x256xf32> to vector<16x128xf32>
    %cst_134 = arith.constant 1.000000e-16 : f32
    %301 = vector.broadcast %cst_134 : f32 to vector<16x128xf32>
    %302 = arith.addf %300, %301 : vector<16x128xf32>
    %303 = arith.divf %299, %302 : vector<16x128xf32>
    %304 = arith.addf %303, %283 : vector<16x128xf32>
    %305 = arith.truncf %304 : vector<16x128xf32> to vector<16x128xbf16>
    %c0_135 = arith.constant 0 : index
    %c0_136 = arith.constant 0 : index
    %306 = vector.load %arg31[%c0_135, %c0_136] : memref<128x128xbf16, #tpu.memory_space<vmem>>, vector<128x128xbf16>
    %cst_137 = arith.constant dense<0.000000e+00> : vector<16x128xf32>
    %307 = tpu.matmul %305, %306, %cst_137 {dimension_numbers = #tpu.dot_dimension_numbers<[1], [0], [0], [1], [0, 0, 1, 1], [], []>} : vector<16x128xbf16>, vector<128x128xbf16>, vector<16x128xf32> -> vector<16x128xf32>
    %308 = arith.mulf %307, %307 : vector<16x128xf32>
    %309 = tpu.concatenate %307, %308 in 1 : vector<16x128xf32>, vector<16x128xf32> -> vector<16x256xf32>
    %cst_138 = arith.constant dense<0.000000e+00> : vector<256xf32>
    %310 = vector.multi_reduction <add>, %309, %cst_138 [0] : vector<16x256xf32> to vector<256xf32>
    %311 = vector.shape_cast %310 : vector<256xf32> to vector<1x256xf32>
    %cst_139 = arith.constant 1.600000e+01 : f32
    %312 = vector.broadcast %cst_139 : f32 to vector<1x256xf32>
    %313 = arith.divf %311, %312 : vector<1x256xf32>
    %314 = vector.extract_strided_slice %313 {offsets = [0, 0], sizes = [1, 128], strides = [1, 1]} : vector<1x256xf32> to vector<1x128xf32>
    %315 = vector.extract_strided_slice %313 {offsets = [0, 128], sizes = [1, 128], strides = [1, 1]} : vector<1x256xf32> to vector<1x128xf32>
    %316 = arith.mulf %314, %314 : vector<1x128xf32>
    %317 = arith.subf %315, %316 : vector<1x128xf32>
    %cst_140 = arith.constant 0.000000e+00 : f32
    %318 = vector.broadcast %cst_140 : f32 to vector<1x128xf32>
    %319 = arith.maximumf %317, %318 : vector<1x128xf32>
    %320 = vector.broadcast %314 : vector<1x128xf32> to vector<16x128xf32>
    %321 = arith.subf %307, %320 : vector<16x128xf32>
    %cst_141 = arith.constant 9.99999974E-6 : f32
    %322 = vector.broadcast %cst_141 : f32 to vector<1x128xf32>
    %323 = arith.addf %319, %322 : vector<1x128xf32>
    %324 = math.rsqrt %323 : vector<1x128xf32>
    %325 = vector.broadcast %324 : vector<1x128xf32> to vector<16x128xf32>
    %326 = arith.mulf %321, %325 : vector<16x128xf32>
    %c0_142 = arith.constant 0 : index
    %c0_143 = arith.constant 0 : index
    %327 = vector.load %arg32[%c0_142, %c0_143] : memref<1x128xf32, #tpu.memory_space<vmem>>, vector<1x128xf32>
    %328 = vector.broadcast %327 : vector<1x128xf32> to vector<16x128xf32>
    %329 = arith.mulf %326, %328 : vector<16x128xf32>
    %c0_144 = arith.constant 0 : index
    %c0_145 = arith.constant 0 : index
    %330 = vector.load %arg33[%c0_144, %c0_145] : memref<1x128xf32, #tpu.memory_space<vmem>>, vector<1x128xf32>
    %331 = vector.broadcast %330 : vector<1x128xf32> to vector<16x128xf32>
    %332 = arith.addf %329, %331 : vector<16x128xf32>
    %cst_146 = arith.constant 0.000000e+00 : f32
    %333 = vector.broadcast %cst_146 : f32 to vector<16x128xf32>
    %334 = arith.maximumf %332, %333 : vector<16x128xf32>
    %335 = arith.truncf %334 : vector<16x128xf32> to vector<16x128xbf16>
    %c0_147 = arith.constant 0 : index
    %c0_148 = arith.constant 0 : index
    %336 = vector.load %arg34[%c0_147, %c0_148] : memref<128x128xbf16, #tpu.memory_space<vmem>>, vector<128x128xbf16>
    %cst_149 = arith.constant dense<0.000000e+00> : vector<16x128xf32>
    %337 = tpu.matmul %335, %336, %cst_149 {dimension_numbers = #tpu.dot_dimension_numbers<[1], [0], [0], [1], [0, 0, 1, 1], [], []>} : vector<16x128xbf16>, vector<128x128xbf16>, vector<16x128xf32> -> vector<16x128xf32>
    %c0_150 = arith.constant 0 : index
    %c0_151 = arith.constant 0 : index
    %338 = vector.load %arg35[%c0_150, %c0_151] : memref<1x128xf32, #tpu.memory_space<vmem>>, vector<1x128xf32>
    %339 = vector.broadcast %338 : vector<1x128xf32> to vector<16x128xf32>
    %340 = arith.addf %337, %339 : vector<16x128xf32>
    %c4_152 = arith.constant 4 : index
    %c0_153 = arith.constant 0 : index
    %c0_154 = arith.constant 0 : index
    %341 = vector.load %arg2[%c4_152, %c0_153, %c0_154] : memref<7x16x128xf32, #tpu.memory_space<vmem>>, vector<1x16x128xf32>
    %342 = vector.shape_cast %341 : vector<1x16x128xf32> to vector<16x128xf32>
    %343 = arith.addf %340, %342 : vector<16x128xf32>
    %c4_155 = arith.constant 4 : index
    %c0_156 = arith.constant 0 : index
    %c0_157 = arith.constant 0 : index
    %344 = vector.load %arg3[%c4_155, %c0_156, %c0_157] : memref<7x16x128xf32, #tpu.memory_space<vmem>>, vector<1x16x128xf32>
    %345 = vector.shape_cast %344 : vector<1x16x128xf32> to vector<16x128xf32>
    %346 = arith.mulf %343, %345 : vector<16x128xf32>
    %c5 = arith.constant 5 : index
    %347 = memref.load %arg0[%c5] : memref<7xf32, #tpu.memory_space<smem>>
    %348 = arith.truncf %346 : vector<16x128xf32> to vector<16x128xbf16>
    %c0_158 = arith.constant 0 : index
    %c0_159 = arith.constant 0 : index
    %349 = vector.load %arg36[%c0_158, %c0_159] : memref<128x256xbf16, #tpu.memory_space<vmem>>, vector<128x256xbf16>
    %cst_160 = arith.constant dense<0.000000e+00> : vector<16x256xf32>
    %350 = tpu.matmul %348, %349, %cst_160 {dimension_numbers = #tpu.dot_dimension_numbers<[1], [0], [0], [1], [0, 0, 1, 1], [], []>} : vector<16x128xbf16>, vector<128x256xbf16>, vector<16x256xf32> -> vector<16x256xf32>
    %351 = vector.extract_strided_slice %350 {offsets = [0, 0], sizes = [16, 128], strides = [1, 1]} : vector<16x256xf32> to vector<16x128xf32>
    %352 = vector.extract_strided_slice %350 {offsets = [0, 128], sizes = [16, 128], strides = [1, 1]} : vector<16x256xf32> to vector<16x128xf32>
    %cst_161 = arith.constant 0.000000e+00 : f32
    %353 = vector.broadcast %cst_161 : f32 to vector<16x128xf32>
    %354 = arith.maximumf %351, %353 : vector<16x128xf32>
    %cst_162 = arith.constant 1.000000e-07 : f32
    %355 = vector.broadcast %cst_162 : f32 to vector<16x128xf32>
    %356 = arith.addf %354, %355 : vector<16x128xf32>
    %357 = vector.broadcast %347 : f32 to vector<16x128xf32>
    %358 = arith.mulf %356, %357 : vector<16x128xf32>
    %cst_163 = arith.constant dense<0xFF800000> : vector<128xf32>
    %359 = vector.multi_reduction <maximumf>, %358, %cst_163 [0] : vector<16x128xf32> to vector<128xf32>
    %360 = vector.shape_cast %359 : vector<128xf32> to vector<1x128xf32>
    %361 = vector.broadcast %360 : vector<1x128xf32> to vector<16x128xf32>
    %362 = arith.subf %358, %361 : vector<16x128xf32>
    %363 = math.exp %362 : vector<16x128xf32>
    %364 = arith.mulf %363, %356 : vector<16x128xf32>
    %365 = tpu.concatenate %364, %363 in 1 : vector<16x128xf32>, vector<16x128xf32> -> vector<16x256xf32>
    %366 = arith.truncf %365 : vector<16x256xf32> to vector<16x256xbf16>
    %cst_164 = arith.constant dense<0.000000e+00> : vector<16x256xf32>
    %367 = tpu.matmul %0, %366, %cst_164 {dimension_numbers = #tpu.dot_dimension_numbers<[1], [0], [0], [1], [0, 0, 1, 1], [], []>} : vector<16x16xbf16>, vector<16x256xbf16>, vector<16x256xf32> -> vector<16x256xf32>
    %368 = vector.extract_strided_slice %367 {offsets = [0, 0], sizes = [16, 128], strides = [1, 1]} : vector<16x256xf32> to vector<16x128xf32>
    %369 = vector.extract_strided_slice %367 {offsets = [0, 128], sizes = [16, 128], strides = [1, 1]} : vector<16x256xf32> to vector<16x128xf32>
    %cst_165 = arith.constant 1.000000e-16 : f32
    %370 = vector.broadcast %cst_165 : f32 to vector<16x128xf32>
    %371 = arith.addf %369, %370 : vector<16x128xf32>
    %372 = arith.divf %368, %371 : vector<16x128xf32>
    %373 = arith.addf %372, %352 : vector<16x128xf32>
    %374 = arith.truncf %373 : vector<16x128xf32> to vector<16x128xbf16>
    %c0_166 = arith.constant 0 : index
    %c0_167 = arith.constant 0 : index
    %375 = vector.load %arg37[%c0_166, %c0_167] : memref<128x128xbf16, #tpu.memory_space<vmem>>, vector<128x128xbf16>
    %cst_168 = arith.constant dense<0.000000e+00> : vector<16x128xf32>
    %376 = tpu.matmul %374, %375, %cst_168 {dimension_numbers = #tpu.dot_dimension_numbers<[1], [0], [0], [1], [0, 0, 1, 1], [], []>} : vector<16x128xbf16>, vector<128x128xbf16>, vector<16x128xf32> -> vector<16x128xf32>
    %377 = arith.mulf %376, %376 : vector<16x128xf32>
    %378 = tpu.concatenate %376, %377 in 1 : vector<16x128xf32>, vector<16x128xf32> -> vector<16x256xf32>
    %cst_169 = arith.constant dense<0.000000e+00> : vector<256xf32>
    %379 = vector.multi_reduction <add>, %378, %cst_169 [0] : vector<16x256xf32> to vector<256xf32>
    %380 = vector.shape_cast %379 : vector<256xf32> to vector<1x256xf32>
    %cst_170 = arith.constant 1.600000e+01 : f32
    %381 = vector.broadcast %cst_170 : f32 to vector<1x256xf32>
    %382 = arith.divf %380, %381 : vector<1x256xf32>
    %383 = vector.extract_strided_slice %382 {offsets = [0, 0], sizes = [1, 128], strides = [1, 1]} : vector<1x256xf32> to vector<1x128xf32>
    %384 = vector.extract_strided_slice %382 {offsets = [0, 128], sizes = [1, 128], strides = [1, 1]} : vector<1x256xf32> to vector<1x128xf32>
    %385 = arith.mulf %383, %383 : vector<1x128xf32>
    %386 = arith.subf %384, %385 : vector<1x128xf32>
    %cst_171 = arith.constant 0.000000e+00 : f32
    %387 = vector.broadcast %cst_171 : f32 to vector<1x128xf32>
    %388 = arith.maximumf %386, %387 : vector<1x128xf32>
    %389 = vector.broadcast %383 : vector<1x128xf32> to vector<16x128xf32>
    %390 = arith.subf %376, %389 : vector<16x128xf32>
    %cst_172 = arith.constant 9.99999974E-6 : f32
    %391 = vector.broadcast %cst_172 : f32 to vector<1x128xf32>
    %392 = arith.addf %388, %391 : vector<1x128xf32>
    %393 = math.rsqrt %392 : vector<1x128xf32>
    %394 = vector.broadcast %393 : vector<1x128xf32> to vector<16x128xf32>
    %395 = arith.mulf %390, %394 : vector<16x128xf32>
    %c0_173 = arith.constant 0 : index
    %c0_174 = arith.constant 0 : index
    %396 = vector.load %arg38[%c0_173, %c0_174] : memref<1x128xf32, #tpu.memory_space<vmem>>, vector<1x128xf32>
    %397 = vector.broadcast %396 : vector<1x128xf32> to vector<16x128xf32>
    %398 = arith.mulf %395, %397 : vector<16x128xf32>
    %c0_175 = arith.constant 0 : index
    %c0_176 = arith.constant 0 : index
    %399 = vector.load %arg39[%c0_175, %c0_176] : memref<1x128xf32, #tpu.memory_space<vmem>>, vector<1x128xf32>
    %400 = vector.broadcast %399 : vector<1x128xf32> to vector<16x128xf32>
    %401 = arith.addf %398, %400 : vector<16x128xf32>
    %cst_177 = arith.constant 0.000000e+00 : f32
    %402 = vector.broadcast %cst_177 : f32 to vector<16x128xf32>
    %403 = arith.maximumf %401, %402 : vector<16x128xf32>
    %404 = arith.truncf %403 : vector<16x128xf32> to vector<16x128xbf16>
    %c0_178 = arith.constant 0 : index
    %c0_179 = arith.constant 0 : index
    %405 = vector.load %arg40[%c0_178, %c0_179] : memref<128x128xbf16, #tpu.memory_space<vmem>>, vector<128x128xbf16>
    %cst_180 = arith.constant dense<0.000000e+00> : vector<16x128xf32>
    %406 = tpu.matmul %404, %405, %cst_180 {dimension_numbers = #tpu.dot_dimension_numbers<[1], [0], [0], [1], [0, 0, 1, 1], [], []>} : vector<16x128xbf16>, vector<128x128xbf16>, vector<16x128xf32> -> vector<16x128xf32>
    %c0_181 = arith.constant 0 : index
    %c0_182 = arith.constant 0 : index
    %407 = vector.load %arg41[%c0_181, %c0_182] : memref<1x128xf32, #tpu.memory_space<vmem>>, vector<1x128xf32>
    %408 = vector.broadcast %407 : vector<1x128xf32> to vector<16x128xf32>
    %409 = arith.addf %406, %408 : vector<16x128xf32>
    %c5_183 = arith.constant 5 : index
    %c0_184 = arith.constant 0 : index
    %c0_185 = arith.constant 0 : index
    %410 = vector.load %arg2[%c5_183, %c0_184, %c0_185] : memref<7x16x128xf32, #tpu.memory_space<vmem>>, vector<1x16x128xf32>
    %411 = vector.shape_cast %410 : vector<1x16x128xf32> to vector<16x128xf32>
    %412 = arith.addf %409, %411 : vector<16x128xf32>
    %c5_186 = arith.constant 5 : index
    %c0_187 = arith.constant 0 : index
    %c0_188 = arith.constant 0 : index
    %413 = vector.load %arg3[%c5_186, %c0_187, %c0_188] : memref<7x16x128xf32, #tpu.memory_space<vmem>>, vector<1x16x128xf32>
    %414 = vector.shape_cast %413 : vector<1x16x128xf32> to vector<16x128xf32>
    %415 = arith.mulf %412, %414 : vector<16x128xf32>
    %c6 = arith.constant 6 : index
    %416 = memref.load %arg0[%c6] : memref<7xf32, #tpu.memory_space<smem>>
    %417 = arith.truncf %415 : vector<16x128xf32> to vector<16x128xbf16>
    %c0_189 = arith.constant 0 : index
    %c0_190 = arith.constant 0 : index
    %418 = vector.load %arg42[%c0_189, %c0_190] : memref<128x256xbf16, #tpu.memory_space<vmem>>, vector<128x256xbf16>
    %cst_191 = arith.constant dense<0.000000e+00> : vector<16x256xf32>
    %419 = tpu.matmul %417, %418, %cst_191 {dimension_numbers = #tpu.dot_dimension_numbers<[1], [0], [0], [1], [0, 0, 1, 1], [], []>} : vector<16x128xbf16>, vector<128x256xbf16>, vector<16x256xf32> -> vector<16x256xf32>
    %420 = vector.extract_strided_slice %419 {offsets = [0, 0], sizes = [16, 128], strides = [1, 1]} : vector<16x256xf32> to vector<16x128xf32>
    %421 = vector.extract_strided_slice %419 {offsets = [0, 128], sizes = [16, 128], strides = [1, 1]} : vector<16x256xf32> to vector<16x128xf32>
    %cst_192 = arith.constant 0.000000e+00 : f32
    %422 = vector.broadcast %cst_192 : f32 to vector<16x128xf32>
    %423 = arith.maximumf %420, %422 : vector<16x128xf32>
    %cst_193 = arith.constant 1.000000e-07 : f32
    %424 = vector.broadcast %cst_193 : f32 to vector<16x128xf32>
    %425 = arith.addf %423, %424 : vector<16x128xf32>
    %426 = vector.broadcast %416 : f32 to vector<16x128xf32>
    %427 = arith.mulf %425, %426 : vector<16x128xf32>
    %cst_194 = arith.constant dense<0xFF800000> : vector<128xf32>
    %428 = vector.multi_reduction <maximumf>, %427, %cst_194 [0] : vector<16x128xf32> to vector<128xf32>
    %429 = vector.shape_cast %428 : vector<128xf32> to vector<1x128xf32>
    %430 = vector.broadcast %429 : vector<1x128xf32> to vector<16x128xf32>
    %431 = arith.subf %427, %430 : vector<16x128xf32>
    %432 = math.exp %431 : vector<16x128xf32>
    %433 = arith.mulf %432, %425 : vector<16x128xf32>
    %434 = tpu.concatenate %433, %432 in 1 : vector<16x128xf32>, vector<16x128xf32> -> vector<16x256xf32>
    %435 = arith.truncf %434 : vector<16x256xf32> to vector<16x256xbf16>
    %cst_195 = arith.constant dense<0.000000e+00> : vector<16x256xf32>
    %436 = tpu.matmul %0, %435, %cst_195 {dimension_numbers = #tpu.dot_dimension_numbers<[1], [0], [0], [1], [0, 0, 1, 1], [], []>} : vector<16x16xbf16>, vector<16x256xbf16>, vector<16x256xf32> -> vector<16x256xf32>
    %437 = vector.extract_strided_slice %436 {offsets = [0, 0], sizes = [16, 128], strides = [1, 1]} : vector<16x256xf32> to vector<16x128xf32>
    %438 = vector.extract_strided_slice %436 {offsets = [0, 128], sizes = [16, 128], strides = [1, 1]} : vector<16x256xf32> to vector<16x128xf32>
    %cst_196 = arith.constant 1.000000e-16 : f32
    %439 = vector.broadcast %cst_196 : f32 to vector<16x128xf32>
    %440 = arith.addf %438, %439 : vector<16x128xf32>
    %441 = arith.divf %437, %440 : vector<16x128xf32>
    %442 = arith.addf %441, %421 : vector<16x128xf32>
    %443 = arith.truncf %442 : vector<16x128xf32> to vector<16x128xbf16>
    %c0_197 = arith.constant 0 : index
    %c0_198 = arith.constant 0 : index
    %444 = vector.load %arg43[%c0_197, %c0_198] : memref<128x128xbf16, #tpu.memory_space<vmem>>, vector<128x128xbf16>
    %cst_199 = arith.constant dense<0.000000e+00> : vector<16x128xf32>
    %445 = tpu.matmul %443, %444, %cst_199 {dimension_numbers = #tpu.dot_dimension_numbers<[1], [0], [0], [1], [0, 0, 1, 1], [], []>} : vector<16x128xbf16>, vector<128x128xbf16>, vector<16x128xf32> -> vector<16x128xf32>
    %446 = arith.mulf %445, %445 : vector<16x128xf32>
    %447 = tpu.concatenate %445, %446 in 1 : vector<16x128xf32>, vector<16x128xf32> -> vector<16x256xf32>
    %cst_200 = arith.constant dense<0.000000e+00> : vector<256xf32>
    %448 = vector.multi_reduction <add>, %447, %cst_200 [0] : vector<16x256xf32> to vector<256xf32>
    %449 = vector.shape_cast %448 : vector<256xf32> to vector<1x256xf32>
    %cst_201 = arith.constant 1.600000e+01 : f32
    %450 = vector.broadcast %cst_201 : f32 to vector<1x256xf32>
    %451 = arith.divf %449, %450 : vector<1x256xf32>
    %452 = vector.extract_strided_slice %451 {offsets = [0, 0], sizes = [1, 128], strides = [1, 1]} : vector<1x256xf32> to vector<1x128xf32>
    %453 = vector.extract_strided_slice %451 {offsets = [0, 128], sizes = [1, 128], strides = [1, 1]} : vector<1x256xf32> to vector<1x128xf32>
    %454 = arith.mulf %452, %452 : vector<1x128xf32>
    %455 = arith.subf %453, %454 : vector<1x128xf32>
    %cst_202 = arith.constant 0.000000e+00 : f32
    %456 = vector.broadcast %cst_202 : f32 to vector<1x128xf32>
    %457 = arith.maximumf %455, %456 : vector<1x128xf32>
    %458 = vector.broadcast %452 : vector<1x128xf32> to vector<16x128xf32>
    %459 = arith.subf %445, %458 : vector<16x128xf32>
    %cst_203 = arith.constant 9.99999974E-6 : f32
    %460 = vector.broadcast %cst_203 : f32 to vector<1x128xf32>
    %461 = arith.addf %457, %460 : vector<1x128xf32>
    %462 = math.rsqrt %461 : vector<1x128xf32>
    %463 = vector.broadcast %462 : vector<1x128xf32> to vector<16x128xf32>
    %464 = arith.mulf %459, %463 : vector<16x128xf32>
    %c0_204 = arith.constant 0 : index
    %c0_205 = arith.constant 0 : index
    %465 = vector.load %arg44[%c0_204, %c0_205] : memref<1x128xf32, #tpu.memory_space<vmem>>, vector<1x128xf32>
    %466 = vector.broadcast %465 : vector<1x128xf32> to vector<16x128xf32>
    %467 = arith.mulf %464, %466 : vector<16x128xf32>
    %c0_206 = arith.constant 0 : index
    %c0_207 = arith.constant 0 : index
    %468 = vector.load %arg45[%c0_206, %c0_207] : memref<1x128xf32, #tpu.memory_space<vmem>>, vector<1x128xf32>
    %469 = vector.broadcast %468 : vector<1x128xf32> to vector<16x128xf32>
    %470 = arith.addf %467, %469 : vector<16x128xf32>
    %cst_208 = arith.constant 0.000000e+00 : f32
    %471 = vector.broadcast %cst_208 : f32 to vector<16x128xf32>
    %472 = arith.maximumf %470, %471 : vector<16x128xf32>
    %473 = arith.truncf %472 : vector<16x128xf32> to vector<16x128xbf16>
    %c0_209 = arith.constant 0 : index
    %c0_210 = arith.constant 0 : index
    %474 = vector.load %arg46[%c0_209, %c0_210] : memref<128x128xbf16, #tpu.memory_space<vmem>>, vector<128x128xbf16>
    %cst_211 = arith.constant dense<0.000000e+00> : vector<16x128xf32>
    %475 = tpu.matmul %473, %474, %cst_211 {dimension_numbers = #tpu.dot_dimension_numbers<[1], [0], [0], [1], [0, 0, 1, 1], [], []>} : vector<16x128xbf16>, vector<128x128xbf16>, vector<16x128xf32> -> vector<16x128xf32>
    %c0_212 = arith.constant 0 : index
    %c0_213 = arith.constant 0 : index
    %476 = vector.load %arg47[%c0_212, %c0_213] : memref<1x128xf32, #tpu.memory_space<vmem>>, vector<1x128xf32>
    %477 = vector.broadcast %476 : vector<1x128xf32> to vector<16x128xf32>
    %478 = arith.addf %475, %477 : vector<16x128xf32>
    %c6_214 = arith.constant 6 : index
    %c0_215 = arith.constant 0 : index
    %c0_216 = arith.constant 0 : index
    %479 = vector.load %arg2[%c6_214, %c0_215, %c0_216] : memref<7x16x128xf32, #tpu.memory_space<vmem>>, vector<1x16x128xf32>
    %480 = vector.shape_cast %479 : vector<1x16x128xf32> to vector<16x128xf32>
    %481 = arith.addf %478, %480 : vector<16x128xf32>
    %c6_217 = arith.constant 6 : index
    %c0_218 = arith.constant 0 : index
    %c0_219 = arith.constant 0 : index
    %482 = vector.load %arg3[%c6_217, %c0_218, %c0_219] : memref<7x16x128xf32, #tpu.memory_space<vmem>>, vector<1x16x128xf32>
    %483 = vector.shape_cast %482 : vector<1x16x128xf32> to vector<16x128xf32>
    %484 = arith.mulf %481, %483 : vector<16x128xf32>
    %485 = arith.truncf %484 : vector<16x128xf32> to vector<16x128xbf16>
    %cst_220 = arith.constant dense<0.000000e+00> : vector<16x128xf32>
    %486 = tpu.matmul %0, %485, %cst_220 {dimension_numbers = #tpu.dot_dimension_numbers<[1], [0], [0], [1], [0, 0, 1, 1], [], []>} : vector<16x16xbf16>, vector<16x128xbf16>, vector<16x128xf32> -> vector<16x128xf32>
    %c0_221 = arith.constant 0 : index
    %c0_222 = arith.constant 0 : index
    %487 = vector.load %arg5[%c0_221, %c0_222] : memref<16x128xf32, #tpu.memory_space<vmem>>, vector<16x128xf32>
    %488 = arith.mulf %486, %487 : vector<16x128xf32>
    %489 = arith.truncf %488 : vector<16x128xf32> to vector<16x128xbf16>
    %490 = tpu.concatenate %489, %485 in 1 : vector<16x128xbf16>, vector<16x128xbf16> -> vector<16x256xbf16>
    %c0_223 = arith.constant 0 : index
    %c0_224 = arith.constant 0 : index
    %491 = vector.load %arg48[%c0_223, %c0_224] : memref<256x128xbf16, #tpu.memory_space<vmem>>, vector<256x128xbf16>
    %cst_225 = arith.constant dense<0.000000e+00> : vector<16x128xf32>
    %492 = tpu.matmul %490, %491, %cst_225 {dimension_numbers = #tpu.dot_dimension_numbers<[1], [0], [0], [1], [0, 0, 1, 1], [], []>} : vector<16x256xbf16>, vector<256x128xbf16>, vector<16x128xf32> -> vector<16x128xf32>
    %c0_226 = arith.constant 0 : index
    %c0_227 = arith.constant 0 : index
    %493 = vector.load %arg49[%c0_226, %c0_227] : memref<1x128xf32, #tpu.memory_space<vmem>>, vector<1x128xf32>
    %494 = vector.broadcast %493 : vector<1x128xf32> to vector<16x128xf32>
    %495 = arith.addf %492, %494 : vector<16x128xf32>
    %c0_228 = arith.constant 0 : index
    %c0_229 = arith.constant 0 : index
    %496 = vector.load %arg50[%c0_228, %c0_229] : memref<16x128xf32, #tpu.memory_space<vmem>>, vector<16x128xf32>
    tpu.vector_store %arg50[%c0_228, %c0_229], %495 {strides = array<i32>} : memref<16x128xf32, #tpu.memory_space<vmem>>, vector<16x128xf32>,
    return
  }
}

</mosaic_0001>

<llo_original>
// kernel: gcn_forward.1
$region0: #{gcn_forward.1}
  #allocation0 [shape = 'u32[]', space=smem, size = 0x4, offset = 0x4, fixed_abs, tag = 'smem constant byte address 0x4 - core index']
  #allocation1 [shape = 'u32[144,128]{1,0:T(1,128)}', space=vmem, size = 0x12000, scoped, tag = 'internal scratch']
  %s0 = inlined_call_operand.smem [shape: u32[51], index: -1, kind: input, shape index: {}]
  %s1 = sld [smem:[%s0]]
  %s2 = scalar_lea.smem %s0, 1
  %s3 = sld [smem:[%s2]]
  %s4 = scalar_lea.smem %s0, 2
  %s5 = sld [smem:[%s4]]
  %s6 = scalar_lea.smem %s0, 3
  %s7 = sld [smem:[%s6]]
  %s8 = scalar_lea.smem %s0, 4
  %s9 = sld [smem:[%s8]]
  %s10 = scalar_lea.smem %s0, 5
  %s11 = sld [smem:[%s10]]
  %s12 = scalar_lea.smem %s0, 6
  %s13 = sld [smem:[%s12]]
  %s14 = scalar_lea.smem %s0, 7
  %s15 = sld [smem:[%s14]]
  %s16 = scalar_lea.smem %s0, 8
  %s17 = sld [smem:[%s16]]
  %s18 = scalar_lea.smem %s0, 9
  %s19 = sld [smem:[%s18]]
  %s20 = scalar_lea.smem %s0, 10
  %s21 = sld [smem:[%s20]]
  %s22 = scalar_lea.smem %s0, 11
  %s23 = sld [smem:[%s22]]
  %s24 = scalar_lea.smem %s0, 12
  %s25 = sld [smem:[%s24]]
  %s26 = scalar_lea.smem %s0, 13
  %s27 = sld [smem:[%s26]]
  %s28 = scalar_lea.smem %s0, 14
  %s29 = sld [smem:[%s28]]
  %s30 = scalar_lea.smem %s0, 15
  %s31 = sld [smem:[%s30]]
  %s32 = scalar_lea.smem %s0, 16
  %s33 = sld [smem:[%s32]]
  %s34 = scalar_lea.smem %s0, 17
  %s35 = sld [smem:[%s34]]
  %s36 = scalar_lea.smem %s0, 18
  %s37 = sld [smem:[%s36]]
  %s38 = scalar_lea.smem %s0, 19
  %s39 = sld [smem:[%s38]]
  %s40 = scalar_lea.smem %s0, 20
  %s41 = sld [smem:[%s40]]
  %s42 = scalar_lea.smem %s0, 21
  %s43 = sld [smem:[%s42]]
  %s44 = scalar_lea.smem %s0, 22
  %s45 = sld [smem:[%s44]]
  %s46 = scalar_lea.smem %s0, 23
  %s47 = sld [smem:[%s46]]
  %s48 = scalar_lea.smem %s0, 24
  %s49 = sld [smem:[%s48]]
  %s50 = scalar_lea.smem %s0, 25
  %s51 = sld [smem:[%s50]]
  %s52 = scalar_lea.smem %s0, 26
  %s53 = sld [smem:[%s52]]
  %s54 = scalar_lea.smem %s0, 27
  %s55 = sld [smem:[%s54]]
  %s56 = scalar_lea.smem %s0, 28
  %s57 = sld [smem:[%s56]]
  %s58 = scalar_lea.smem %s0, 29
  %s59 = sld [smem:[%s58]]
  %s60 = scalar_lea.smem %s0, 30
  %s61 = sld [smem:[%s60]]
  %s62 = scalar_lea.smem %s0, 31
  %s63 = sld [smem:[%s62]]
  %s64 = scalar_lea.smem %s0, 32
  %s65 = sld [smem:[%s64]]
  %s66 = scalar_lea.smem %s0, 33
  %s67 = sld [smem:[%s66]]
  %s68 = scalar_lea.smem %s0, 34
  %s69 = sld [smem:[%s68]]
  %s70 = scalar_lea.smem %s0, 35
  %s71 = sld [smem:[%s70]]
  %s72 = scalar_lea.smem %s0, 36
  %s73 = sld [smem:[%s72]]
  %s74 = scalar_lea.smem %s0, 37
  %s75 = sld [smem:[%s74]]
  %s76 = scalar_lea.smem %s0, 38
  %s77 = sld [smem:[%s76]]
  %s78 = scalar_lea.smem %s0, 39
  %s79 = sld [smem:[%s78]]
  %s80 = scalar_lea.smem %s0, 40
  %s81 = sld [smem:[%s80]]
  %s82 = scalar_lea.smem %s0, 41
  %s83 = sld [smem:[%s82]]
  %s84 = scalar_lea.smem %s0, 42
  %s85 = sld [smem:[%s84]]
  %s86 = scalar_lea.smem %s0, 43
  %s87 = sld [smem:[%s86]]
  %s88 = scalar_lea.smem %s0, 44
  %s89 = sld [smem:[%s88]]
  %s90 = scalar_lea.smem %s0, 45
  %s91 = sld [smem:[%s90]]
  %s92 = scalar_lea.smem %s0, 46
  %s93 = sld [smem:[%s92]]
  %s94 = scalar_lea.smem %s0, 47
  %s95 = sld [smem:[%s94]]
  %s96 = scalar_lea.smem %s0, 48
  %s97 = sld [smem:[%s96]]
  %s98 = scalar_lea.smem %s0, 49
  %s99 = sld [smem:[%s98]]
  %s100 = scalar_lea.smem %s0, 50
  %s101 = sld [smem:[%s100]]
  %s102 = sld [smem:[#allocation0]]
  $region214: #{gcn_forward.1} parent=0
    _
  %s104 = ssub.s32 1, %s102
  %s105 = scalar_select 0, %s104, %s102
  $region1: #{gcn_forward.1} parent=0
    #allocation2 [shape = 'u8[512]{0}', space=smem, size = 0x200, scoped, tag = 'input window, operand 0, single buffered']
    #allocation3 [shape = 's32[1]{0}', space=sflag, size = 0x4, scoped, tag = 'scoped memory for gcn_forward.1']
    %106 = vsyncpa [#allocation3], 0
    // Predicated region
    $region2: #{gcn_forward.1} parent=1 // pred_check
      _
    $region3: #{gcn_forward.1} parent=1 // pred_check_branch
      %108 = sbr.rel (0) target = $region5
    $region4: #{gcn_forward.1} parent=1 // pred_region
      %s110 = ssub.s32 16, 16
      %111 = vsyncadd [#allocation3], %s110
      %s113 = sshll.u32 %s1, 4
      %s114 = int_to_ptr.vmem [resolvable:$true] %s113
      %116 = dma.vmem_to_smem %s114, 16, [#allocation2], [#allocation3]
    $region5: #{gcn_forward.1} parent=1 // pred_fallthru
      _
    // Predicated region
    $region6: #{gcn_forward.1} parent=1 // pred_check
      _
    $region7: #{gcn_forward.1} parent=1 // pred_check_branch
      %118 = sbr.rel (0) target = $region9
    $region8: #{gcn_forward.1} parent=1 // pred_region
      _
    $region9: #{gcn_forward.1} parent=1 // pred_fallthru
      _
    // Predicated region
    $region10: #{gcn_forward.1} parent=1 // pred_check
      _
    $region11: #{gcn_forward.1} parent=1 // pred_check_branch
      %120 = sbr.rel (0) target = $region13
    $region12: #{gcn_forward.1} parent=1 // pred_region
      _
    $region13: #{gcn_forward.1} parent=1 // pred_fallthru
      _
    // Predicated region
    $region14: #{gcn_forward.1} parent=1 // pred_check
      _
    $region15: #{gcn_forward.1} parent=1 // pred_check_branch
      %122 = sbr.rel (0) target = $region17
    $region16: #{gcn_forward.1} parent=1 // pred_region
      _
    $region17: #{gcn_forward.1} parent=1 // pred_fallthru
      _
    // Predicated region
    $region18: #{gcn_forward.1} parent=1 // pred_check
      _
    $region19: #{gcn_forward.1} parent=1 // pred_check_branch
      %124 = sbr.rel (0) target = $region21
    $region20: #{gcn_forward.1} parent=1 // pred_region
      _
    $region21: #{gcn_forward.1} parent=1 // pred_fallthru
      _
    // Predicated region
    $region22: #{gcn_forward.1} parent=1 // pred_check
      _
    $region23: #{gcn_forward.1} parent=1 // pred_check_branch
      %126 = sbr.rel (0) target = $region25
    $region24: #{gcn_forward.1} parent=1 // pred_region
      _
    $region25: #{gcn_forward.1} parent=1 // pred_fallthru
      _
    // Predicated region
    $region26: #{gcn_forward.1} parent=1 // pred_check
      _
    $region27: #{gcn_forward.1} parent=1 // pred_check_branch
      %128 = sbr.rel (0) target = $region29
    $region28: #{gcn_forward.1} parent=1 // pred_region
      _
    $region29: #{gcn_forward.1} parent=1 // pred_fallthru
      _
    // Predicated region
    $region30: #{gcn_forward.1} parent=1 // pred_check
      _
    $region31: #{gcn_forward.1} parent=1 // pred_check_branch
      %130 = sbr.rel (0) target = $region33
    $region32: #{gcn_forward.1} parent=1 // pred_region
      _
    $region33: #{gcn_forward.1} parent=1 // pred_fallthru
      _
    // Predicated region
    $region34: #{gcn_forward.1} parent=1 // pred_check
      _
    $region35: #{gcn_forward.1} parent=1 // pred_check_branch
      %132 = sbr.rel (0) target = $region37
    $region36: #{gcn_forward.1} parent=1 // pred_region
      _
    $region37: #{gcn_forward.1} parent=1 // pred_fallthru
      _
    // Predicated region
    $region38: #{gcn_forward.1} parent=1 // pred_check
      _
    $region39: #{gcn_forward.1} parent=1 // pred_check_branch
      %134 = sbr.rel (0) target = $region41
    $region40: #{gcn_forward.1} parent=1 // pred_region
      _
    $region41: #{gcn_forward.1} parent=1 // pred_fallthru
      _
    // Predicated region
    $region42: #{gcn_forward.1} parent=1 // pred_check
      _
    $region43: #{gcn_forward.1} parent=1 // pred_check_branch
      %136 = sbr.rel (0) target = $region45
    $region44: #{gcn_forward.1} parent=1 // pred_region
      _
    $region45: #{gcn_forward.1} parent=1 // pred_fallthru
      _
    // Predicated region
    $region46: #{gcn_forward.1} parent=1 // pred_check
      _
    $region47: #{gcn_forward.1} parent=1 // pred_check_branch
      %138 = sbr.rel (0) target = $region49
    $region48: #{gcn_forward.1} parent=1 // pred_region
      _
    $region49: #{gcn_forward.1} parent=1 // pred_fallthru
      _
    // Predicated region
    $region50: #{gcn_forward.1} parent=1 // pred_check
      _
    $region51: #{gcn_forward.1} parent=1 // pred_check_branch
      %140 = sbr.rel (0) target = $region53
    $region52: #{gcn_forward.1} parent=1 // pred_region
      _
    $region53: #{gcn_forward.1} parent=1 // pred_fallthru
      _
    // Predicated region
    $region54: #{gcn_forward.1} parent=1 // pred_check
      _
    $region55: #{gcn_forward.1} parent=1 // pred_check_branch
      %142 = sbr.rel (0) target = $region57
    $region56: #{gcn_forward.1} parent=1 // pred_region
      _
    $region57: #{gcn_forward.1} parent=1 // pred_fallthru
      _
    // Predicated region
    $region58: #{gcn_forward.1} parent=1 // pred_check
      _
    $region59: #{gcn_forward.1} parent=1 // pred_check_branch
      %144 = sbr.rel (0) target = $region61
    $region60: #{gcn_forward.1} parent=1 // pred_region
      _
    $region61: #{gcn_forward.1} parent=1 // pred_fallthru
      _
    // Predicated region
    $region62: #{gcn_forward.1} parent=1 // pred_check
      _
    $region63: #{gcn_forward.1} parent=1 // pred_check_branch
      %146 = sbr.rel (0) target = $region65
    $region64: #{gcn_forward.1} parent=1 // pred_region
      _
    $region65: #{gcn_forward.1} parent=1 // pred_fallthru
      _
    // Predicated region
    $region66: #{gcn_forward.1} parent=1 // pred_check
      _
    $region67: #{gcn_forward.1} parent=1 // pred_check_branch
      %148 = sbr.rel (0) target = $region69
    $region68: #{gcn_forward.1} parent=1 // pred_region
      _
    $region69: #{gcn_forward.1} parent=1 // pred_fallthru
      _
    // Predicated region
    $region70: #{gcn_forward.1} parent=1 // pred_check
      _
    $region71: #{gcn_forward.1} parent=1 // pred_check_branch
      %150 = sbr.rel (0) target = $region73
    $region72: #{gcn_forward.1} parent=1 // pred_region
      _
    $region73: #{gcn_forward.1} parent=1 // pred_fallthru
      _
    // Predicated region
    $region74: #{gcn_forward.1} parent=1 // pred_check
      _
    $region75: #{gcn_forward.1} parent=1 // pred_check_branch
      %152 = sbr.rel (0) target = $region77
    $region76: #{gcn_forward.1} parent=1 // pred_region
      _
    $region77: #{gcn_forward.1} parent=1 // pred_fallthru
      _
    // Predicated region
    $region78: #{gcn_forward.1} parent=1 // pred_check
      _
    $region79: #{gcn_forward.1} parent=1 // pred_check_branch
      %154 = sbr.rel (0) target = $region81
    $region80: #{gcn_forward.1} parent=1 // pred_region
      _
    $region81: #{gcn_forward.1} parent=1 // pred_fallthru
      _
    // Predicated region
    $region82: #{gcn_forward.1} parent=1 // pred_check
      _
    $region83: #{gcn_forward.1} parent=1 // pred_check_branch
      %156 = sbr.rel (0) target = $region85
    $region84: #{gcn_forward.1} parent=1 // pred_region
      _
    $region85: #{gcn_forward.1} parent=1 // pred_fallthru
      _
    // Predicated region
    $region86: #{gcn_forward.1} parent=1 // pred_check
      _
    $region87: #{gcn_forward.1} parent=1 // pred_check_branch
      %158 = sbr.rel (0) target = $region89
    $region88: #{gcn_forward.1} parent=1 // pred_region
      _
    $region89: #{gcn_forward.1} parent=1 // pred_fallthru
      _
    // Predicated region
    $region90: #{gcn_forward.1} parent=1 // pred_check
      _
    $region91: #{gcn_forward.1} parent=1 // pred_check_branch
      %160 = sbr.rel (0) target = $region93
    $region92: #{gcn_forward.1} parent=1 // pred_region
      _
    $region93: #{gcn_forward.1} parent=1 // pred_fallthru
      _
    // Predicated region
    $region94: #{gcn_forward.1} parent=1 // pred_check
      _
    $region95: #{gcn_forward.1} parent=1 // pred_check_branch
      %162 = sbr.rel (0) target = $region97
    $region96: #{gcn_forward.1} parent=1 // pred_region
      _
    $region97: #{gcn_forward.1} parent=1 // pred_fallthru
      _
    // Predicated region
    $region98: #{gcn_forward.1} parent=1 // pred_check
      _
    $region99: #{gcn_forward.1} parent=1 // pred_check_branch
      %164 = sbr.rel (0) target = $region101
    $region100: #{gcn_forward.1} parent=1 // pred_region
      _
    $region101: #{gcn_forward.1} parent=1 // pred_fallthru
      _
    // Predicated region
    $region102: #{gcn_forward.1} parent=1 // pred_check
      _
    $region103: #{gcn_forward.1} parent=1 // pred_check_branch
      %166 = sbr.rel (0) target = $region105
    $region104: #{gcn_forward.1} parent=1 // pred_region
      _
    $region105: #{gcn_forward.1} parent=1 // pred_fallthru
      _
    // Predicated region
    $region106: #{gcn_forward.1} parent=1 // pred_check
      _
    $region107: #{gcn_forward.1} parent=1 // pred_check_branch
      %168 = sbr.rel (0) target = $region109
    $region108: #{gcn_forward.1} parent=1 // pred_region
      _
    $region109: #{gcn_forward.1} parent=1 // pred_fallthru
      _
    // Predicated region
    $region110: #{gcn_forward.1} parent=1 // pred_check
      _
    $region111: #{gcn_forward.1} parent=1 // pred_check_branch
      %170 = sbr.rel (0) target = $region113
    $region112: #{gcn_forward.1} parent=1 // pred_region
      _
    $region113: #{gcn_forward.1} parent=1 // pred_fallthru
      _
    // Predicated region
    $region114: #{gcn_forward.1} parent=1 // pred_check
      _
    $region115: #{gcn_forward.1} parent=1 // pred_check_branch
      %172 = sbr.rel (0) target = $region117
    $region116: #{gcn_forward.1} parent=1 // pred_region
      _
    $region117: #{gcn_forward.1} parent=1 // pred_fallthru
      _
    // Predicated region
    $region118: #{gcn_forward.1} parent=1 // pred_check
      _
    $region119: #{gcn_forward.1} parent=1 // pred_check_branch
      %174 = sbr.rel (0) target = $region121
    $region120: #{gcn_forward.1} parent=1 // pred_region
      _
    $region121: #{gcn_forward.1} parent=1 // pred_fallthru
      _
    // Predicated region
    $region122: #{gcn_forward.1} parent=1 // pred_check
      _
    $region123: #{gcn_forward.1} parent=1 // pred_check_branch
      %176 = sbr.rel (0) target = $region125
    $region124: #{gcn_forward.1} parent=1 // pred_region
      _
    $region125: #{gcn_forward.1} parent=1 // pred_fallthru
      _
    // Predicated region
    $region126: #{gcn_forward.1} parent=1 // pred_check
      _
    $region127: #{gcn_forward.1} parent=1 // pred_check_branch
      %178 = sbr.rel (0) target = $region129
    $region128: #{gcn_forward.1} parent=1 // pred_region
      _
    $region129: #{gcn_forward.1} parent=1 // pred_fallthru
      _
    // Predicated region
    $region130: #{gcn_forward.1} parent=1 // pred_check
      _
    $region131: #{gcn_forward.1} parent=1 // pred_check_branch
      %180 = sbr.rel (0) target = $region133
    $region132: #{gcn_forward.1} parent=1 // pred_region
      _
    $region133: #{gcn_forward.1} parent=1 // pred_fallthru
      _
    // Predicated region
    $region134: #{gcn_forward.1} parent=1 // pred_check
      _
    $region135: #{gcn_forward.1} parent=1 // pred_check_branch
      %182 = sbr.rel (0) target = $region137
    $region136: #{gcn_forward.1} parent=1 // pred_region
      _
    $region137: #{gcn_forward.1} parent=1 // pred_fallthru
      _
    // Predicated region
    $region138: #{gcn_forward.1} parent=1 // pred_check
      _
    $region139: #{gcn_forward.1} parent=1 // pred_check_branch
      %184 = sbr.rel (0) target = $region141
    $region140: #{gcn_forward.1} parent=1 // pred_region
      _
    $region141: #{gcn_forward.1} parent=1 // pred_fallthru
      _
    // Predicated region
    $region142: #{gcn_forward.1} parent=1 // pred_check
      _
    $region143: #{gcn_forward.1} parent=1 // pred_check_branch
      %186 = sbr.rel (0) target = $region145
    $region144: #{gcn_forward.1} parent=1 // pred_region
      _
    $region145: #{gcn_forward.1} parent=1 // pred_fallthru
      _
    // Predicated region
    $region146: #{gcn_forward.1} parent=1 // pred_check
      _
    $region147: #{gcn_forward.1} parent=1 // pred_check_branch
      %188 = sbr.rel (0) target = $region149
    $region148: #{gcn_forward.1} parent=1 // pred_region
      _
    $region149: #{gcn_forward.1} parent=1 // pred_fallthru
      _
    // Predicated region
    $region150: #{gcn_forward.1} parent=1 // pred_check
      _
    $region151: #{gcn_forward.1} parent=1 // pred_check_branch
      %190 = sbr.rel (0) target = $region153
    $region152: #{gcn_forward.1} parent=1 // pred_region
      _
    $region153: #{gcn_forward.1} parent=1 // pred_fallthru
      _
    // Predicated region
    $region154: #{gcn_forward.1} parent=1 // pred_check
      _
    $region155: #{gcn_forward.1} parent=1 // pred_check_branch
      %192 = sbr.rel (0) target = $region157
    $region156: #{gcn_forward.1} parent=1 // pred_region
      _
    $region157: #{gcn_forward.1} parent=1 // pred_fallthru
      _
    // Predicated region
    $region158: #{gcn_forward.1} parent=1 // pred_check
      _
    $region159: #{gcn_forward.1} parent=1 // pred_check_branch
      %194 = sbr.rel (0) target = $region161
    $region160: #{gcn_forward.1} parent=1 // pred_region
      _
    $region161: #{gcn_forward.1} parent=1 // pred_fallthru
      _
    // Predicated region
    $region162: #{gcn_forward.1} parent=1 // pred_check
      _
    $region163: #{gcn_forward.1} parent=1 // pred_check_branch
      %196 = sbr.rel (0) target = $region165
    $region164: #{gcn_forward.1} parent=1 // pred_region
      _
    $region165: #{gcn_forward.1} parent=1 // pred_fallthru
      _
    // Predicated region
    $region166: #{gcn_forward.1} parent=1 // pred_check
      _
    $region167: #{gcn_forward.1} parent=1 // pred_check_branch
      %198 = sbr.rel (0) target = $region169
    $region168: #{gcn_forward.1} parent=1 // pred_region
      _
    $region169: #{gcn_forward.1} parent=1 // pred_fallthru
      _
    // Predicated region
    $region170: #{gcn_forward.1} parent=1 // pred_check
      _
    $region171: #{gcn_forward.1} parent=1 // pred_check_branch
      %200 = sbr.rel (0) target = $region173
    $region172: #{gcn_forward.1} parent=1 // pred_region
      _
    $region173: #{gcn_forward.1} parent=1 // pred_fallthru
      _
    // Predicated region
    $region174: #{gcn_forward.1} parent=1 // pred_check
      _
    $region175: #{gcn_forward.1} parent=1 // pred_check_branch
      %202 = sbr.rel (0) target = $region177
    $region176: #{gcn_forward.1} parent=1 // pred_region
      _
    $region177: #{gcn_forward.1} parent=1 // pred_fallthru
      _
    // Predicated region
    $region178: #{gcn_forward.1} parent=1 // pred_check
      _
    $region179: #{gcn_forward.1} parent=1 // pred_check_branch
      %204 = sbr.rel (0) target = $region181
    $region180: #{gcn_forward.1} parent=1 // pred_region
      _
    $region181: #{gcn_forward.1} parent=1 // pred_fallthru
      _
    // Predicated region
    $region182: #{gcn_forward.1} parent=1 // pred_check
      _
    $region183: #{gcn_forward.1} parent=1 // pred_check_branch
      %206 = sbr.rel (0) target = $region185
    $region184: #{gcn_forward.1} parent=1 // pred_region
      _
    $region185: #{gcn_forward.1} parent=1 // pred_fallthru
      _
    // Predicated region
    $region186: #{gcn_forward.1} parent=1 // pred_check
      _
    $region187: #{gcn_forward.1} parent=1 // pred_check_branch
      %208 = sbr.rel (0) target = $region189
    $region188: #{gcn_forward.1} parent=1 // pred_region
      _
    $region189: #{gcn_forward.1} parent=1 // pred_fallthru
      _
    // Predicated region
    $region190: #{gcn_forward.1} parent=1 // pred_check
      _
    $region191: #{gcn_forward.1} parent=1 // pred_check_branch
      %210 = sbr.rel (0) target = $region193
    $region192: #{gcn_forward.1} parent=1 // pred_region
      _
    $region193: #{gcn_forward.1} parent=1 // pred_fallthru
      _
    // Predicated region
    $region194: #{gcn_forward.1} parent=1 // pred_check
      _
    $region195: #{gcn_forward.1} parent=1 // pred_check_branch
      %212 = sbr.rel (0) target = $region197
    $region196: #{gcn_forward.1} parent=1 // pred_region
      _
    $region197: #{gcn_forward.1} parent=1 // pred_fallthru
      _
    // Predicated region
    $region198: #{gcn_forward.1} parent=1 // pred_check
      _
    $region199: #{gcn_forward.1} parent=1 // pred_check_branch
      %214 = sbr.rel (0) target = $region201
    $region200: #{gcn_forward.1} parent=1 // pred_region
      _
    $region201: #{gcn_forward.1} parent=1 // pred_fallthru
      _
    // Predicated region
    $region202: #{gcn_forward.1} parent=1 // pred_check
      _
    $region203: #{gcn_forward.1} parent=1 // pred_check_branch
      %216 = sbr.rel (0) target = $region205
    $region204: #{gcn_forward.1} parent=1 // pred_region
      %217 = dma.done [#allocation3], 16
    $region205: #{gcn_forward.1} parent=1 // pred_fallthru
      _
    %218 = sfence
    %v220 = vld [vmem:[%s9] sm:$0xf]
    %v221 = vld [vmem:[%s9 + $0x4] sm:$0xf]
    %v222 = vld [vmem:[%s3] sm:$0xff]
    %v223 = vld [vmem:[%s3 + $0x8] sm:$0xff]
    %s224 = sld [smem:[#allocation2]]
    %v225 = vpack.c.bf16 %v223, %v222
    %v226 = vld [vmem:[%s13] sm:$0xff]
    %v227 = vld [vmem:[%s13 + $0x8] sm:$0xff]
    %v228 = vld [vmem:[%s13 + $0x10] sm:$0xff]
    %v229 = vld [vmem:[%s13 + $0x18] sm:$0xff]
    %v230 = vld [vmem:[%s13 + $0x20] sm:$0xff]
    %v231 = vld [vmem:[%s13 + $0x28] sm:$0xff]
    %v232 = vld [vmem:[%s13 + $0x30] sm:$0xff]
    %v233 = vld [vmem:[%s13 + $0x38] sm:$0xff]
    %v234 = vld [vmem:[%s13 + $0x40] sm:$0xff]
    %v235 = vld [vmem:[%s13 + $0x48] sm:$0xff]
    %v236 = vld [vmem:[%s13 + $0x50] sm:$0xff]
    %v237 = vld [vmem:[%s13 + $0x58] sm:$0xff]
    %v238 = vld [vmem:[%s13 + $0x60] sm:$0xff]
    %v239 = vld [vmem:[%s13 + $0x68] sm:$0xff]
    %v240 = vld [vmem:[%s13 + $0x70] sm:$0xff]
    %v241 = vld [vmem:[%s13 + $0x78] sm:$0xff]
    %v258 = vunpack.c.l.b16 %v226
    %v259 = vunpack.c.h.b16 %v226
    %v260 = vunpack.c.l.b16 %v227
    %v261 = vunpack.c.h.b16 %v227
    %v262 = vunpack.c.l.b16 %v228
    %v263 = vunpack.c.h.b16 %v228
    %v264 = vunpack.c.l.b16 %v229
    %v265 = vunpack.c.h.b16 %v229
    %v266 = vunpack.c.l.b16 %v230
    %v267 = vunpack.c.h.b16 %v230
    %v268 = vunpack.c.l.b16 %v231
    %v269 = vunpack.c.h.b16 %v231
    %v270 = vunpack.c.l.b16 %v232
    %v271 = vunpack.c.h.b16 %v232
    %v272 = vunpack.c.l.b16 %v233
    %v273 = vunpack.c.h.b16 %v233
    %v274 = vunpack.c.l.b16 %v234
    %v275 = vunpack.c.h.b16 %v234
    %v276 = vunpack.c.l.b16 %v235
    %v277 = vunpack.c.h.b16 %v235
    %v278 = vunpack.c.l.b16 %v236
    %v279 = vunpack.c.h.b16 %v236
    %v280 = vunpack.c.l.b16 %v237
    %v281 = vunpack.c.h.b16 %v237
    %v282 = vunpack.c.l.b16 %v238
    %v283 = vunpack.c.h.b16 %v238
    %v284 = vunpack.c.l.b16 %v239
    %v285 = vunpack.c.h.b16 %v239
    %v286 = vunpack.c.l.b16 %v240
    %v287 = vunpack.c.h.b16 %v240
    %v288 = vunpack.c.l.b16 %v241
    %v289 = vunpack.c.h.b16 %v241
    %v290 = vpack.c.b16 %v260, %v258
    %v291 = vpack.c.b16 %v261, %v259
    %v292 = vpack.c.b16 %v264, %v262
    %v293 = vpack.c.b16 %v265, %v263
    %v294 = vpack.c.b16 %v268, %v266
    %v295 = vpack.c.b16 %v269, %v267
    %v296 = vpack.c.b16 %v272, %v270
    %v297 = vpack.c.b16 %v273, %v271
    %v298 = vpack.c.b16 %v276, %v274
    %v299 = vpack.c.b16 %v277, %v275
    %v300 = vpack.c.b16 %v280, %v278
    %v301 = vpack.c.b16 %v281, %v279
    %v302 = vpack.c.b16 %v284, %v282
    %v303 = vpack.c.b16 %v285, %v283
    %v304 = vpack.c.b16 %v288, %v286
    %v305 = vpack.c.b16 %v289, %v287
    %322 = vmatprep.subr.bf16.mxu0 %v291
    %323 = vmatpush1.bf16.msra.mxu0 %v290
    %324 = vmatprep.subr.bf16.mxu0 %v293
    %325 = vmatpush1.bf16.msra.mxu0 %v292
    %326 = vmatprep.subr.bf16.mxu0 %v295
    %327 = vmatpush1.bf16.msra.mxu0 %v294
    %328 = vmatprep.subr.bf16.mxu0 %v297
    %329 = vmatpush1.bf16.msra.mxu0 %v296
    %330 = vmatprep.subr.bf16.mxu0 %v299
    %331 = vmatpush1.bf16.msra.mxu0 %v298
    %332 = vmatprep.subr.bf16.mxu0 %v301
    %333 = vmatpush1.bf16.msra.mxu0 %v300
    %334 = vmatprep.subr.bf16.mxu0 %v303
    %335 = vmatpush1.bf16.msra.mxu0 %v302
    %336 = vmatprep.subr.bf16.mxu0 %v305
    %337 = vmatpush1.bf16.msra.mxu0 %v304
    %338 = vmatprep.subr.bf16.mxu0 0
    %339 = vmatpush1.bf16.msra.mxu0 0
    %340 = vmatprep.subr.bf16.mxu0 0
    %341 = vmatpush1.bf16.msra.mxu0 0
    %342 = vmatprep.subr.bf16.mxu0 0
    %343 = vmatpush1.bf16.msra.mxu0 0
    %344 = vmatprep.subr.bf16.mxu0 0
    %345 = vmatpush1.bf16.msra.mxu0 0
    %346 = vmatprep.subr.bf16.mxu0 0
    %347 = vmatpush1.bf16.msra.mxu0 0
    %348 = vmatprep.subr.bf16.mxu0 0
    %349 = vmatpush1.bf16.msra.mxu0 0
    %350 = vmatprep.subr.bf16.mxu0 0
    %351 = vmatpush1.bf16.msra.mxu0 0
    %352 = vmatprep.subr.bf16.mxu0 0
    %353 = vmatpush1.bf16.msra.mxu0 0
    %354 = vmatprep.mubr.bf16.mxu0 0
    %355 = vmatmul.mubr.bf16.gmra.mrb[0].mxu0 %v225
    %v356 = vpop.f32.mrb[0].mxu0
    %v357 = vadd.f32 0.0, %v356
    %v358 = vpop.f32.mrb[0].mxu0
    %v359 = vadd.f32 0.0, %v358
    %v360 = vpop.f32.mrb[0].mxu0
    %v361 = vadd.f32 0.0, %v360
    %v362 = vpop.f32.mrb[0].mxu0
    %v363 = vadd.f32 0.0, %v362
    %364 = vdwg.mxu0
    %v365 = vmax.f32 %v357, 0.0
    %v366 = vmax.f32 %v361, 0.0
    %v367 = vadd.f32 %v365, 1e-07
    %v368 = vadd.f32 %v366, 1e-07
    %v369 = vstv %s224
    %v370 = vmul.f32 %v367, %v369
    %v371 = vmul.f32 %v368, %v369
    %v372 = vmax.f32 %v370, %v371
    %v373 = vrot.slane %v372, 4
    %v374 = vmax.f32 %v372, %v373
    %v375 = vrot.slane %v374, 2
    %v376 = vmax.f32 %v374, %v375
    %v377 = vrot.slane %v376, 1
    %v378 = vmax.f32 %v376, %v377
    %v379 = vsub.f32 %v370, %v378
    %v380 = vsub.f32 %v371, %v378
    %v381 = vmul.f32 %v379, 1.442695
    %v382 = vpow.pop %v381
    %v383 = vmul.f32 %v380, 1.442695
    %v384 = vpow.pop %v383
    %v385 = vmul.f32 %v382, %v367
    %v386 = vmul.f32 %v384, %v368
    %v387 = vpack.c.bf16 %v386, %v385
    %v388 = vpack.c.bf16 %v384, %v382
    %v391 = vunpack.c.l.b16 %v220
    %v392 = vunpack.c.l.b16 %v221
    %v393 = vpack.c.b16 %v392, %v391
    %vm394 = vcmask 130048
    %v396 = vsel %vm394, %v393, 0
    %398 = vmatprep.subr.bf16.mxu0 %v388
    %399 = vmatpush1.bf16.msra.mxu0 %v387
    %400 = vmatprep.subr.bf16.mxu0 0
    %401 = vmatpush1.bf16.msra.mxu0 0
    %402 = vmatprep.subr.bf16.mxu0 0
    %403 = vmatpush1.bf16.msra.mxu0 0
    %404 = vmatprep.subr.bf16.mxu0 0
    %405 = vmatpush1.bf16.msra.mxu0 0
    %406 = vmatprep.subr.bf16.mxu0 0
    %407 = vmatpush1.bf16.msra.mxu0 0
    %408 = vmatprep.subr.bf16.mxu0 0
    %409 = vmatpush1.bf16.msra.mxu0 0
    %410 = vmatprep.subr.bf16.mxu0 0
    %411 = vmatpush1.bf16.msra.mxu0 0
    %412 = vmatprep.subr.bf16.mxu0 0
    %413 = vmatpush1.bf16.msra.mxu0 0
    %414 = vmatprep.subr.bf16.mxu0 0
    %415 = vmatpush1.bf16.msra.mxu0 0
    %416 = vmatprep.subr.bf16.mxu0 0
    %417 = vmatpush1.bf16.msra.mxu0 0
    %418 = vmatprep.subr.bf16.mxu0 0
    %419 = vmatpush1.bf16.msra.mxu0 0
    %420 = vmatprep.subr.bf16.mxu0 0
    %421 = vmatpush1.bf16.msra.mxu0 0
    %422 = vmatprep.subr.bf16.mxu0 0
    %423 = vmatpush1.bf16.msra.mxu0 0
    %424 = vmatprep.subr.bf16.mxu0 0
    %425 = vmatpush1.bf16.msra.mxu0 0
    %426 = vmatprep.subr.bf16.mxu0 0
    %427 = vmatpush1.bf16.msra.mxu0 0
    %428 = vmatprep.subr.bf16.mxu0 0
    %429 = vmatpush1.bf16.msra.mxu0 0
    %430 = vmatprep.mubr.bf16.mxu0 0
    %431 = vmatmul.mubr.bf16.gmra.mrb[0].mxu0 %v396
    %v432 = vpop.f32.mrb[0].mxu0
    %v433 = vadd.f32 0.0, %v432
    %v434 = vpop.f32.mrb[0].mxu0
    %v435 = vadd.f32 0.0, %v434
    %v436 = vpop.f32.mrb[0].mxu0
    %v437 = vadd.f32 0.0, %v436
    %v438 = vpop.f32.mrb[0].mxu0
    %v439 = vadd.f32 0.0, %v438
    %440 = vdwg.mxu0
    %v441 = vadd.f32 %v435, 1e-16
    %v442 = vadd.f32 %v439, 1e-16
    %v443 = vrcp.pop %v441
    %v444 = vmul.f32 %v433, %v443
    %v445 = vrcp.pop %v442
    %v446 = vmul.f32 %v437, %v445
    %v447 = vadd.f32 %v444, %v359
    %v448 = vadd.f32 %v446, %v363
    %v449 = vpack.c.bf16 %v448, %v447
    %v450 = vld [vmem:[%s15] sm:$0xf]
    %v451 = vld [vmem:[%s15 + $0x4] sm:$0xf]
    %v452 = vld [vmem:[%s15 + $0x8] sm:$0xf]
    %v453 = vld [vmem:[%s15 + $0xc] sm:$0xf]
    %v454 = vld [vmem:[%s15 + $0x10] sm:$0xf]
    %v455 = vld [vmem:[%s15 + $0x14] sm:$0xf]
    %v456 = vld [vmem:[%s15 + $0x18] sm:$0xf]
    %v457 = vld [vmem:[%s15 + $0x1c] sm:$0xf]
    %v458 = vld [vmem:[%s15 + $0x20] sm:$0xf]
    %v459 = vld [vmem:[%s15 + $0x24] sm:$0xf]
    %v460 = vld [vmem:[%s15 + $0x28] sm:$0xf]
    %v461 = vld [vmem:[%s15 + $0x2c] sm:$0xf]
    %v462 = vld [vmem:[%s15 + $0x30] sm:$0xf]
    %v463 = vld [vmem:[%s15 + $0x34] sm:$0xf]
    %v464 = vld [vmem:[%s15 + $0x38] sm:$0xf]
    %v465 = vld [vmem:[%s15 + $0x3c] sm:$0xf]
    %v482 = vunpack.c.l.b16 %v450
    %v483 = vunpack.c.l.b16 %v451
    %v484 = vunpack.c.l.b16 %v452
    %v485 = vunpack.c.l.b16 %v453
    %v486 = vunpack.c.l.b16 %v454
    %v487 = vunpack.c.l.b16 %v455
    %v488 = vunpack.c.l.b16 %v456
    %v489 = vunpack.c.l.b16 %v457
    %v490 = vunpack.c.l.b16 %v458
    %v491 = vunpack.c.l.b16 %v459
    %v492 = vunpack.c.l.b16 %v460
    %v493 = vunpack.c.l.b16 %v461
    %v494 = vunpack.c.l.b16 %v462
    %v495 = vunpack.c.l.b16 %v463
    %v496 = vunpack.c.l.b16 %v464
    %v497 = vunpack.c.l.b16 %v465
    %v498 = vpack.c.b16 %v483, %v482
    %v499 = vpack.c.b16 %v485, %v484
    %v500 = vpack.c.b16 %v487, %v486
    %v501 = vpack.c.b16 %v489, %v488
    %v502 = vpack.c.b16 %v491, %v490
    %v503 = vpack.c.b16 %v493, %v492
    %v504 = vpack.c.b16 %v495, %v494
    %v505 = vpack.c.b16 %v497, %v496
    %514 = vmatprep.subr.bf16.mxu0 0
    %515 = vmatpush1.bf16.msra.mxu0 %v498
    %516 = vmatprep.subr.bf16.mxu0 0
    %517 = vmatpush1.bf16.msra.mxu0 %v499
    %518 = vmatprep.subr.bf16.mxu0 0
    %519 = vmatpush1.bf16.msra.mxu0 %v500
    %520 = vmatprep.subr.bf16.mxu0 0
    %521 = vmatpush1.bf16.msra.mxu0 %v501
    %522 = vmatprep.subr.bf16.mxu0 0
    %523 = vmatpush1.bf16.msra.mxu0 %v502
    %524 = vmatprep.subr.bf16.mxu0 0
    %525 = vmatpush1.bf16.msra.mxu0 %v503
    %526 = vmatprep.subr.bf16.mxu0 0
    %527 = vmatpush1.bf16.msra.mxu0 %v504
    %528 = vmatprep.subr.bf16.mxu0 0
    %529 = vmatpush1.bf16.msra.mxu0 %v505
    %530 = vmatprep.subr.bf16.mxu0 0
    %531 = vmatpush1.bf16.msra.mxu0 0
    %532 = vmatprep.subr.bf16.mxu0 0
    %533 = vmatpush1.bf16.msra.mxu0 0
    %534 = vmatprep.subr.bf16.mxu0 0
    %535 = vmatpush1.bf16.msra.mxu0 0
    %536 = vmatprep.subr.bf16.mxu0 0
    %537 = vmatpush1.bf16.msra.mxu0 0
    %538 = vmatprep.subr.bf16.mxu0 0
    %539 = vmatpush1.bf16.msra.mxu0 0
    %540 = vmatprep.subr.bf16.mxu0 0
    %541 = vmatpush1.bf16.msra.mxu0 0
    %542 = vmatprep.subr.bf16.mxu0 0
    %543 = vmatpush1.bf16.msra.mxu0 0
    %544 = vmatprep.subr.bf16.mxu0 0
    %545 = vmatpush1.bf16.msra.mxu0 0
    %546 = vmatprep.mubr.bf16.mxu0 0
    %547 = vmatmul.mubr.bf16.gmra.mrb[0].mxu0 %v449
    %v548 = vpop.f32.mrb[0].mxu0
    %v549 = vadd.f32 0.0, %v548
    %v550 = vpop.f32.mrb[0].mxu0
    %v551 = vpop.f32.mrb[0].mxu0
    %v552 = vadd.f32 0.0, %v551
    %v553 = vpop.f32.mrb[0].mxu0
    %554 = vdwg.mxu0
    %v555 = vmul.f32 %v549, %v549
    %v556 = vmul.f32 %v552, %v552
    %v557 = vadd.f32 %v549, %v552
    %v558 = vrot.slane %v557, 4
    %v559 = vadd.f32 %v557, %v558
    %v560 = vrot.slane %v559, 2
    %v561 = vadd.f32 %v559, %v560
    %v562 = vrot.slane %v561, 1
    %v563 = vadd.f32 %v561, %v562
    %v564 = vadd.f32 %v555, %v556
    %v565 = vrot.slane %v564, 4
    %v566 = vadd.f32 %v564, %v565
    %v567 = vrot.slane %v566, 2
    %v568 = vadd.f32 %v566, %v567
    %v569 = vrot.slane %v568, 1
    %v570 = vadd.f32 %v568, %v569
    %v571 = vrcp.pop 16.0
    %v572 = vmul.f32 %v563, %v571
    %v573 = vmul.f32 %v570, %v571
    %v574 = vmul.f32 %v572, %v572
    %v575 = vsub.f32 %v573, %v574
    %v576 = vmax.f32 %v575, 0.0
    %v577 = vsub.f32 %v549, %v572
    %v578 = vsub.f32 %v552, %v572
    %v579 = vadd.f32 %v576, 1e-05
    %v580 = vrsqrt.pop %v579
    %v581 = vmul.f32 %v577, %v580
    %v582 = vmul.f32 %v578, %v580
    %v583 = vld [vmem:[%s17] sm:$0x1]
    %v585 = vlaneseq
    %v586 = vshrl.u32 %v585, 7
    %v587 = vsub.s32 0, %v586
    %v588 = vrot.slane %v583, %v587
    %v590 = vmul.f32 %v581, %v588
    %v591 = vmul.f32 %v582, %v588
    %v592 = vld [vmem:[%s19] sm:$0x1]
    %v594 = vlaneseq
    %v595 = vshrl.u32 %v594, 7
    %v596 = vsub.s32 0, %v595
    %v597 = vrot.slane %v592, %v596
    %v599 = vadd.f32 %v590, %v597
    %v600 = vadd.f32 %v591, %v597
    %v601 = vmax.f32 %v599, 0.0
    %v602 = vmax.f32 %v600, 0.0
    %v603 = vpack.c.bf16 %v602, %v601
    %v604 = vld [vmem:[%s21] sm:$0xf]
    %v605 = vld [vmem:[%s21 + $0x4] sm:$0xf]
    %v606 = vld [vmem:[%s21 + $0x8] sm:$0xf]
    %v607 = vld [vmem:[%s21 + $0xc] sm:$0xf]
    %v608 = vld [vmem:[%s21 + $0x10] sm:$0xf]
    %v609 = vld [vmem:[%s21 + $0x14] sm:$0xf]
    %v610 = vld [vmem:[%s21 + $0x18] sm:$0xf]
    %v611 = vld [vmem:[%s21 + $0x1c] sm:$0xf]
    %v612 = vld [vmem:[%s21 + $0x20] sm:$0xf]
    %v613 = vld [vmem:[%s21 + $0x24] sm:$0xf]
    %v614 = vld [vmem:[%s21 + $0x28] sm:$0xf]
    %v615 = vld [vmem:[%s21 + $0x2c] sm:$0xf]
    %v616 = vld [vmem:[%s21 + $0x30] sm:$0xf]
    %v617 = vld [vmem:[%s21 + $0x34] sm:$0xf]
    %v618 = vld [vmem:[%s21 + $0x38] sm:$0xf]
    %v619 = vld [vmem:[%s21 + $0x3c] sm:$0xf]
    %v620 = vld [vmem:[%s23] sm:$0x1]
    %v622 = vlaneseq
    %v623 = vshrl.u32 %v622, 7
    %v624 = vsub.s32 0, %v623
    %v625 = vrot.slane %v620, %v624
    %v643 = vunpack.c.l.b16 %v604
    %v644 = vunpack.c.l.b16 %v605
    %v645 = vunpack.c.l.b16 %v606
    %v646 = vunpack.c.l.b16 %v607
    %v647 = vunpack.c.l.b16 %v608
    %v648 = vunpack.c.l.b16 %v609
    %v649 = vunpack.c.l.b16 %v610
    %v650 = vunpack.c.l.b16 %v611
    %v651 = vunpack.c.l.b16 %v612
    %v652 = vunpack.c.l.b16 %v613
    %v653 = vunpack.c.l.b16 %v614
    %v654 = vunpack.c.l.b16 %v615
    %v655 = vunpack.c.l.b16 %v616
    %v656 = vunpack.c.l.b16 %v617
    %v657 = vunpack.c.l.b16 %v618
    %v658 = vunpack.c.l.b16 %v619
    %v659 = vpack.c.b16 %v644, %v643
    %v660 = vpack.c.b16 %v646, %v645
    %v661 = vpack.c.b16 %v648, %v647
    %v662 = vpack.c.b16 %v650, %v649
    %v663 = vpack.c.b16 %v652, %v651
    %v664 = vpack.c.b16 %v654, %v653
    %v665 = vpack.c.b16 %v656, %v655
    %v666 = vpack.c.b16 %v658, %v657
    %675 = vmatprep.subr.bf16.mxu0 0
    %676 = vmatpush1.bf16.msra.mxu0 %v659
    %677 = vmatprep.subr.bf16.mxu0 0
    %678 = vmatpush1.bf16.msra.mxu0 %v660
    %679 = vmatprep.subr.bf16.mxu0 0
    %680 = vmatpush1.bf16.msra.mxu0 %v661
    %681 = vmatprep.subr.bf16.mxu0 0
    %682 = vmatpush1.bf16.msra.mxu0 %v662
    %683 = vmatprep.subr.bf16.mxu0 0
    %684 = vmatpush1.bf16.msra.mxu0 %v663
    %685 = vmatprep.subr.bf16.mxu0 0
    %686 = vmatpush1.bf16.msra.mxu0 %v664
    %687 = vmatprep.subr.bf16.mxu0 0
    %688 = vmatpush1.bf16.msra.mxu0 %v665
    %689 = vmatprep.subr.bf16.mxu0 0
    %690 = vmatpush1.bf16.msra.mxu0 %v666
    %691 = vmatprep.subr.bf16.mxu0 0
    %692 = vmatpush1.bf16.msra.mxu0 0
    %693 = vmatprep.subr.bf16.mxu0 0
    %694 = vmatpush1.bf16.msra.mxu0 0
    %695 = vmatprep.subr.bf16.mxu0 0
    %696 = vmatpush1.bf16.msra.mxu0 0
    %697 = vmatprep.subr.bf16.mxu0 0
    %698 = vmatpush1.bf16.msra.mxu0 0
    %699 = vmatprep.subr.bf16.mxu0 0
    %700 = vmatpush1.bf16.msra.mxu0 0
    %701 = vmatprep.subr.bf16.mxu0 0
    %702 = vmatpush1.bf16.msra.mxu0 0
    %703 = vmatprep.subr.bf16.mxu0 0
    %704 = vmatpush1.bf16.msra.mxu0 0
    %705 = vmatprep.subr.bf16.mxu0 0
    %706 = vmatpush1.bf16.msra.mxu0 0
    %707 = vmatprep.mubr.bf16.mxu0 0
    %708 = vmatmul.mubr.bf16.gmra.mrb[0].mxu0 %v603
    %v709 = vpop.f32.mrb[0].mxu0
    %v710 = vadd.f32 %v625, %v709
    %v711 = vpop.f32.mrb[0].mxu0
    %v712 = vpop.f32.mrb[0].mxu0
    %v713 = vadd.f32 %v625, %v712
    %v714 = vpop.f32.mrb[0].mxu0
    %715 = vdwg.mxu0
    %v716 = vld [vmem:[%s5] sm:$0xff]
    %v717 = vld [vmem:[%s5 + $0x8] sm:$0xff]
    %v718 = vadd.f32 %v710, %v716
    %v719 = vadd.f32 %v713, %v717
    %v720 = vld [vmem:[%s7] sm:$0xff]
    %v721 = vld [vmem:[%s7 + $0x8] sm:$0xff]
    %v722 = vmul.f32 %v718, %v720
    %v723 = vmul.f32 %v719, %v721
    %s724 = sld [smem:[#allocation2 + $0x1]]
    %v725 = vpack.c.bf16 %v723, %v722
    %v726 = vld [vmem:[%s25] sm:$0xff]
    %v727 = vld [vmem:[%s25 + $0x8] sm:$0xff]
    %v728 = vld [vmem:[%s25 + $0x10] sm:$0xff]
    %v729 = vld [vmem:[%s25 + $0x18] sm:$0xff]
    %v730 = vld [vmem:[%s25 + $0x20] sm:$0xff]
    %v731 = vld [vmem:[%s25 + $0x28] sm:$0xff]
    %v732 = vld [vmem:[%s25 + $0x30] sm:$0xff]
    %v733 = vld [vmem:[%s25 + $0x38] sm:$0xff]
    %v734 = vld [vmem:[%s25 + $0x40] sm:$0xff]
    %v735 = vld [vmem:[%s25 + $0x48] sm:$0xff]
    %v736 = vld [vmem:[%s25 + $0x50] sm:$0xff]
    %v737 = vld [vmem:[%s25 + $0x58] sm:$0xff]
    %v738 = vld [vmem:[%s25 + $0x60] sm:$0xff]
    %v739 = vld [vmem:[%s25 + $0x68] sm:$0xff]
    %v740 = vld [vmem:[%s25 + $0x70] sm:$0xff]
    %v741 = vld [vmem:[%s25 + $0x78] sm:$0xff]
    %v758 = vunpack.c.l.b16 %v726
    %v759 = vunpack.c.h.b16 %v726
    %v760 = vunpack.c.l.b16 %v727
    %v761 = vunpack.c.h.b16 %v727
    %v762 = vunpack.c.l.b16 %v728
    %v763 = vunpack.c.h.b16 %v728
    %v764 = vunpack.c.l.b16 %v729
    %v765 = vunpack.c.h.b16 %v729
    %v766 = vunpack.c.l.b16 %v730
    %v767 = vunpack.c.h.b16 %v730
    %v768 = vunpack.c.l.b16 %v731
    %v769 = vunpack.c.h.b16 %v731
    %v770 = vunpack.c.l.b16 %v732
    %v771 = vunpack.c.h.b16 %v732
    %v772 = vunpack.c.l.b16 %v733
    %v773 = vunpack.c.h.b16 %v733
    %v774 = vunpack.c.l.b16 %v734
    %v775 = vunpack.c.h.b16 %v734
    %v776 = vunpack.c.l.b16 %v735
    %v777 = vunpack.c.h.b16 %v735
    %v778 = vunpack.c.l.b16 %v736
    %v779 = vunpack.c.h.b16 %v736
    %v780 = vunpack.c.l.b16 %v737
    %v781 = vunpack.c.h.b16 %v737
    %v782 = vunpack.c.l.b16 %v738
    %v783 = vunpack.c.h.b16 %v738
    %v784 = vunpack.c.l.b16 %v739
    %v785 = vunpack.c.h.b16 %v739
    %v786 = vunpack.c.l.b16 %v740
    %v787 = vunpack.c.h.b16 %v740
    %v788 = vunpack.c.l.b16 %v741
    %v789 = vunpack.c.h.b16 %v741
    %v790 = vpack.c.b16 %v760, %v758
    %v791 = vpack.c.b16 %v761, %v759
    %v792 = vpack.c.b16 %v764, %v762
    %v793 = vpack.c.b16 %v765, %v763
    %v794 = vpack.c.b16 %v768, %v766
    %v795 = vpack.c.b16 %v769, %v767
    %v796 = vpack.c.b16 %v772, %v770
    %v797 = vpack.c.b16 %v773, %v771
    %v798 = vpack.c.b16 %v776, %v774
    %v799 = vpack.c.b16 %v777, %v775
    %v800 = vpack.c.b16 %v780, %v778
    %v801 = vpack.c.b16 %v781, %v779
    %v802 = vpack.c.b16 %v784, %v782
    %v803 = vpack.c.b16 %v785, %v783
    %v804 = vpack.c.b16 %v788, %v786
    %v805 = vpack.c.b16 %v789, %v787
    %822 = vmatprep.subr.bf16.mxu0 %v791
    %823 = vmatpush1.bf16.msra.mxu0 %v790
    %824 = vmatprep.subr.bf16.mxu0 %v793
    %825 = vmatpush1.bf16.msra.mxu0 %v792
    %826 = vmatprep.subr.bf16.mxu0 %v795
    %827 = vmatpush1.bf16.msra.mxu0 %v794
    %828 = vmatprep.subr.bf16.mxu0 %v797
    %829 = vmatpush1.bf16.msra.mxu0 %v796
    %830 = vmatprep.subr.bf16.mxu0 %v799
    %831 = vmatpush1.bf16.msra.mxu0 %v798
    %832 = vmatprep.subr.bf16.mxu0 %v801
    %833 = vmatpush1.bf16.msra.mxu0 %v800
    %834 = vmatprep.subr.bf16.mxu0 %v803
    %835 = vmatpush1.bf16.msra.mxu0 %v802
    %836 = vmatprep.subr.bf16.mxu0 %v805
    %837 = vmatpush1.bf16.msra.mxu0 %v804
    %838 = vmatprep.subr.bf16.mxu0 0
    %839 = vmatpush1.bf16.msra.mxu0 0
    %840 = vmatprep.subr.bf16.mxu0 0
    %841 = vmatpush1.bf16.msra.mxu0 0
    %842 = vmatprep.subr.bf16.mxu0 0
    %843 = vmatpush1.bf16.msra.mxu0 0
    %844 = vmatprep.subr.bf16.mxu0 0
    %845 = vmatpush1.bf16.msra.mxu0 0
    %846 = vmatprep.subr.bf16.mxu0 0
    %847 = vmatpush1.bf16.msra.mxu0 0
    %848 = vmatprep.subr.bf16.mxu0 0
    %849 = vmatpush1.bf16.msra.mxu0 0
    %850 = vmatprep.subr.bf16.mxu0 0
    %851 = vmatpush1.bf16.msra.mxu0 0
    %852 = vmatprep.subr.bf16.mxu0 0
    %853 = vmatpush1.bf16.msra.mxu0 0
    %854 = vmatprep.mubr.bf16.mxu0 0
    %855 = vmatmul.mubr.bf16.gmra.mrb[0].mxu0 %v725
    %v856 = vpop.f32.mrb[0].mxu0
    %v857 = vadd.f32 0.0, %v856
    %v858 = vpop.f32.mrb[0].mxu0
    %v859 = vadd.f32 0.0, %v858
    %v860 = vpop.f32.mrb[0].mxu0
    %v861 = vadd.f32 0.0, %v860
    %v862 = vpop.f32.mrb[0].mxu0
    %v863 = vadd.f32 0.0, %v862
    %864 = vdwg.mxu0
    %v865 = vmax.f32 %v857, 0.0
    %v866 = vmax.f32 %v861, 0.0
    %v867 = vadd.f32 %v865, 1e-07
    %v868 = vadd.f32 %v866, 1e-07
    %v869 = vstv %s724
    %v870 = vmul.f32 %v867, %v869
    %v871 = vmul.f32 %v868, %v869
    %v872 = vmax.f32 %v870, %v871
    %v873 = vrot.slane %v872, 4
    %v874 = vmax.f32 %v872, %v873
    %v875 = vrot.slane %v874, 2
    %v876 = vmax.f32 %v874, %v875
    %v877 = vrot.slane %v876, 1
    %v878 = vmax.f32 %v876, %v877
    %v879 = vsub.f32 %v870, %v878
    %v880 = vsub.f32 %v871, %v878
    %v881 = vmul.f32 %v879, 1.442695
    %v882 = vpow.pop %v881
    %v883 = vmul.f32 %v880, 1.442695
    %v884 = vpow.pop %v883
    %v885 = vmul.f32 %v882, %v867
    %v886 = vmul.f32 %v884, %v868
    %v887 = vpack.c.bf16 %v886, %v885
    %v888 = vpack.c.bf16 %v884, %v882
    %889 = vmatprep.subr.bf16.mxu0 %v888
    %890 = vmatpush1.bf16.msra.mxu0 %v887
    %891 = vmatprep.subr.bf16.mxu0 0
    %892 = vmatpush1.bf16.msra.mxu0 0
    %893 = vmatprep.subr.bf16.mxu0 0
    %894 = vmatpush1.bf16.msra.mxu0 0
    %895 = vmatprep.subr.bf16.mxu0 0
    %896 = vmatpush1.bf16.msra.mxu0 0
    %897 = vmatprep.subr.bf16.mxu0 0
    %898 = vmatpush1.bf16.msra.mxu0 0
    %899 = vmatprep.subr.bf16.mxu0 0
    %900 = vmatpush1.bf16.msra.mxu0 0
    %901 = vmatprep.subr.bf16.mxu0 0
    %902 = vmatpush1.bf16.msra.mxu0 0
    %903 = vmatprep.subr.bf16.mxu0 0
    %904 = vmatpush1.bf16.msra.mxu0 0
    %905 = vmatprep.subr.bf16.mxu0 0
    %906 = vmatpush1.bf16.msra.mxu0 0
    %907 = vmatprep.subr.bf16.mxu0 0
    %908 = vmatpush1.bf16.msra.mxu0 0
    %909 = vmatprep.subr.bf16.mxu0 0
    %910 = vmatpush1.bf16.msra.mxu0 0
    %911 = vmatprep.subr.bf16.mxu0 0
    %912 = vmatpush1.bf16.msra.mxu0 0
    %913 = vmatprep.subr.bf16.mxu0 0
    %914 = vmatpush1.bf16.msra.mxu0 0
    %915 = vmatprep.subr.bf16.mxu0 0
    %916 = vmatpush1.bf16.msra.mxu0 0
    %917 = vmatprep.subr.bf16.mxu0 0
    %918 = vmatpush1.bf16.msra.mxu0 0
    %919 = vmatprep.subr.bf16.mxu0 0
    %920 = vmatpush1.bf16.msra.mxu0 0
    %921 = vmatprep.mubr.bf16.mxu0 0
    %922 = vmatmul.mubr.bf16.gmra.mrb[0].mxu0 %v396
    %v923 = vpop.f32.mrb[0].mxu0
    %v924 = vadd.f32 0.0, %v923
    %v925 = vpop.f32.mrb[0].mxu0
    %v926 = vadd.f32 0.0, %v925
    %v927 = vpop.f32.mrb[0].mxu0
    %v928 = vadd.f32 0.0, %v927
    %v929 = vpop.f32.mrb[0].mxu0
    %v930 = vadd.f32 0.0, %v929
    %931 = vdwg.mxu0
    %v932 = vadd.f32 %v926, 1e-16
    %v933 = vadd.f32 %v930, 1e-16
    %v934 = vrcp.pop %v932
    %v935 = vmul.f32 %v924, %v934
    %v936 = vrcp.pop %v933
    %v937 = vmul.f32 %v928, %v936
    %v938 = vadd.f32 %v935, %v859
    %v939 = vadd.f32 %v937, %v863
    %v940 = vpack.c.bf16 %v939, %v938
    %v941 = vld [vmem:[%s27] sm:$0xf]
    %v942 = vld [vmem:[%s27 + $0x4] sm:$0xf]
    %v943 = vld [vmem:[%s27 + $0x8] sm:$0xf]
    %v944 = vld [vmem:[%s27 + $0xc] sm:$0xf]
    %v945 = vld [vmem:[%s27 + $0x10] sm:$0xf]
    %v946 = vld [vmem:[%s27 + $0x14] sm:$0xf]
    %v947 = vld [vmem:[%s27 + $0x18] sm:$0xf]
    %v948 = vld [vmem:[%s27 + $0x1c] sm:$0xf]
    %v949 = vld [vmem:[%s27 + $0x20] sm:$0xf]
    %v950 = vld [vmem:[%s27 + $0x24] sm:$0xf]
    %v951 = vld [vmem:[%s27 + $0x28] sm:$0xf]
    %v952 = vld [vmem:[%s27 + $0x2c] sm:$0xf]
    %v953 = vld [vmem:[%s27 + $0x30] sm:$0xf]
    %v954 = vld [vmem:[%s27 + $0x34] sm:$0xf]
    %v955 = vld [vmem:[%s27 + $0x38] sm:$0xf]
    %v956 = vld [vmem:[%s27 + $0x3c] sm:$0xf]
    %v973 = vunpack.c.l.b16 %v941
    %v974 = vunpack.c.l.b16 %v942
    %v975 = vunpack.c.l.b16 %v943
    %v976 = vunpack.c.l.b16 %v944
    %v977 = vunpack.c.l.b16 %v945
    %v978 = vunpack.c.l.b16 %v946
    %v979 = vunpack.c.l.b16 %v947
    %v980 = vunpack.c.l.b16 %v948
    %v981 = vunpack.c.l.b16 %v949
    %v982 = vunpack.c.l.b16 %v950
    %v983 = vunpack.c.l.b16 %v951
    %v984 = vunpack.c.l.b16 %v952
    %v985 = vunpack.c.l.b16 %v953
    %v986 = vunpack.c.l.b16 %v954
    %v987 = vunpack.c.l.b16 %v955
    %v988 = vunpack.c.l.b16 %v956
    %v989 = vpack.c.b16 %v974, %v973
    %v990 = vpack.c.b16 %v976, %v975
    %v991 = vpack.c.b16 %v978, %v977
    %v992 = vpack.c.b16 %v980, %v979
    %v993 = vpack.c.b16 %v982, %v981
    %v994 = vpack.c.b16 %v984, %v983
    %v995 = vpack.c.b16 %v986, %v985
    %v996 = vpack.c.b16 %v988, %v987
    %1005 = vmatprep.subr.bf16.mxu0 0
    %1006 = vmatpush1.bf16.msra.mxu0 %v989
    %1007 = vmatprep.subr.bf16.mxu0 0
    %1008 = vmatpush1.bf16.msra.mxu0 %v990
    %1009 = vmatprep.subr.bf16.mxu0 0
    %1010 = vmatpush1.bf16.msra.mxu0 %v991
    %1011 = vmatprep.subr.bf16.mxu0 0
    %1012 = vmatpush1.bf16.msra.mxu0 %v992
    %1013 = vmatprep.subr.bf16.mxu0 0
    %1014 = vmatpush1.bf16.msra.mxu0 %v993
    %1015 = vmatprep.subr.bf16.mxu0 0
    %1016 = vmatpush1.bf16.msra.mxu0 %v994
    %1017 = vmatprep.subr.bf16.mxu0 0
    %1018 = vmatpush1.bf16.msra.mxu0 %v995
    %1019 = vmatprep.subr.bf16.mxu0 0
    %1020 = vmatpush1.bf16.msra.mxu0 %v996
    %1021 = vmatprep.subr.bf16.mxu0 0
    %1022 = vmatpush1.bf16.msra.mxu0 0
    %1023 = vmatprep.subr.bf16.mxu0 0
    %1024 = vmatpush1.bf16.msra.mxu0 0
    %1025 = vmatprep.subr.bf16.mxu0 0
    %1026 = vmatpush1.bf16.msra.mxu0 0
    %1027 = vmatprep.subr.bf16.mxu0 0
    %1028 = vmatpush1.bf16.msra.mxu0 0
    %1029 = vmatprep.subr.bf16.mxu0 0
    %1030 = vmatpush1.bf16.msra.mxu0 0
    %1031 = vmatprep.subr.bf16.mxu0 0
    %1032 = vmatpush1.bf16.msra.mxu0 0
    %1033 = vmatprep.subr.bf16.mxu0 0
    %1034 = vmatpush1.bf16.msra.mxu0 0
    %1035 = vmatprep.subr.bf16.mxu0 0
    %1036 = vmatpush1.bf16.msra.mxu0 0
    %1037 = vmatprep.mubr.bf16.mxu0 0
    %1038 = vmatmul.mubr.bf16.gmra.mrb[0].mxu0 %v940
    %v1039 = vpop.f32.mrb[0].mxu0
    %v1040 = vadd.f32 0.0, %v1039
    %v1041 = vpop.f32.mrb[0].mxu0
    %v1042 = vpop.f32.mrb[0].mxu0
    %v1043 = vadd.f32 0.0, %v1042
    %v1044 = vpop.f32.mrb[0].mxu0
    %1045 = vdwg.mxu0
    %v1046 = vmul.f32 %v1040, %v1040
    %v1047 = vmul.f32 %v1043, %v1043
    %v1048 = vadd.f32 %v1040, %v1043
    %v1049 = vrot.slane %v1048, 4
    %v1050 = vadd.f32 %v1048, %v1049
    %v1051 = vrot.slane %v1050, 2
    %v1052 = vadd.f32 %v1050, %v1051
    %v1053 = vrot.slane %v1052, 1
    %v1054 = vadd.f32 %v1052, %v1053
    %v1055 = vadd.f32 %v1046, %v1047
    %v1056 = vrot.slane %v1055, 4
    %v1057 = vadd.f32 %v1055, %v1056
    %v1058 = vrot.slane %v1057, 2
    %v1059 = vadd.f32 %v1057, %v1058
    %v1060 = vrot.slane %v1059, 1
    %v1061 = vadd.f32 %v1059, %v1060
    %v1062 = vmul.f32 %v1054, %v571
    %v1063 = vmul.f32 %v1061, %v571
    %v1064 = vmul.f32 %v1062, %v1062
    %v1065 = vsub.f32 %v1063, %v1064
    %v1066 = vmax.f32 %v1065, 0.0
    %v1067 = vsub.f32 %v1040, %v1062
    %v1068 = vsub.f32 %v1043, %v1062
    %v1069 = vadd.f32 %v1066, 1e-05
    %v1070 = vrsqrt.pop %v1069
    %v1071 = vmul.f32 %v1067, %v1070
    %v1072 = vmul.f32 %v1068, %v1070
    %v1073 = vld [vmem:[%s29] sm:$0x1]
    %v1075 = vlaneseq
    %v1076 = vshrl.u32 %v1075, 7
    %v1077 = vsub.s32 0, %v1076
    %v1078 = vrot.slane %v1073, %v1077
    %v1080 = vmul.f32 %v1071, %v1078
    %v1081 = vmul.f32 %v1072, %v1078
    %v1082 = vld [vmem:[%s31] sm:$0x1]
    %v1084 = vlaneseq
    %v1085 = vshrl.u32 %v1084, 7
    %v1086 = vsub.s32 0, %v1085
    %v1087 = vrot.slane %v1082, %v1086
    %v1089 = vadd.f32 %v1080, %v1087
    %v1090 = vadd.f32 %v1081, %v1087
    %v1091 = vmax.f32 %v1089, 0.0
    %v1092 = vmax.f32 %v1090, 0.0
    %v1093 = vpack.c.bf16 %v1092, %v1091
    %v1094 = vld [vmem:[%s33] sm:$0xf]
    %v1095 = vld [vmem:[%s33 + $0x4] sm:$0xf]
    %v1096 = vld [vmem:[%s33 + $0x8] sm:$0xf]
    %v1097 = vld [vmem:[%s33 + $0xc] sm:$0xf]
    %v1098 = vld [vmem:[%s33 + $0x10] sm:$0xf]
    %v1099 = vld [vmem:[%s33 + $0x14] sm:$0xf]
    %v1100 = vld [vmem:[%s33 + $0x18] sm:$0xf]
    %v1101 = vld [vmem:[%s33 + $0x1c] sm:$0xf]
    %v1102 = vld [vmem:[%s33 + $0x20] sm:$0xf]
    %v1103 = vld [vmem:[%s33 + $0x24] sm:$0xf]
    %v1104 = vld [vmem:[%s33 + $0x28] sm:$0xf]
    %v1105 = vld [vmem:[%s33 + $0x2c] sm:$0xf]
    %v1106 = vld [vmem:[%s33 + $0x30] sm:$0xf]
    %v1107 = vld [vmem:[%s33 + $0x34] sm:$0xf]
    %v1108 = vld [vmem:[%s33 + $0x38] sm:$0xf]
    %v1109 = vld [vmem:[%s33 + $0x3c] sm:$0xf]
    %v1110 = vld [vmem:[%s35] sm:$0x1]
    %v1112 = vlaneseq
    %v1113 = vshrl.u32 %v1112, 7
    %v1114 = vsub.s32 0, %v1113
    %v1115 = vrot.slane %v1110, %v1114
    %v1133 = vunpack.c.l.b16 %v1094
    %v1134 = vunpack.c.l.b16 %v1095
    %v1135 = vunpack.c.l.b16 %v1096
    %v1136 = vunpack.c.l.b16 %v1097
    %v1137 = vunpack.c.l.b16 %v1098
    %v1138 = vunpack.c.l.b16 %v1099
    %v1139 = vunpack.c.l.b16 %v1100
    %v1140 = vunpack.c.l.b16 %v1101
    %v1141 = vunpack.c.l.b16 %v1102
    %v1142 = vunpack.c.l.b16 %v1103
    %v1143 = vunpack.c.l.b16 %v1104
    %v1144 = vunpack.c.l.b16 %v1105
    %v1145 = vunpack.c.l.b16 %v1106
    %v1146 = vunpack.c.l.b16 %v1107
    %v1147 = vunpack.c.l.b16 %v1108
    %v1148 = vunpack.c.l.b16 %v1109
    %v1149 = vpack.c.b16 %v1134, %v1133
    %v1150 = vpack.c.b16 %v1136, %v1135
    %v1151 = vpack.c.b16 %v1138, %v1137
    %v1152 = vpack.c.b16 %v1140, %v1139
    %v1153 = vpack.c.b16 %v1142, %v1141
    %v1154 = vpack.c.b16 %v1144, %v1143
    %v1155 = vpack.c.b16 %v1146, %v1145
    %v1156 = vpack.c.b16 %v1148, %v1147
    %1165 = vmatprep.subr.bf16.mxu0 0
    %1166 = vmatpush1.bf16.msra.mxu0 %v1149
    %1167 = vmatprep.subr.bf16.mxu0 0
    %1168 = vmatpush1.bf16.msra.mxu0 %v1150
    %1169 = vmatprep.subr.bf16.mxu0 0
    %1170 = vmatpush1.bf16.msra.mxu0 %v1151
    %1171 = vmatprep.subr.bf16.mxu0 0
    %1172 = vmatpush1.bf16.msra.mxu0 %v1152
    %1173 = vmatprep.subr.bf16.mxu0 0
    %1174 = vmatpush1.bf16.msra.mxu0 %v1153
    %1175 = vmatprep.subr.bf16.mxu0 0
    %1176 = vmatpush1.bf16.msra.mxu0 %v1154
    %1177 = vmatprep.subr.bf16.mxu0 0
    %1178 = vmatpush1.bf16.msra.mxu0 %v1155
    %1179 = vmatprep.subr.bf16.mxu0 0
    %1180 = vmatpush1.bf16.msra.mxu0 %v1156
    %1181 = vmatprep.subr.bf16.mxu0 0
    %1182 = vmatpush1.bf16.msra.mxu0 0
    %1183 = vmatprep.subr.bf16.mxu0 0
    %1184 = vmatpush1.bf16.msra.mxu0 0
    %1185 = vmatprep.subr.bf16.mxu0 0
    %1186 = vmatpush1.bf16.msra.mxu0 0
    %1187 = vmatprep.subr.bf16.mxu0 0
    %1188 = vmatpush1.bf16.msra.mxu0 0
    %1189 = vmatprep.subr.bf16.mxu0 0
    %1190 = vmatpush1.bf16.msra.mxu0 0
    %1191 = vmatprep.subr.bf16.mxu0 0
    %1192 = vmatpush1.bf16.msra.mxu0 0
    %1193 = vmatprep.subr.bf16.mxu0 0
    %1194 = vmatpush1.bf16.msra.mxu0 0
    %1195 = vmatprep.subr.bf16.mxu0 0
    %1196 = vmatpush1.bf16.msra.mxu0 0
    %1197 = vmatprep.mubr.bf16.mxu0 0
    %1198 = vmatmul.mubr.bf16.gmra.mrb[0].mxu0 %v1093
    %v1199 = vpop.f32.mrb[0].mxu0
    %v1200 = vadd.f32 %v1115, %v1199
    %v1201 = vpop.f32.mrb[0].mxu0
    %v1202 = vpop.f32.mrb[0].mxu0
    %v1203 = vadd.f32 %v1115, %v1202
    %v1204 = vpop.f32.mrb[0].mxu0
    %1205 = vdwg.mxu0
    %s1206 = scalar_lea.vmem %s5, 16
    %v1207 = vld [vmem:[%s1206] sm:$0xff]
    %v1208 = vld [vmem:[%s1206 + $0x8] sm:$0xff]
    %v1209 = vadd.f32 %v1200, %v1207
    %v1210 = vadd.f32 %v1203, %v1208
    %s1211 = scalar_lea.vmem %s7, 16
    %v1212 = vld [vmem:[%s1211] sm:$0xff]
    %v1213 = vld [vmem:[%s1211 + $0x8] sm:$0xff]
    %v1214 = vmul.f32 %v1209, %v1212
    %v1215 = vmul.f32 %v1210, %v1213
    %s1216 = sld [smem:[#allocation2 + $0x2]]
    %v1217 = vpack.c.bf16 %v1215, %v1214
    %v1218 = vld [vmem:[%s37] sm:$0xff]
    %v1219 = vld [vmem:[%s37 + $0x8] sm:$0xff]
    %v1220 = vld [vmem:[%s37 + $0x10] sm:$0xff]
    %v1221 = vld [vmem:[%s37 + $0x18] sm:$0xff]
    %v1222 = vld [vmem:[%s37 + $0x20] sm:$0xff]
    %v1223 = vld [vmem:[%s37 + $0x28] sm:$0xff]
    %v1224 = vld [vmem:[%s37 + $0x30] sm:$0xff]
    %v1225 = vld [vmem:[%s37 + $0x38] sm:$0xff]
    %v1226 = vld [vmem:[%s37 + $0x40] sm:$0xff]
    %v1227 = vld [vmem:[%s37 + $0x48] sm:$0xff]
    %v1228 = vld [vmem:[%s37 + $0x50] sm:$0xff]
    %v1229 = vld [vmem:[%s37 + $0x58] sm:$0xff]
    %v1230 = vld [vmem:[%s37 + $0x60] sm:$0xff]
    %v1231 = vld [vmem:[%s37 + $0x68] sm:$0xff]
    %v1232 = vld [vmem:[%s37 + $0x70] sm:$0xff]
    %v1233 = vld [vmem:[%s37 + $0x78] sm:$0xff]
    %v1250 = vunpack.c.l.b16 %v1218
    %v1251 = vunpack.c.h.b16 %v1218
    %v1252 = vunpack.c.l.b16 %v1219
    %v1253 = vunpack.c.h.b16 %v1219
    %v1254 = vunpack.c.l.b16 %v1220
    %v1255 = vunpack.c.h.b16 %v1220
    %v1256 = vunpack.c.l.b16 %v1221
    %v1257 = vunpack.c.h.b16 %v1221
    %v1258 = vunpack.c.l.b16 %v1222
    %v1259 = vunpack.c.h.b16 %v1222
    %v1260 = vunpack.c.l.b16 %v1223
    %v1261 = vunpack.c.h.b16 %v1223
    %v1262 = vunpack.c.l.b16 %v1224
    %v1263 = vunpack.c.h.b16 %v1224
    %v1264 = vunpack.c.l.b16 %v1225
    %v1265 = vunpack.c.h.b16 %v1225
    %v1266 = vunpack.c.l.b16 %v1226
    %v1267 = vunpack.c.h.b16 %v1226
    %v1268 = vunpack.c.l.b16 %v1227
    %v1269 = vunpack.c.h.b16 %v1227
    %v1270 = vunpack.c.l.b16 %v1228
    %v1271 = vunpack.c.h.b16 %v1228
    %v1272 = vunpack.c.l.b16 %v1229
    %v1273 = vunpack.c.h.b16 %v1229
    %v1274 = vunpack.c.l.b16 %v1230
    %v1275 = vunpack.c.h.b16 %v1230
    %v1276 = vunpack.c.l.b16 %v1231
    %v1277 = vunpack.c.h.b16 %v1231
    %v1278 = vunpack.c.l.b16 %v1232
    %v1279 = vunpack.c.h.b16 %v1232
    %v1280 = vunpack.c.l.b16 %v1233
    %v1281 = vunpack.c.h.b16 %v1233
    %v1282 = vpack.c.b16 %v1252, %v1250
    %v1283 = vpack.c.b16 %v1253, %v1251
    %v1284 = vpack.c.b16 %v1256, %v1254
    %v1285 = vpack.c.b16 %v1257, %v1255
    %v1286 = vpack.c.b16 %v1260, %v1258
    %v1287 = vpack.c.b16 %v1261, %v1259
    %v1288 = vpack.c.b16 %v1264, %v1262
    %v1289 = vpack.c.b16 %v1265, %v1263
    %v1290 = vpack.c.b16 %v1268, %v1266
    %v1291 = vpack.c.b16 %v1269, %v1267
    %v1292 = vpack.c.b16 %v1272, %v1270
    %v1293 = vpack.c.b16 %v1273, %v1271
    %v1294 = vpack.c.b16 %v1276, %v1274
    %v1295 = vpack.c.b16 %v1277, %v1275
    %v1296 = vpack.c.b16 %v1280, %v1278
    %v1297 = vpack.c.b16 %v1281, %v1279
    %1314 = vmatprep.subr.bf16.mxu0 %v1283
    %1315 = vmatpush1.bf16.msra.mxu0 %v1282
    %1316 = vmatprep.subr.bf16.mxu0 %v1285
    %1317 = vmatpush1.bf16.msra.mxu0 %v1284
    %1318 = vmatprep.subr.bf16.mxu0 %v1287
    %1319 = vmatpush1.bf16.msra.mxu0 %v1286
    %1320 = vmatprep.subr.bf16.mxu0 %v1289
    %1321 = vmatpush1.bf16.msra.mxu0 %v1288
    %1322 = vmatprep.subr.bf16.mxu0 %v1291
    %1323 = vmatpush1.bf16.msra.mxu0 %v1290
    %1324 = vmatprep.subr.bf16.mxu0 %v1293
    %1325 = vmatpush1.bf16.msra.mxu0 %v1292
    %1326 = vmatprep.subr.bf16.mxu0 %v1295
    %1327 = vmatpush1.bf16.msra.mxu0 %v1294
    %1328 = vmatprep.subr.bf16.mxu0 %v1297
    %1329 = vmatpush1.bf16.msra.mxu0 %v1296
    %1330 = vmatprep.subr.bf16.mxu0 0
    %1331 = vmatpush1.bf16.msra.mxu0 0
    %1332 = vmatprep.subr.bf16.mxu0 0
    %1333 = vmatpush1.bf16.msra.mxu0 0
    %1334 = vmatprep.subr.bf16.mxu0 0
    %1335 = vmatpush1.bf16.msra.mxu0 0
    %1336 = vmatprep.subr.bf16.mxu0 0
    %1337 = vmatpush1.bf16.msra.mxu0 0
    %1338 = vmatprep.subr.bf16.mxu0 0
    %1339 = vmatpush1.bf16.msra.mxu0 0
    %1340 = vmatprep.subr.bf16.mxu0 0
    %1341 = vmatpush1.bf16.msra.mxu0 0
    %1342 = vmatprep.subr.bf16.mxu0 0
    %1343 = vmatpush1.bf16.msra.mxu0 0
    %1344 = vmatprep.subr.bf16.mxu0 0
    %1345 = vmatpush1.bf16.msra.mxu0 0
    %1346 = vmatprep.mubr.bf16.mxu0 0
    %1347 = vmatmul.mubr.bf16.gmra.mrb[0].mxu0 %v1217
    %v1348 = vpop.f32.mrb[0].mxu0
    %v1349 = vadd.f32 0.0, %v1348
    %v1350 = vpop.f32.mrb[0].mxu0
    %v1351 = vadd.f32 0.0, %v1350
    %v1352 = vpop.f32.mrb[0].mxu0
    %v1353 = vadd.f32 0.0, %v1352
    %v1354 = vpop.f32.mrb[0].mxu0
    %v1355 = vadd.f32 0.0, %v1354
    %1356 = vdwg.mxu0
    %v1357 = vmax.f32 %v1349, 0.0
    %v1358 = vmax.f32 %v1353, 0.0
    %v1359 = vadd.f32 %v1357, 1e-07
    %v1360 = vadd.f32 %v1358, 1e-07
    %v1361 = vstv %s1216
    %v1362 = vmul.f32 %v1359, %v1361
    %v1363 = vmul.f32 %v1360, %v1361
    %v1364 = vmax.f32 %v1362, %v1363
    %v1365 = vrot.slane %v1364, 4
    %v1366 = vmax.f32 %v1364, %v1365
    %v1367 = vrot.slane %v1366, 2
    %v1368 = vmax.f32 %v1366, %v1367
    %v1369 = vrot.slane %v1368, 1
    %v1370 = vmax.f32 %v1368, %v1369
    %v1371 = vsub.f32 %v1362, %v1370
    %v1372 = vsub.f32 %v1363, %v1370
    %v1373 = vmul.f32 %v1371, 1.442695
    %v1374 = vpow.pop %v1373
    %v1375 = vmul.f32 %v1372, 1.442695
    %v1376 = vpow.pop %v1375
    %v1377 = vmul.f32 %v1374, %v1359
    %v1378 = vmul.f32 %v1376, %v1360
    %v1379 = vpack.c.bf16 %v1378, %v1377
    %v1380 = vpack.c.bf16 %v1376, %v1374
    %1381 = vmatprep.subr.bf16.mxu0 %v1380
    %1382 = vmatpush1.bf16.msra.mxu0 %v1379
    %1383 = vmatprep.subr.bf16.mxu0 0
    %1384 = vmatpush1.bf16.msra.mxu0 0
    %1385 = vmatprep.subr.bf16.mxu0 0
    %1386 = vmatpush1.bf16.msra.mxu0 0
    %1387 = vmatprep.subr.bf16.mxu0 0
    %1388 = vmatpush1.bf16.msra.mxu0 0
    %1389 = vmatprep.subr.bf16.mxu0 0
    %1390 = vmatpush1.bf16.msra.mxu0 0
    %1391 = vmatprep.subr.bf16.mxu0 0
    %1392 = vmatpush1.bf16.msra.mxu0 0
    %1393 = vmatprep.subr.bf16.mxu0 0
    %1394 = vmatpush1.bf16.msra.mxu0 0
    %1395 = vmatprep.subr.bf16.mxu0 0
    %1396 = vmatpush1.bf16.msra.mxu0 0
    %1397 = vmatprep.subr.bf16.mxu0 0
    %1398 = vmatpush1.bf16.msra.mxu0 0
    %1399 = vmatprep.subr.bf16.mxu0 0
    %1400 = vmatpush1.bf16.msra.mxu0 0
    %1401 = vmatprep.subr.bf16.mxu0 0
    %1402 = vmatpush1.bf16.msra.mxu0 0
    %1403 = vmatprep.subr.bf16.mxu0 0
    %1404 = vmatpush1.bf16.msra.mxu0 0
    %1405 = vmatprep.subr.bf16.mxu0 0
    %1406 = vmatpush1.bf16.msra.mxu0 0
    %1407 = vmatprep.subr.bf16.mxu0 0
    %1408 = vmatpush1.bf16.msra.mxu0 0
    %1409 = vmatprep.subr.bf16.mxu0 0
    %1410 = vmatpush1.bf16.msra.mxu0 0
    %1411 = vmatprep.subr.bf16.mxu0 0
    %1412 = vmatpush1.bf16.msra.mxu0 0
    %1413 = vmatprep.mubr.bf16.mxu0 0
    %1414 = vmatmul.mubr.bf16.gmra.mrb[0].mxu0 %v396
    %v1415 = vpop.f32.mrb[0].mxu0
    %v1416 = vadd.f32 0.0, %v1415
    %v1417 = vpop.f32.mrb[0].mxu0
    %v1418 = vadd.f32 0.0, %v1417
    %v1419 = vpop.f32.mrb[0].mxu0
    %v1420 = vadd.f32 0.0, %v1419
    %v1421 = vpop.f32.mrb[0].mxu0
    %v1422 = vadd.f32 0.0, %v1421
    %1423 = vdwg.mxu0
    %v1424 = vadd.f32 %v1418, 1e-16
    %v1425 = vadd.f32 %v1422, 1e-16
    %v1426 = vrcp.pop %v1424
    %v1427 = vmul.f32 %v1416, %v1426
    %v1428 = vrcp.pop %v1425
    %v1429 = vmul.f32 %v1420, %v1428
    %v1430 = vadd.f32 %v1427, %v1351
    %v1431 = vadd.f32 %v1429, %v1355
    %v1432 = vpack.c.bf16 %v1431, %v1430
    %v1433 = vld [vmem:[%s39] sm:$0xf]
    %v1434 = vld [vmem:[%s39 + $0x4] sm:$0xf]
    %v1435 = vld [vmem:[%s39 + $0x8] sm:$0xf]
    %v1436 = vld [vmem:[%s39 + $0xc] sm:$0xf]
    %v1437 = vld [vmem:[%s39 + $0x10] sm:$0xf]
    %v1438 = vld [vmem:[%s39 + $0x14] sm:$0xf]
    %v1439 = vld [vmem:[%s39 + $0x18] sm:$0xf]
    %v1440 = vld [vmem:[%s39 + $0x1c] sm:$0xf]
    %v1441 = vld [vmem:[%s39 + $0x20] sm:$0xf]
    %v1442 = vld [vmem:[%s39 + $0x24] sm:$0xf]
    %v1443 = vld [vmem:[%s39 + $0x28] sm:$0xf]
    %v1444 = vld [vmem:[%s39 + $0x2c] sm:$0xf]
    %v1445 = vld [vmem:[%s39 + $0x30] sm:$0xf]
    %v1446 = vld [vmem:[%s39 + $0x34] sm:$0xf]
    %v1447 = vld [vmem:[%s39 + $0x38] sm:$0xf]
    %v1448 = vld [vmem:[%s39 + $0x3c] sm:$0xf]
    %v1465 = vunpack.c.l.b16 %v1433
    %v1466 = vunpack.c.l.b16 %v1434
    %v1467 = vunpack.c.l.b16 %v1435
    %v1468 = vunpack.c.l.b16 %v1436
    %v1469 = vunpack.c.l.b16 %v1437
    %v1470 = vunpack.c.l.b16 %v1438
    %v1471 = vunpack.c.l.b16 %v1439
    %v1472 = vunpack.c.l.b16 %v1440
    %v1473 = vunpack.c.l.b16 %v1441
    %v1474 = vunpack.c.l.b16 %v1442
    %v1475 = vunpack.c.l.b16 %v1443
    %v1476 = vunpack.c.l.b16 %v1444
    %v1477 = vunpack.c.l.b16 %v1445
    %v1478 = vunpack.c.l.b16 %v1446
    %v1479 = vunpack.c.l.b16 %v1447
    %v1480 = vunpack.c.l.b16 %v1448
    %v1481 = vpack.c.b16 %v1466, %v1465
    %v1482 = vpack.c.b16 %v1468, %v1467
    %v1483 = vpack.c.b16 %v1470, %v1469
    %v1484 = vpack.c.b16 %v1472, %v1471
    %v1485 = vpack.c.b16 %v1474, %v1473
    %v1486 = vpack.c.b16 %v1476, %v1475
    %v1487 = vpack.c.b16 %v1478, %v1477
    %v1488 = vpack.c.b16 %v1480, %v1479
    %1497 = vmatprep.subr.bf16.mxu0 0
    %1498 = vmatpush1.bf16.msra.mxu0 %v1481
    %1499 = vmatprep.subr.bf16.mxu0 0
    %1500 = vmatpush1.bf16.msra.mxu0 %v1482
    %1501 = vmatprep.subr.bf16.mxu0 0
    %1502 = vmatpush1.bf16.msra.mxu0 %v1483
    %1503 = vmatprep.subr.bf16.mxu0 0
    %1504 = vmatpush1.bf16.msra.mxu0 %v1484
    %1505 = vmatprep.subr.bf16.mxu0 0
    %1506 = vmatpush1.bf16.msra.mxu0 %v1485
    %1507 = vmatprep.subr.bf16.mxu0 0
    %1508 = vmatpush1.bf16.msra.mxu0 %v1486
    %1509 = vmatprep.subr.bf16.mxu0 0
    %1510 = vmatpush1.bf16.msra.mxu0 %v1487
    %1511 = vmatprep.subr.bf16.mxu0 0
    %1512 = vmatpush1.bf16.msra.mxu0 %v1488
    %1513 = vmatprep.subr.bf16.mxu0 0
    %1514 = vmatpush1.bf16.msra.mxu0 0
    %1515 = vmatprep.subr.bf16.mxu0 0
    %1516 = vmatpush1.bf16.msra.mxu0 0
    %1517 = vmatprep.subr.bf16.mxu0 0
    %1518 = vmatpush1.bf16.msra.mxu0 0
    %1519 = vmatprep.subr.bf16.mxu0 0
    %1520 = vmatpush1.bf16.msra.mxu0 0
    %1521 = vmatprep.subr.bf16.mxu0 0
    %1522 = vmatpush1.bf16.msra.mxu0 0
    %1523 = vmatprep.subr.bf16.mxu0 0
    %1524 = vmatpush1.bf16.msra.mxu0 0
    %1525 = vmatprep.subr.bf16.mxu0 0
    %1526 = vmatpush1.bf16.msra.mxu0 0
    %1527 = vmatprep.subr.bf16.mxu0 0
    %1528 = vmatpush1.bf16.msra.mxu0 0
    %1529 = vmatprep.mubr.bf16.mxu0 0
    %1530 = vmatmul.mubr.bf16.gmra.mrb[0].mxu0 %v1432
    %v1531 = vpop.f32.mrb[0].mxu0
    %v1532 = vadd.f32 0.0, %v1531
    %v1533 = vpop.f32.mrb[0].mxu0
    %v1534 = vpop.f32.mrb[0].mxu0
    %v1535 = vadd.f32 0.0, %v1534
    %v1536 = vpop.f32.mrb[0].mxu0
    %1537 = vdwg.mxu0
    %v1538 = vmul.f32 %v1532, %v1532
    %v1539 = vmul.f32 %v1535, %v1535
    %v1540 = vadd.f32 %v1532, %v1535
    %v1541 = vrot.slane %v1540, 4
    %v1542 = vadd.f32 %v1540, %v1541
    %v1543 = vrot.slane %v1542, 2
    %v1544 = vadd.f32 %v1542, %v1543
    %v1545 = vrot.slane %v1544, 1
    %v1546 = vadd.f32 %v1544, %v1545
    %v1547 = vadd.f32 %v1538, %v1539
    %v1548 = vrot.slane %v1547, 4
    %v1549 = vadd.f32 %v1547, %v1548
    %v1550 = vrot.slane %v1549, 2
    %v1551 = vadd.f32 %v1549, %v1550
    %v1552 = vrot.slane %v1551, 1
    %v1553 = vadd.f32 %v1551, %v1552
    %v1554 = vmul.f32 %v1546, %v571
    %v1555 = vmul.f32 %v1553, %v571
    %v1556 = vmul.f32 %v1554, %v1554
    %v1557 = vsub.f32 %v1555, %v1556
    %v1558 = vmax.f32 %v1557, 0.0
    %v1559 = vsub.f32 %v1532, %v1554
    %v1560 = vsub.f32 %v1535, %v1554
    %v1561 = vadd.f32 %v1558, 1e-05
    %v1562 = vrsqrt.pop %v1561
    %v1563 = vmul.f32 %v1559, %v1562
    %v1564 = vmul.f32 %v1560, %v1562
    %v1565 = vld [vmem:[%s41] sm:$0x1]
    %v1567 = vlaneseq
    %v1568 = vshrl.u32 %v1567, 7
    %v1569 = vsub.s32 0, %v1568
    %v1570 = vrot.slane %v1565, %v1569
    %v1572 = vmul.f32 %v1563, %v1570
    %v1573 = vmul.f32 %v1564, %v1570
    %v1574 = vld [vmem:[%s43] sm:$0x1]
    %v1576 = vlaneseq
    %v1577 = vshrl.u32 %v1576, 7
    %v1578 = vsub.s32 0, %v1577
    %v1579 = vrot.slane %v1574, %v1578
    %v1581 = vadd.f32 %v1572, %v1579
    %v1582 = vadd.f32 %v1573, %v1579
    %v1583 = vmax.f32 %v1581, 0.0
    %v1584 = vmax.f32 %v1582, 0.0
    %v1585 = vpack.c.bf16 %v1584, %v1583
    %v1586 = vld [vmem:[%s45] sm:$0xf]
    %v1587 = vld [vmem:[%s45 + $0x4] sm:$0xf]
    %v1588 = vld [vmem:[%s45 + $0x8] sm:$0xf]
    %v1589 = vld [vmem:[%s45 + $0xc] sm:$0xf]
    %v1590 = vld [vmem:[%s45 + $0x10] sm:$0xf]
    %v1591 = vld [vmem:[%s45 + $0x14] sm:$0xf]
    %v1592 = vld [vmem:[%s45 + $0x18] sm:$0xf]
    %v1593 = vld [vmem:[%s45 + $0x1c] sm:$0xf]
    %v1594 = vld [vmem:[%s45 + $0x20] sm:$0xf]
    %v1595 = vld [vmem:[%s45 + $0x24] sm:$0xf]
    %v1596 = vld [vmem:[%s45 + $0x28] sm:$0xf]
    %v1597 = vld [vmem:[%s45 + $0x2c] sm:$0xf]
    %v1598 = vld [vmem:[%s45 + $0x30] sm:$0xf]
    %v1599 = vld [vmem:[%s45 + $0x34] sm:$0xf]
    %v1600 = vld [vmem:[%s45 + $0x38] sm:$0xf]
    %v1601 = vld [vmem:[%s45 + $0x3c] sm:$0xf]
    %v1602 = vld [vmem:[%s47] sm:$0x1]
    %v1604 = vlaneseq
    %v1605 = vshrl.u32 %v1604, 7
    %v1606 = vsub.s32 0, %v1605
    %v1607 = vrot.slane %v1602, %v1606
    %v1625 = vunpack.c.l.b16 %v1586
    %v1626 = vunpack.c.l.b16 %v1587
    %v1627 = vunpack.c.l.b16 %v1588
    %v1628 = vunpack.c.l.b16 %v1589
    %v1629 = vunpack.c.l.b16 %v1590
    %v1630 = vunpack.c.l.b16 %v1591
    %v1631 = vunpack.c.l.b16 %v1592
    %v1632 = vunpack.c.l.b16 %v1593
    %v1633 = vunpack.c.l.b16 %v1594
    %v1634 = vunpack.c.l.b16 %v1595
    %v1635 = vunpack.c.l.b16 %v1596
    %v1636 = vunpack.c.l.b16 %v1597
    %v1637 = vunpack.c.l.b16 %v1598
    %v1638 = vunpack.c.l.b16 %v1599
    %v1639 = vunpack.c.l.b16 %v1600
    %v1640 = vunpack.c.l.b16 %v1601
    %v1641 = vpack.c.b16 %v1626, %v1625
    %v1642 = vpack.c.b16 %v1628, %v1627
    %v1643 = vpack.c.b16 %v1630, %v1629
    %v1644 = vpack.c.b16 %v1632, %v1631
    %v1645 = vpack.c.b16 %v1634, %v1633
    %v1646 = vpack.c.b16 %v1636, %v1635
    %v1647 = vpack.c.b16 %v1638, %v1637
    %v1648 = vpack.c.b16 %v1640, %v1639
    %1657 = vmatprep.subr.bf16.mxu0 0
    %1658 = vmatpush1.bf16.msra.mxu0 %v1641
    %1659 = vmatprep.subr.bf16.mxu0 0
    %1660 = vmatpush1.bf16.msra.mxu0 %v1642
    %1661 = vmatprep.subr.bf16.mxu0 0
    %1662 = vmatpush1.bf16.msra.mxu0 %v1643
    %1663 = vmatprep.subr.bf16.mxu0 0
    %1664 = vmatpush1.bf16.msra.mxu0 %v1644
    %1665 = vmatprep.subr.bf16.mxu0 0
    %1666 = vmatpush1.bf16.msra.mxu0 %v1645
    %1667 = vmatprep.subr.bf16.mxu0 0
    %1668 = vmatpush1.bf16.msra.mxu0 %v1646
    %1669 = vmatprep.subr.bf16.mxu0 0
    %1670 = vmatpush1.bf16.msra.mxu0 %v1647
    %1671 = vmatprep.subr.bf16.mxu0 0
    %1672 = vmatpush1.bf16.msra.mxu0 %v1648
    %1673 = vmatprep.subr.bf16.mxu0 0
    %1674 = vmatpush1.bf16.msra.mxu0 0
    %1675 = vmatprep.subr.bf16.mxu0 0
    %1676 = vmatpush1.bf16.msra.mxu0 0
    %1677 = vmatprep.subr.bf16.mxu0 0
    %1678 = vmatpush1.bf16.msra.mxu0 0
    %1679 = vmatprep.subr.bf16.mxu0 0
    %1680 = vmatpush1.bf16.msra.mxu0 0
    %1681 = vmatprep.subr.bf16.mxu0 0
    %1682 = vmatpush1.bf16.msra.mxu0 0
    %1683 = vmatprep.subr.bf16.mxu0 0
    %1684 = vmatpush1.bf16.msra.mxu0 0
    %1685 = vmatprep.subr.bf16.mxu0 0
    %1686 = vmatpush1.bf16.msra.mxu0 0
    %1687 = vmatprep.subr.bf16.mxu0 0
    %1688 = vmatpush1.bf16.msra.mxu0 0
    %1689 = vmatprep.mubr.bf16.mxu0 0
    %1690 = vmatmul.mubr.bf16.gmra.mrb[0].mxu0 %v1585
    %v1691 = vpop.f32.mrb[0].mxu0
    %v1692 = vadd.f32 %v1607, %v1691
    %v1693 = vpop.f32.mrb[0].mxu0
    %v1694 = vpop.f32.mrb[0].mxu0
    %v1695 = vadd.f32 %v1607, %v1694
    %v1696 = vpop.f32.mrb[0].mxu0
    %1697 = vdwg.mxu0
    %s1698 = scalar_lea.vmem %s5, 32
    %v1699 = vld [vmem:[%s1698] sm:$0xff]
    %v1700 = vld [vmem:[%s1698 + $0x8] sm:$0xff]
    %v1701 = vadd.f32 %v1692, %v1699
    %v1702 = vadd.f32 %v1695, %v1700
    %s1703 = scalar_lea.vmem %s7, 32
    %v1704 = vld [vmem:[%s1703] sm:$0xff]
    %v1705 = vld [vmem:[%s1703 + $0x8] sm:$0xff]
    %v1706 = vmul.f32 %v1701, %v1704
    %v1707 = vmul.f32 %v1702, %v1705
    %s1708 = sld [smem:[#allocation2 + $0x3]]
    %v1709 = vpack.c.bf16 %v1707, %v1706
    %v1710 = vld [vmem:[%s49] sm:$0xff]
    %v1711 = vld [vmem:[%s49 + $0x8] sm:$0xff]
    %v1712 = vld [vmem:[%s49 + $0x10] sm:$0xff]
    %v1713 = vld [vmem:[%s49 + $0x18] sm:$0xff]
    %v1714 = vld [vmem:[%s49 + $0x20] sm:$0xff]
    %v1715 = vld [vmem:[%s49 + $0x28] sm:$0xff]
    %v1716 = vld [vmem:[%s49 + $0x30] sm:$0xff]
    %v1717 = vld [vmem:[%s49 + $0x38] sm:$0xff]
    %v1718 = vld [vmem:[%s49 + $0x40] sm:$0xff]
    %v1719 = vld [vmem:[%s49 + $0x48] sm:$0xff]
    %v1720 = vld [vmem:[%s49 + $0x50] sm:$0xff]
    %v1721 = vld [vmem:[%s49 + $0x58] sm:$0xff]
    %v1722 = vld [vmem:[%s49 + $0x60] sm:$0xff]
    %v1723 = vld [vmem:[%s49 + $0x68] sm:$0xff]
    %v1724 = vld [vmem:[%s49 + $0x70] sm:$0xff]
    %v1725 = vld [vmem:[%s49 + $0x78] sm:$0xff]
    %v1742 = vunpack.c.l.b16 %v1710
    %v1743 = vunpack.c.h.b16 %v1710
    %v1744 = vunpack.c.l.b16 %v1711
    %v1745 = vunpack.c.h.b16 %v1711
    %v1746 = vunpack.c.l.b16 %v1712
    %v1747 = vunpack.c.h.b16 %v1712
    %v1748 = vunpack.c.l.b16 %v1713
    %v1749 = vunpack.c.h.b16 %v1713
    %v1750 = vunpack.c.l.b16 %v1714
    %v1751 = vunpack.c.h.b16 %v1714
    %v1752 = vunpack.c.l.b16 %v1715
    %v1753 = vunpack.c.h.b16 %v1715
    %v1754 = vunpack.c.l.b16 %v1716
    %v1755 = vunpack.c.h.b16 %v1716
    %v1756 = vunpack.c.l.b16 %v1717
    %v1757 = vunpack.c.h.b16 %v1717
    %v1758 = vunpack.c.l.b16 %v1718
    %v1759 = vunpack.c.h.b16 %v1718
    %v1760 = vunpack.c.l.b16 %v1719
    %v1761 = vunpack.c.h.b16 %v1719
    %v1762 = vunpack.c.l.b16 %v1720
    %v1763 = vunpack.c.h.b16 %v1720
    %v1764 = vunpack.c.l.b16 %v1721
    %v1765 = vunpack.c.h.b16 %v1721
    %v1766 = vunpack.c.l.b16 %v1722
    %v1767 = vunpack.c.h.b16 %v1722
    %v1768 = vunpack.c.l.b16 %v1723
    %v1769 = vunpack.c.h.b16 %v1723
    %v1770 = vunpack.c.l.b16 %v1724
    %v1771 = vunpack.c.h.b16 %v1724
    %v1772 = vunpack.c.l.b16 %v1725
    %v1773 = vunpack.c.h.b16 %v1725
    %v1774 = vpack.c.b16 %v1744, %v1742
    %v1775 = vpack.c.b16 %v1745, %v1743
    %v1776 = vpack.c.b16 %v1748, %v1746
    %v1777 = vpack.c.b16 %v1749, %v1747
    %v1778 = vpack.c.b16 %v1752, %v1750
    %v1779 = vpack.c.b16 %v1753, %v1751
    %v1780 = vpack.c.b16 %v1756, %v1754
    %v1781 = vpack.c.b16 %v1757, %v1755
    %v1782 = vpack.c.b16 %v1760, %v1758
    %v1783 = vpack.c.b16 %v1761, %v1759
    %v1784 = vpack.c.b16 %v1764, %v1762
    %v1785 = vpack.c.b16 %v1765, %v1763
    %v1786 = vpack.c.b16 %v1768, %v1766
    %v1787 = vpack.c.b16 %v1769, %v1767
    %v1788 = vpack.c.b16 %v1772, %v1770
    %v1789 = vpack.c.b16 %v1773, %v1771
    %1806 = vmatprep.subr.bf16.mxu0 %v1775
    %1807 = vmatpush1.bf16.msra.mxu0 %v1774
    %1808 = vmatprep.subr.bf16.mxu0 %v1777
    %1809 = vmatpush1.bf16.msra.mxu0 %v1776
    %1810 = vmatprep.subr.bf16.mxu0 %v1779
    %1811 = vmatpush1.bf16.msra.mxu0 %v1778
    %1812 = vmatprep.subr.bf16.mxu0 %v1781
    %1813 = vmatpush1.bf16.msra.mxu0 %v1780
    %1814 = vmatprep.subr.bf16.mxu0 %v1783
    %1815 = vmatpush1.bf16.msra.mxu0 %v1782
    %1816 = vmatprep.subr.bf16.mxu0 %v1785
    %1817 = vmatpush1.bf16.msra.mxu0 %v1784
    %1818 = vmatprep.subr.bf16.mxu0 %v1787
    %1819 = vmatpush1.bf16.msra.mxu0 %v1786
    %1820 = vmatprep.subr.bf16.mxu0 %v1789
    %1821 = vmatpush1.bf16.msra.mxu0 %v1788
    %1822 = vmatprep.subr.bf16.mxu0 0
    %1823 = vmatpush1.bf16.msra.mxu0 0
    %1824 = vmatprep.subr.bf16.mxu0 0
    %1825 = vmatpush1.bf16.msra.mxu0 0
    %1826 = vmatprep.subr.bf16.mxu0 0
    %1827 = vmatpush1.bf16.msra.mxu0 0
    %1828 = vmatprep.subr.bf16.mxu0 0
    %1829 = vmatpush1.bf16.msra.mxu0 0
    %1830 = vmatprep.subr.bf16.mxu0 0
    %1831 = vmatpush1.bf16.msra.mxu0 0
    %1832 = vmatprep.subr.bf16.mxu0 0
    %1833 = vmatpush1.bf16.msra.mxu0 0
    %1834 = vmatprep.subr.bf16.mxu0 0
    %1835 = vmatpush1.bf16.msra.mxu0 0
    %1836 = vmatprep.subr.bf16.mxu0 0
    %1837 = vmatpush1.bf16.msra.mxu0 0
    %1838 = vmatprep.mubr.bf16.mxu0 0
    %1839 = vmatmul.mubr.bf16.gmra.mrb[0].mxu0 %v1709
    %v1840 = vpop.f32.mrb[0].mxu0
    %v1841 = vadd.f32 0.0, %v1840
    %v1842 = vpop.f32.mrb[0].mxu0
    %v1843 = vadd.f32 0.0, %v1842
    %v1844 = vpop.f32.mrb[0].mxu0
    %v1845 = vadd.f32 0.0, %v1844
    %v1846 = vpop.f32.mrb[0].mxu0
    %v1847 = vadd.f32 0.0, %v1846
    %1848 = vdwg.mxu0
    %v1849 = vmax.f32 %v1841, 0.0
    %v1850 = vmax.f32 %v1845, 0.0
    %v1851 = vadd.f32 %v1849, 1e-07
    %v1852 = vadd.f32 %v1850, 1e-07
    %v1853 = vstv %s1708
    %v1854 = vmul.f32 %v1851, %v1853
    %v1855 = vmul.f32 %v1852, %v1853
    %v1856 = vmax.f32 %v1854, %v1855
    %v1857 = vrot.slane %v1856, 4
    %v1858 = vmax.f32 %v1856, %v1857
    %v1859 = vrot.slane %v1858, 2
    %v1860 = vmax.f32 %v1858, %v1859
    %v1861 = vrot.slane %v1860, 1
    %v1862 = vmax.f32 %v1860, %v1861
    %v1863 = vsub.f32 %v1854, %v1862
    %v1864 = vsub.f32 %v1855, %v1862
    %v1865 = vmul.f32 %v1863, 1.442695
    %v1866 = vpow.pop %v1865
    %v1867 = vmul.f32 %v1864, 1.442695
    %v1868 = vpow.pop %v1867
    %v1869 = vmul.f32 %v1866, %v1851
    %v1870 = vmul.f32 %v1868, %v1852
    %v1871 = vpack.c.bf16 %v1870, %v1869
    %v1872 = vpack.c.bf16 %v1868, %v1866
    %1873 = vmatprep.subr.bf16.mxu0 %v1872
    %1874 = vmatpush1.bf16.msra.mxu0 %v1871
    %1875 = vmatprep.subr.bf16.mxu0 0
    %1876 = vmatpush1.bf16.msra.mxu0 0
    %1877 = vmatprep.subr.bf16.mxu0 0
    %1878 = vmatpush1.bf16.msra.mxu0 0
    %1879 = vmatprep.subr.bf16.mxu0 0
    %1880 = vmatpush1.bf16.msra.mxu0 0
    %1881 = vmatprep.subr.bf16.mxu0 0
    %1882 = vmatpush1.bf16.msra.mxu0 0
    %1883 = vmatprep.subr.bf16.mxu0 0
    %1884 = vmatpush1.bf16.msra.mxu0 0
    %1885 = vmatprep.subr.bf16.mxu0 0
    %1886 = vmatpush1.bf16.msra.mxu0 0
    %1887 = vmatprep.subr.bf16.mxu0 0
    %1888 = vmatpush1.bf16.msra.mxu0 0
    %1889 = vmatprep.subr.bf16.mxu0 0
    %1890 = vmatpush1.bf16.msra.mxu0 0
    %1891 = vmatprep.subr.bf16.mxu0 0
    %1892 = vmatpush1.bf16.msra.mxu0 0
    %1893 = vmatprep.subr.bf16.mxu0 0
    %1894 = vmatpush1.bf16.msra.mxu0 0
    %1895 = vmatprep.subr.bf16.mxu0 0
    %1896 = vmatpush1.bf16.msra.mxu0 0
    %1897 = vmatprep.subr.bf16.mxu0 0
    %1898 = vmatpush1.bf16.msra.mxu0 0
    %1899 = vmatprep.subr.bf16.mxu0 0
    %1900 = vmatpush1.bf16.msra.mxu0 0
    %1901 = vmatprep.subr.bf16.mxu0 0
    %1902 = vmatpush1.bf16.msra.mxu0 0
    %1903 = vmatprep.subr.bf16.mxu0 0
    %1904 = vmatpush1.bf16.msra.mxu0 0
    %1905 = vmatprep.mubr.bf16.mxu0 0
    %1906 = vmatmul.mubr.bf16.gmra.mrb[0].mxu0 %v396
    %v1907 = vpop.f32.mrb[0].mxu0
    %v1908 = vadd.f32 0.0, %v1907
    %v1909 = vpop.f32.mrb[0].mxu0
    %v1910 = vadd.f32 0.0, %v1909
    %v1911 = vpop.f32.mrb[0].mxu0
    %v1912 = vadd.f32 0.0, %v1911
    %v1913 = vpop.f32.mrb[0].mxu0
    %v1914 = vadd.f32 0.0, %v1913
    %1915 = vdwg.mxu0
    %v1916 = vadd.f32 %v1910, 1e-16
    %v1917 = vadd.f32 %v1914, 1e-16
    %v1918 = vrcp.pop %v1916
    %v1919 = vmul.f32 %v1908, %v1918
    %v1920 = vrcp.pop %v1917
    %v1921 = vmul.f32 %v1912, %v1920
    %v1922 = vadd.f32 %v1919, %v1843
    %v1923 = vadd.f32 %v1921, %v1847
    %v1924 = vpack.c.bf16 %v1923, %v1922
    %v1925 = vld [vmem:[%s51] sm:$0xf]
    %v1926 = vld [vmem:[%s51 + $0x4] sm:$0xf]
    %v1927 = vld [vmem:[%s51 + $0x8] sm:$0xf]
    %v1928 = vld [vmem:[%s51 + $0xc] sm:$0xf]
    %v1929 = vld [vmem:[%s51 + $0x10] sm:$0xf]
    %v1930 = vld [vmem:[%s51 + $0x14] sm:$0xf]
    %v1931 = vld [vmem:[%s51 + $0x18] sm:$0xf]
    %v1932 = vld [vmem:[%s51 + $0x1c] sm:$0xf]
    %v1933 = vld [vmem:[%s51 + $0x20] sm:$0xf]
    %v1934 = vld [vmem:[%s51 + $0x24] sm:$0xf]
    %v1935 = vld [vmem:[%s51 + $0x28] sm:$0xf]
    %v1936 = vld [vmem:[%s51 + $0x2c] sm:$0xf]
    %v1937 = vld [vmem:[%s51 + $0x30] sm:$0xf]
    %v1938 = vld [vmem:[%s51 + $0x34] sm:$0xf]
    %v1939 = vld [vmem:[%s51 + $0x38] sm:$0xf]
    %v1940 = vld [vmem:[%s51 + $0x3c] sm:$0xf]
    %v1957 = vunpack.c.l.b16 %v1925
    %v1958 = vunpack.c.l.b16 %v1926
    %v1959 = vunpack.c.l.b16 %v1927
    %v1960 = vunpack.c.l.b16 %v1928
    %v1961 = vunpack.c.l.b16 %v1929
    %v1962 = vunpack.c.l.b16 %v1930
    %v1963 = vunpack.c.l.b16 %v1931
    %v1964 = vunpack.c.l.b16 %v1932
    %v1965 = vunpack.c.l.b16 %v1933
    %v1966 = vunpack.c.l.b16 %v1934
    %v1967 = vunpack.c.l.b16 %v1935
    %v1968 = vunpack.c.l.b16 %v1936
    %v1969 = vunpack.c.l.b16 %v1937
    %v1970 = vunpack.c.l.b16 %v1938
    %v1971 = vunpack.c.l.b16 %v1939
    %v1972 = vunpack.c.l.b16 %v1940
    %v1973 = vpack.c.b16 %v1958, %v1957
    %v1974 = vpack.c.b16 %v1960, %v1959
    %v1975 = vpack.c.b16 %v1962, %v1961
    %v1976 = vpack.c.b16 %v1964, %v1963
    %v1977 = vpack.c.b16 %v1966, %v1965
    %v1978 = vpack.c.b16 %v1968, %v1967
    %v1979 = vpack.c.b16 %v1970, %v1969
    %v1980 = vpack.c.b16 %v1972, %v1971
    %1989 = vmatprep.subr.bf16.mxu0 0
    %1990 = vmatpush1.bf16.msra.mxu0 %v1973
    %1991 = vmatprep.subr.bf16.mxu0 0
    %1992 = vmatpush1.bf16.msra.mxu0 %v1974
    %1993 = vmatprep.subr.bf16.mxu0 0
    %1994 = vmatpush1.bf16.msra.mxu0 %v1975
    %1995 = vmatprep.subr.bf16.mxu0 0
    %1996 = vmatpush1.bf16.msra.mxu0 %v1976
    %1997 = vmatprep.subr.bf16.mxu0 0
    %1998 = vmatpush1.bf16.msra.mxu0 %v1977
    %1999 = vmatprep.subr.bf16.mxu0 0
    %2000 = vmatpush1.bf16.msra.mxu0 %v1978
    %2001 = vmatprep.subr.bf16.mxu0 0
    %2002 = vmatpush1.bf16.msra.mxu0 %v1979
    %2003 = vmatprep.subr.bf16.mxu0 0
    %2004 = vmatpush1.bf16.msra.mxu0 %v1980
    %2005 = vmatprep.subr.bf16.mxu0 0
    %2006 = vmatpush1.bf16.msra.mxu0 0
    %2007 = vmatprep.subr.bf16.mxu0 0
    %2008 = vmatpush1.bf16.msra.mxu0 0
    %2009 = vmatprep.subr.bf16.mxu0 0
    %2010 = vmatpush1.bf16.msra.mxu0 0
    %2011 = vmatprep.subr.bf16.mxu0 0
    %2012 = vmatpush1.bf16.msra.mxu0 0
    %2013 = vmatprep.subr.bf16.mxu0 0
    %2014 = vmatpush1.bf16.msra.mxu0 0
    %2015 = vmatprep.subr.bf16.mxu0 0
    %2016 = vmatpush1.bf16.msra.mxu0 0
    %2017 = vmatprep.subr.bf16.mxu0 0
    %2018 = vmatpush1.bf16.msra.mxu0 0
    %2019 = vmatprep.subr.bf16.mxu0 0
    %2020 = vmatpush1.bf16.msra.mxu0 0
    %2021 = vmatprep.mubr.bf16.mxu0 0
    %2022 = vmatmul.mubr.bf16.gmra.mrb[0].mxu0 %v1924
    %v2023 = vpop.f32.mrb[0].mxu0
    %v2024 = vadd.f32 0.0, %v2023
    %v2025 = vpop.f32.mrb[0].mxu0
    %v2026 = vpop.f32.mrb[0].mxu0
    %v2027 = vadd.f32 0.0, %v2026
    %v2028 = vpop.f32.mrb[0].mxu0
    %2029 = vdwg.mxu0
    %v2030 = vmul.f32 %v2024, %v2024
    %v2031 = vmul.f32 %v2027, %v2027
    %v2032 = vadd.f32 %v2024, %v2027
    %v2033 = vrot.slane %v2032, 4
    %v2034 = vadd.f32 %v2032, %v2033
    %v2035 = vrot.slane %v2034, 2
    %v2036 = vadd.f32 %v2034, %v2035
    %v2037 = vrot.slane %v2036, 1
    %v2038 = vadd.f32 %v2036, %v2037
    %v2039 = vadd.f32 %v2030, %v2031
    %v2040 = vrot.slane %v2039, 4
    %v2041 = vadd.f32 %v2039, %v2040
    %v2042 = vrot.slane %v2041, 2
    %v2043 = vadd.f32 %v2041, %v2042
    %v2044 = vrot.slane %v2043, 1
    %v2045 = vadd.f32 %v2043, %v2044
    %v2046 = vmul.f32 %v2038, %v571
    %v2047 = vmul.f32 %v2045, %v571
    %v2048 = vmul.f32 %v2046, %v2046
    %v2049 = vsub.f32 %v2047, %v2048
    %v2050 = vmax.f32 %v2049, 0.0
    %v2051 = vsub.f32 %v2024, %v2046
    %v2052 = vsub.f32 %v2027, %v2046
    %v2053 = vadd.f32 %v2050, 1e-05
    %v2054 = vrsqrt.pop %v2053
    %v2055 = vmul.f32 %v2051, %v2054
    %v2056 = vmul.f32 %v2052, %v2054
    %v2057 = vld [vmem:[%s53] sm:$0x1]
    %v2059 = vlaneseq
    %v2060 = vshrl.u32 %v2059, 7
    %v2061 = vsub.s32 0, %v2060
    %v2062 = vrot.slane %v2057, %v2061
    %v2064 = vmul.f32 %v2055, %v2062
    %v2065 = vmul.f32 %v2056, %v2062
    %v2066 = vld [vmem:[%s55] sm:$0x1]
    %v2068 = vlaneseq
    %v2069 = vshrl.u32 %v2068, 7
    %v2070 = vsub.s32 0, %v2069
    %v2071 = vrot.slane %v2066, %v2070
    %v2073 = vadd.f32 %v2064, %v2071
    %v2074 = vadd.f32 %v2065, %v2071
    %v2075 = vmax.f32 %v2073, 0.0
    %v2076 = vmax.f32 %v2074, 0.0
    %v2077 = vpack.c.bf16 %v2076, %v2075
    %v2078 = vld [vmem:[%s57] sm:$0xf]
    %v2079 = vld [vmem:[%s57 + $0x4] sm:$0xf]
    %v2080 = vld [vmem:[%s57 + $0x8] sm:$0xf]
    %v2081 = vld [vmem:[%s57 + $0xc] sm:$0xf]
    %v2082 = vld [vmem:[%s57 + $0x10] sm:$0xf]
    %v2083 = vld [vmem:[%s57 + $0x14] sm:$0xf]
    %v2084 = vld [vmem:[%s57 + $0x18] sm:$0xf]
    %v2085 = vld [vmem:[%s57 + $0x1c] sm:$0xf]
    %v2086 = vld [vmem:[%s57 + $0x20] sm:$0xf]
    %v2087 = vld [vmem:[%s57 + $0x24] sm:$0xf]
    %v2088 = vld [vmem:[%s57 + $0x28] sm:$0xf]
    %v2089 = vld [vmem:[%s57 + $0x2c] sm:$0xf]
    %v2090 = vld [vmem:[%s57 + $0x30] sm:$0xf]
    %v2091 = vld [vmem:[%s57 + $0x34] sm:$0xf]
    %v2092 = vld [vmem:[%s57 + $0x38] sm:$0xf]
    %v2093 = vld [vmem:[%s57 + $0x3c] sm:$0xf]
    %v2094 = vld [vmem:[%s59] sm:$0x1]
    %v2096 = vlaneseq
    %v2097 = vshrl.u32 %v2096, 7
    %v2098 = vsub.s32 0, %v2097
    %v2099 = vrot.slane %v2094, %v2098
    %v2117 = vunpack.c.l.b16 %v2078
    %v2118 = vunpack.c.l.b16 %v2079
    %v2119 = vunpack.c.l.b16 %v2080
    %v2120 = vunpack.c.l.b16 %v2081
    %v2121 = vunpack.c.l.b16 %v2082
    %v2122 = vunpack.c.l.b16 %v2083
    %v2123 = vunpack.c.l.b16 %v2084
    %v2124 = vunpack.c.l.b16 %v2085
    %v2125 = vunpack.c.l.b16 %v2086
    %v2126 = vunpack.c.l.b16 %v2087
    %v2127 = vunpack.c.l.b16 %v2088
    %v2128 = vunpack.c.l.b16 %v2089
    %v2129 = vunpack.c.l.b16 %v2090
    %v2130 = vunpack.c.l.b16 %v2091
    %v2131 = vunpack.c.l.b16 %v2092
    %v2132 = vunpack.c.l.b16 %v2093
    %v2133 = vpack.c.b16 %v2118, %v2117
    %v2134 = vpack.c.b16 %v2120, %v2119
    %v2135 = vpack.c.b16 %v2122, %v2121
    %v2136 = vpack.c.b16 %v2124, %v2123
    %v2137 = vpack.c.b16 %v2126, %v2125
    %v2138 = vpack.c.b16 %v2128, %v2127
    %v2139 = vpack.c.b16 %v2130, %v2129
    %v2140 = vpack.c.b16 %v2132, %v2131
    %2149 = vmatprep.subr.bf16.mxu0 0
    %2150 = vmatpush1.bf16.msra.mxu0 %v2133
    %2151 = vmatprep.subr.bf16.mxu0 0
    %2152 = vmatpush1.bf16.msra.mxu0 %v2134
    %2153 = vmatprep.subr.bf16.mxu0 0
    %2154 = vmatpush1.bf16.msra.mxu0 %v2135
    %2155 = vmatprep.subr.bf16.mxu0 0
    %2156 = vmatpush1.bf16.msra.mxu0 %v2136
    %2157 = vmatprep.subr.bf16.mxu0 0
    %2158 = vmatpush1.bf16.msra.mxu0 %v2137
    %2159 = vmatprep.subr.bf16.mxu0 0
    %2160 = vmatpush1.bf16.msra.mxu0 %v2138
    %2161 = vmatprep.subr.bf16.mxu0 0
    %2162 = vmatpush1.bf16.msra.mxu0 %v2139
    %2163 = vmatprep.subr.bf16.mxu0 0
    %2164 = vmatpush1.bf16.msra.mxu0 %v2140
    %2165 = vmatprep.subr.bf16.mxu0 0
    %2166 = vmatpush1.bf16.msra.mxu0 0
    %2167 = vmatprep.subr.bf16.mxu0 0
    %2168 = vmatpush1.bf16.msra.mxu0 0
    %2169 = vmatprep.subr.bf16.mxu0 0
    %2170 = vmatpush1.bf16.msra.mxu0 0
    %2171 = vmatprep.subr.bf16.mxu0 0
    %2172 = vmatpush1.bf16.msra.mxu0 0
    %2173 = vmatprep.subr.bf16.mxu0 0
    %2174 = vmatpush1.bf16.msra.mxu0 0
    %2175 = vmatprep.subr.bf16.mxu0 0
    %2176 = vmatpush1.bf16.msra.mxu0 0
    %2177 = vmatprep.subr.bf16.mxu0 0
    %2178 = vmatpush1.bf16.msra.mxu0 0
    %2179 = vmatprep.subr.bf16.mxu0 0
    %2180 = vmatpush1.bf16.msra.mxu0 0
    %2181 = vmatprep.mubr.bf16.mxu0 0
    %2182 = vmatmul.mubr.bf16.gmra.mrb[0].mxu0 %v2077
    %v2183 = vpop.f32.mrb[0].mxu0
    %v2184 = vadd.f32 %v2099, %v2183
    %v2185 = vpop.f32.mrb[0].mxu0
    %v2186 = vpop.f32.mrb[0].mxu0
    %v2187 = vadd.f32 %v2099, %v2186
    %v2188 = vpop.f32.mrb[0].mxu0
    %2189 = vdwg.mxu0
    %s2190 = scalar_lea.vmem %s5, 48
    %v2191 = vld [vmem:[%s2190] sm:$0xff]
    %v2192 = vld [vmem:[%s2190 + $0x8] sm:$0xff]
    %v2193 = vadd.f32 %v2184, %v2191
    %v2194 = vadd.f32 %v2187, %v2192
    %s2195 = scalar_lea.vmem %s7, 48
    %v2196 = vld [vmem:[%s2195] sm:$0xff]
    %v2197 = vld [vmem:[%s2195 + $0x8] sm:$0xff]
    %v2198 = vmul.f32 %v2193, %v2196
    %v2199 = vmul.f32 %v2194, %v2197
    %s2200 = sld [smem:[#allocation2 + $0x4]]
    %v2201 = vpack.c.bf16 %v2199, %v2198
    %v2202 = vld [vmem:[%s61] sm:$0xff]
    %v2203 = vld [vmem:[%s61 + $0x8] sm:$0xff]
    %v2204 = vld [vmem:[%s61 + $0x10] sm:$0xff]
    %v2205 = vld [vmem:[%s61 + $0x18] sm:$0xff]
    %v2206 = vld [vmem:[%s61 + $0x20] sm:$0xff]
    %v2207 = vld [vmem:[%s61 + $0x28] sm:$0xff]
    %v2208 = vld [vmem:[%s61 + $0x30] sm:$0xff]
    %v2209 = vld [vmem:[%s61 + $0x38] sm:$0xff]
    %v2210 = vld [vmem:[%s61 + $0x40] sm:$0xff]
    %v2211 = vld [vmem:[%s61 + $0x48] sm:$0xff]
    %v2212 = vld [vmem:[%s61 + $0x50] sm:$0xff]
    %v2213 = vld [vmem:[%s61 + $0x58] sm:$0xff]
    %v2214 = vld [vmem:[%s61 + $0x60] sm:$0xff]
    %v2215 = vld [vmem:[%s61 + $0x68] sm:$0xff]
    %v2216 = vld [vmem:[%s61 + $0x70] sm:$0xff]
    %v2217 = vld [vmem:[%s61 + $0x78] sm:$0xff]
    %v2234 = vunpack.c.l.b16 %v2202
    %v2235 = vunpack.c.h.b16 %v2202
    %v2236 = vunpack.c.l.b16 %v2203
    %v2237 = vunpack.c.h.b16 %v2203
    %v2238 = vunpack.c.l.b16 %v2204
    %v2239 = vunpack.c.h.b16 %v2204
    %v2240 = vunpack.c.l.b16 %v2205
    %v2241 = vunpack.c.h.b16 %v2205
    %v2242 = vunpack.c.l.b16 %v2206
    %v2243 = vunpack.c.h.b16 %v2206
    %v2244 = vunpack.c.l.b16 %v2207
    %v2245 = vunpack.c.h.b16 %v2207
    %v2246 = vunpack.c.l.b16 %v2208
    %v2247 = vunpack.c.h.b16 %v2208
    %v2248 = vunpack.c.l.b16 %v2209
    %v2249 = vunpack.c.h.b16 %v2209
    %v2250 = vunpack.c.l.b16 %v2210
    %v2251 = vunpack.c.h.b16 %v2210
    %v2252 = vunpack.c.l.b16 %v2211
    %v2253 = vunpack.c.h.b16 %v2211
    %v2254 = vunpack.c.l.b16 %v2212
    %v2255 = vunpack.c.h.b16 %v2212
    %v2256 = vunpack.c.l.b16 %v2213
    %v2257 = vunpack.c.h.b16 %v2213
    %v2258 = vunpack.c.l.b16 %v2214
    %v2259 = vunpack.c.h.b16 %v2214
    %v2260 = vunpack.c.l.b16 %v2215
    %v2261 = vunpack.c.h.b16 %v2215
    %v2262 = vunpack.c.l.b16 %v2216
    %v2263 = vunpack.c.h.b16 %v2216
    %v2264 = vunpack.c.l.b16 %v2217
    %v2265 = vunpack.c.h.b16 %v2217
    %v2266 = vpack.c.b16 %v2236, %v2234
    %v2267 = vpack.c.b16 %v2237, %v2235
    %v2268 = vpack.c.b16 %v2240, %v2238
    %v2269 = vpack.c.b16 %v2241, %v2239
    %v2270 = vpack.c.b16 %v2244, %v2242
    %v2271 = vpack.c.b16 %v2245, %v2243
    %v2272 = vpack.c.b16 %v2248, %v2246
    %v2273 = vpack.c.b16 %v2249, %v2247
    %v2274 = vpack.c.b16 %v2252, %v2250
    %v2275 = vpack.c.b16 %v2253, %v2251
    %v2276 = vpack.c.b16 %v2256, %v2254
    %v2277 = vpack.c.b16 %v2257, %v2255
    %v2278 = vpack.c.b16 %v2260, %v2258
    %v2279 = vpack.c.b16 %v2261, %v2259
    %v2280 = vpack.c.b16 %v2264, %v2262
    %v2281 = vpack.c.b16 %v2265, %v2263
    %2298 = vmatprep.subr.bf16.mxu0 %v2267
    %2299 = vmatpush1.bf16.msra.mxu0 %v2266
    %2300 = vmatprep.subr.bf16.mxu0 %v2269
    %2301 = vmatpush1.bf16.msra.mxu0 %v2268
    %2302 = vmatprep.subr.bf16.mxu0 %v2271
    %2303 = vmatpush1.bf16.msra.mxu0 %v2270
    %2304 = vmatprep.subr.bf16.mxu0 %v2273
    %2305 = vmatpush1.bf16.msra.mxu0 %v2272
    %2306 = vmatprep.subr.bf16.mxu0 %v2275
    %2307 = vmatpush1.bf16.msra.mxu0 %v2274
    %2308 = vmatprep.subr.bf16.mxu0 %v2277
    %2309 = vmatpush1.bf16.msra.mxu0 %v2276
    %2310 = vmatprep.subr.bf16.mxu0 %v2279
    %2311 = vmatpush1.bf16.msra.mxu0 %v2278
    %2312 = vmatprep.subr.bf16.mxu0 %v2281
    %2313 = vmatpush1.bf16.msra.mxu0 %v2280
    %2314 = vmatprep.subr.bf16.mxu0 0
    %2315 = vmatpush1.bf16.msra.mxu0 0
    %2316 = vmatprep.subr.bf16.mxu0 0
    %2317 = vmatpush1.bf16.msra.mxu0 0
    %2318 = vmatprep.subr.bf16.mxu0 0
    %2319 = vmatpush1.bf16.msra.mxu0 0
    %2320 = vmatprep.subr.bf16.mxu0 0
    %2321 = vmatpush1.bf16.msra.mxu0 0
    %2322 = vmatprep.subr.bf16.mxu0 0
    %2323 = vmatpush1.bf16.msra.mxu0 0
    %2324 = vmatprep.subr.bf16.mxu0 0
    %2325 = vmatpush1.bf16.msra.mxu0 0
    %2326 = vmatprep.subr.bf16.mxu0 0
    %2327 = vmatpush1.bf16.msra.mxu0 0
    %2328 = vmatprep.subr.bf16.mxu0 0
    %2329 = vmatpush1.bf16.msra.mxu0 0
    %2330 = vmatprep.mubr.bf16.mxu0 0
    %2331 = vmatmul.mubr.bf16.gmra.mrb[0].mxu0 %v2201
    %v2332 = vpop.f32.mrb[0].mxu0
    %v2333 = vadd.f32 0.0, %v2332
    %v2334 = vpop.f32.mrb[0].mxu0
    %v2335 = vadd.f32 0.0, %v2334
    %v2336 = vpop.f32.mrb[0].mxu0
    %v2337 = vadd.f32 0.0, %v2336
    %v2338 = vpop.f32.mrb[0].mxu0
    %v2339 = vadd.f32 0.0, %v2338
    %2340 = vdwg.mxu0
    %v2341 = vmax.f32 %v2333, 0.0
    %v2342 = vmax.f32 %v2337, 0.0
    %v2343 = vadd.f32 %v2341, 1e-07
    %v2344 = vadd.f32 %v2342, 1e-07
    %v2345 = vstv %s2200
    %v2346 = vmul.f32 %v2343, %v2345
    %v2347 = vmul.f32 %v2344, %v2345
    %v2348 = vmax.f32 %v2346, %v2347
    %v2349 = vrot.slane %v2348, 4
    %v2350 = vmax.f32 %v2348, %v2349
    %v2351 = vrot.slane %v2350, 2
    %v2352 = vmax.f32 %v2350, %v2351
    %v2353 = vrot.slane %v2352, 1
    %v2354 = vmax.f32 %v2352, %v2353
    %v2355 = vsub.f32 %v2346, %v2354
    %v2356 = vsub.f32 %v2347, %v2354
    %v2357 = vmul.f32 %v2355, 1.442695
    %v2358 = vpow.pop %v2357
    %v2359 = vmul.f32 %v2356, 1.442695
    %v2360 = vpow.pop %v2359
    %v2361 = vmul.f32 %v2358, %v2343
    %v2362 = vmul.f32 %v2360, %v2344
    %v2363 = vpack.c.bf16 %v2362, %v2361
    %v2364 = vpack.c.bf16 %v2360, %v2358
    %2365 = vmatprep.subr.bf16.mxu0 %v2364
    %2366 = vmatpush1.bf16.msra.mxu0 %v2363
    %2367 = vmatprep.subr.bf16.mxu0 0
    %2368 = vmatpush1.bf16.msra.mxu0 0
    %2369 = vmatprep.subr.bf16.mxu0 0
    %2370 = vmatpush1.bf16.msra.mxu0 0
    %2371 = vmatprep.subr.bf16.mxu0 0
    %2372 = vmatpush1.bf16.msra.mxu0 0
    %2373 = vmatprep.subr.bf16.mxu0 0
    %2374 = vmatpush1.bf16.msra.mxu0 0
    %2375 = vmatprep.subr.bf16.mxu0 0
    %2376 = vmatpush1.bf16.msra.mxu0 0
    %2377 = vmatprep.subr.bf16.mxu0 0
    %2378 = vmatpush1.bf16.msra.mxu0 0
    %2379 = vmatprep.subr.bf16.mxu0 0
    %2380 = vmatpush1.bf16.msra.mxu0 0
    %2381 = vmatprep.subr.bf16.mxu0 0
    %2382 = vmatpush1.bf16.msra.mxu0 0
    %2383 = vmatprep.subr.bf16.mxu0 0
    %2384 = vmatpush1.bf16.msra.mxu0 0
    %2385 = vmatprep.subr.bf16.mxu0 0
    %2386 = vmatpush1.bf16.msra.mxu0 0
    %2387 = vmatprep.subr.bf16.mxu0 0
    %2388 = vmatpush1.bf16.msra.mxu0 0
    %2389 = vmatprep.subr.bf16.mxu0 0
    %2390 = vmatpush1.bf16.msra.mxu0 0
    %2391 = vmatprep.subr.bf16.mxu0 0
    %2392 = vmatpush1.bf16.msra.mxu0 0
    %2393 = vmatprep.subr.bf16.mxu0 0
    %2394 = vmatpush1.bf16.msra.mxu0 0
    %2395 = vmatprep.subr.bf16.mxu0 0
    %2396 = vmatpush1.bf16.msra.mxu0 0
    %2397 = vmatprep.mubr.bf16.mxu0 0
    %2398 = vmatmul.mubr.bf16.gmra.mrb[0].mxu0 %v396
    %v2399 = vpop.f32.mrb[0].mxu0
    %v2400 = vadd.f32 0.0, %v2399
    %v2401 = vpop.f32.mrb[0].mxu0
    %v2402 = vadd.f32 0.0, %v2401
    %v2403 = vpop.f32.mrb[0].mxu0
    %v2404 = vadd.f32 0.0, %v2403
    %v2405 = vpop.f32.mrb[0].mxu0
    %v2406 = vadd.f32 0.0, %v2405
    %2407 = vdwg.mxu0
    %v2408 = vadd.f32 %v2402, 1e-16
    %v2409 = vadd.f32 %v2406, 1e-16
    %v2410 = vrcp.pop %v2408
    %v2411 = vmul.f32 %v2400, %v2410
    %v2412 = vrcp.pop %v2409
    %v2413 = vmul.f32 %v2404, %v2412
    %v2414 = vadd.f32 %v2411, %v2335
    %v2415 = vadd.f32 %v2413, %v2339
    %v2416 = vpack.c.bf16 %v2415, %v2414
    %v2417 = vld [vmem:[%s63] sm:$0xf]
    %v2418 = vld [vmem:[%s63 + $0x4] sm:$0xf]
    %v2419 = vld [vmem:[%s63 + $0x8] sm:$0xf]
    %v2420 = vld [vmem:[%s63 + $0xc] sm:$0xf]
    %v2421 = vld [vmem:[%s63 + $0x10] sm:$0xf]
    %v2422 = vld [vmem:[%s63 + $0x14] sm:$0xf]
    %v2423 = vld [vmem:[%s63 + $0x18] sm:$0xf]
    %v2424 = vld [vmem:[%s63 + $0x1c] sm:$0xf]
    %v2425 = vld [vmem:[%s63 + $0x20] sm:$0xf]
    %v2426 = vld [vmem:[%s63 + $0x24] sm:$0xf]
    %v2427 = vld [vmem:[%s63 + $0x28] sm:$0xf]
    %v2428 = vld [vmem:[%s63 + $0x2c] sm:$0xf]
    %v2429 = vld [vmem:[%s63 + $0x30] sm:$0xf]
    %v2430 = vld [vmem:[%s63 + $0x34] sm:$0xf]
    %v2431 = vld [vmem:[%s63 + $0x38] sm:$0xf]
    %v2432 = vld [vmem:[%s63 + $0x3c] sm:$0xf]
    %v2449 = vunpack.c.l.b16 %v2417
    %v2450 = vunpack.c.l.b16 %v2418
    %v2451 = vunpack.c.l.b16 %v2419
    %v2452 = vunpack.c.l.b16 %v2420
    %v2453 = vunpack.c.l.b16 %v2421
    %v2454 = vunpack.c.l.b16 %v2422
    %v2455 = vunpack.c.l.b16 %v2423
    %v2456 = vunpack.c.l.b16 %v2424
    %v2457 = vunpack.c.l.b16 %v2425
    %v2458 = vunpack.c.l.b16 %v2426
    %v2459 = vunpack.c.l.b16 %v2427
    %v2460 = vunpack.c.l.b16 %v2428
    %v2461 = vunpack.c.l.b16 %v2429
    %v2462 = vunpack.c.l.b16 %v2430
    %v2463 = vunpack.c.l.b16 %v2431
    %v2464 = vunpack.c.l.b16 %v2432
    %v2465 = vpack.c.b16 %v2450, %v2449
    %v2466 = vpack.c.b16 %v2452, %v2451
    %v2467 = vpack.c.b16 %v2454, %v2453
    %v2468 = vpack.c.b16 %v2456, %v2455
    %v2469 = vpack.c.b16 %v2458, %v2457
    %v2470 = vpack.c.b16 %v2460, %v2459
    %v2471 = vpack.c.b16 %v2462, %v2461
    %v2472 = vpack.c.b16 %v2464, %v2463
    %2481 = vmatprep.subr.bf16.mxu0 0
    %2482 = vmatpush1.bf16.msra.mxu0 %v2465
    %2483 = vmatprep.subr.bf16.mxu0 0
    %2484 = vmatpush1.bf16.msra.mxu0 %v2466
    %2485 = vmatprep.subr.bf16.mxu0 0
    %2486 = vmatpush1.bf16.msra.mxu0 %v2467
    %2487 = vmatprep.subr.bf16.mxu0 0
    %2488 = vmatpush1.bf16.msra.mxu0 %v2468
    %2489 = vmatprep.subr.bf16.mxu0 0
    %2490 = vmatpush1.bf16.msra.mxu0 %v2469
    %2491 = vmatprep.subr.bf16.mxu0 0
    %2492 = vmatpush1.bf16.msra.mxu0 %v2470
    %2493 = vmatprep.subr.bf16.mxu0 0
    %2494 = vmatpush1.bf16.msra.mxu0 %v2471
    %2495 = vmatprep.subr.bf16.mxu0 0
    %2496 = vmatpush1.bf16.msra.mxu0 %v2472
    %2497 = vmatprep.subr.bf16.mxu0 0
    %2498 = vmatpush1.bf16.msra.mxu0 0
    %2499 = vmatprep.subr.bf16.mxu0 0
    %2500 = vmatpush1.bf16.msra.mxu0 0
    %2501 = vmatprep.subr.bf16.mxu0 0
    %2502 = vmatpush1.bf16.msra.mxu0 0
    %2503 = vmatprep.subr.bf16.mxu0 0
    %2504 = vmatpush1.bf16.msra.mxu0 0
    %2505 = vmatprep.subr.bf16.mxu0 0
    %2506 = vmatpush1.bf16.msra.mxu0 0
    %2507 = vmatprep.subr.bf16.mxu0 0
    %2508 = vmatpush1.bf16.msra.mxu0 0
    %2509 = vmatprep.subr.bf16.mxu0 0
    %2510 = vmatpush1.bf16.msra.mxu0 0
    %2511 = vmatprep.subr.bf16.mxu0 0
    %2512 = vmatpush1.bf16.msra.mxu0 0
    %2513 = vmatprep.mubr.bf16.mxu0 0
    %2514 = vmatmul.mubr.bf16.gmra.mrb[0].mxu0 %v2416
    %v2515 = vpop.f32.mrb[0].mxu0
    %v2516 = vadd.f32 0.0, %v2515
    %v2517 = vpop.f32.mrb[0].mxu0
    %v2518 = vpop.f32.mrb[0].mxu0
    %v2519 = vadd.f32 0.0, %v2518
    %v2520 = vpop.f32.mrb[0].mxu0
    %2521 = vdwg.mxu0
    %v2522 = vmul.f32 %v2516, %v2516
    %v2523 = vmul.f32 %v2519, %v2519
    %v2524 = vadd.f32 %v2516, %v2519
    %v2525 = vrot.slane %v2524, 4
    %v2526 = vadd.f32 %v2524, %v2525
    %v2527 = vrot.slane %v2526, 2
    %v2528 = vadd.f32 %v2526, %v2527
    %v2529 = vrot.slane %v2528, 1
    %v2530 = vadd.f32 %v2528, %v2529
    %v2531 = vadd.f32 %v2522, %v2523
    %v2532 = vrot.slane %v2531, 4
    %v2533 = vadd.f32 %v2531, %v2532
    %v2534 = vrot.slane %v2533, 2
    %v2535 = vadd.f32 %v2533, %v2534
    %v2536 = vrot.slane %v2535, 1
    %v2537 = vadd.f32 %v2535, %v2536
    %v2538 = vmul.f32 %v2530, %v571
    %v2539 = vmul.f32 %v2537, %v571
    %v2540 = vmul.f32 %v2538, %v2538
    %v2541 = vsub.f32 %v2539, %v2540
    %v2542 = vmax.f32 %v2541, 0.0
    %v2543 = vsub.f32 %v2516, %v2538
    %v2544 = vsub.f32 %v2519, %v2538
    %v2545 = vadd.f32 %v2542, 1e-05
    %v2546 = vrsqrt.pop %v2545
    %v2547 = vmul.f32 %v2543, %v2546
    %v2548 = vmul.f32 %v2544, %v2546
    %v2549 = vld [vmem:[%s65] sm:$0x1]
    %v2551 = vlaneseq
    %v2552 = vshrl.u32 %v2551, 7
    %v2553 = vsub.s32 0, %v2552
    %v2554 = vrot.slane %v2549, %v2553
    %v2556 = vmul.f32 %v2547, %v2554
    %v2557 = vmul.f32 %v2548, %v2554
    %v2558 = vld [vmem:[%s67] sm:$0x1]
    %v2560 = vlaneseq
    %v2561 = vshrl.u32 %v2560, 7
    %v2562 = vsub.s32 0, %v2561
    %v2563 = vrot.slane %v2558, %v2562
    %v2565 = vadd.f32 %v2556, %v2563
    %v2566 = vadd.f32 %v2557, %v2563
    %v2567 = vmax.f32 %v2565, 0.0
    %v2568 = vmax.f32 %v2566, 0.0
    %v2569 = vpack.c.bf16 %v2568, %v2567
    %v2570 = vld [vmem:[%s69] sm:$0xf]
    %v2571 = vld [vmem:[%s69 + $0x4] sm:$0xf]
    %v2572 = vld [vmem:[%s69 + $0x8] sm:$0xf]
    %v2573 = vld [vmem:[%s69 + $0xc] sm:$0xf]
    %v2574 = vld [vmem:[%s69 + $0x10] sm:$0xf]
    %v2575 = vld [vmem:[%s69 + $0x14] sm:$0xf]
    %v2576 = vld [vmem:[%s69 + $0x18] sm:$0xf]
    %v2577 = vld [vmem:[%s69 + $0x1c] sm:$0xf]
    %v2578 = vld [vmem:[%s69 + $0x20] sm:$0xf]
    %v2579 = vld [vmem:[%s69 + $0x24] sm:$0xf]
    %v2580 = vld [vmem:[%s69 + $0x28] sm:$0xf]
    %v2581 = vld [vmem:[%s69 + $0x2c] sm:$0xf]
    %v2582 = vld [vmem:[%s69 + $0x30] sm:$0xf]
    %v2583 = vld [vmem:[%s69 + $0x34] sm:$0xf]
    %v2584 = vld [vmem:[%s69 + $0x38] sm:$0xf]
    %v2585 = vld [vmem:[%s69 + $0x3c] sm:$0xf]
    %v2586 = vld [vmem:[%s71] sm:$0x1]
    %v2588 = vlaneseq
    %v2589 = vshrl.u32 %v2588, 7
    %v2590 = vsub.s32 0, %v2589
    %v2591 = vrot.slane %v2586, %v2590
    %v2609 = vunpack.c.l.b16 %v2570
    %v2610 = vunpack.c.l.b16 %v2571
    %v2611 = vunpack.c.l.b16 %v2572
    %v2612 = vunpack.c.l.b16 %v2573
    %v2613 = vunpack.c.l.b16 %v2574
    %v2614 = vunpack.c.l.b16 %v2575
    %v2615 = vunpack.c.l.b16 %v2576
    %v2616 = vunpack.c.l.b16 %v2577
    %v2617 = vunpack.c.l.b16 %v2578
    %v2618 = vunpack.c.l.b16 %v2579
    %v2619 = vunpack.c.l.b16 %v2580
    %v2620 = vunpack.c.l.b16 %v2581
    %v2621 = vunpack.c.l.b16 %v2582
    %v2622 = vunpack.c.l.b16 %v2583
    %v2623 = vunpack.c.l.b16 %v2584
    %v2624 = vunpack.c.l.b16 %v2585
    %v2625 = vpack.c.b16 %v2610, %v2609
    %v2626 = vpack.c.b16 %v2612, %v2611
    %v2627 = vpack.c.b16 %v2614, %v2613
    %v2628 = vpack.c.b16 %v2616, %v2615
    %v2629 = vpack.c.b16 %v2618, %v2617
    %v2630 = vpack.c.b16 %v2620, %v2619
    %v2631 = vpack.c.b16 %v2622, %v2621
    %v2632 = vpack.c.b16 %v2624, %v2623
    %2641 = vmatprep.subr.bf16.mxu0 0
    %2642 = vmatpush1.bf16.msra.mxu0 %v2625
    %2643 = vmatprep.subr.bf16.mxu0 0
    %2644 = vmatpush1.bf16.msra.mxu0 %v2626
    %2645 = vmatprep.subr.bf16.mxu0 0
    %2646 = vmatpush1.bf16.msra.mxu0 %v2627
    %2647 = vmatprep.subr.bf16.mxu0 0
    %2648 = vmatpush1.bf16.msra.mxu0 %v2628
    %2649 = vmatprep.subr.bf16.mxu0 0
    %2650 = vmatpush1.bf16.msra.mxu0 %v2629
    %2651 = vmatprep.subr.bf16.mxu0 0
    %2652 = vmatpush1.bf16.msra.mxu0 %v2630
    %2653 = vmatprep.subr.bf16.mxu0 0
    %2654 = vmatpush1.bf16.msra.mxu0 %v2631
    %2655 = vmatprep.subr.bf16.mxu0 0
    %2656 = vmatpush1.bf16.msra.mxu0 %v2632
    %2657 = vmatprep.subr.bf16.mxu0 0
    %2658 = vmatpush1.bf16.msra.mxu0 0
    %2659 = vmatprep.subr.bf16.mxu0 0
    %2660 = vmatpush1.bf16.msra.mxu0 0
    %2661 = vmatprep.subr.bf16.mxu0 0
    %2662 = vmatpush1.bf16.msra.mxu0 0
    %2663 = vmatprep.subr.bf16.mxu0 0
    %2664 = vmatpush1.bf16.msra.mxu0 0
    %2665 = vmatprep.subr.bf16.mxu0 0
    %2666 = vmatpush1.bf16.msra.mxu0 0
    %2667 = vmatprep.subr.bf16.mxu0 0
    %2668 = vmatpush1.bf16.msra.mxu0 0
    %2669 = vmatprep.subr.bf16.mxu0 0
    %2670 = vmatpush1.bf16.msra.mxu0 0
    %2671 = vmatprep.subr.bf16.mxu0 0
    %2672 = vmatpush1.bf16.msra.mxu0 0
    %2673 = vmatprep.mubr.bf16.mxu0 0
    %2674 = vmatmul.mubr.bf16.gmra.mrb[0].mxu0 %v2569
    %v2675 = vpop.f32.mrb[0].mxu0
    %v2676 = vadd.f32 %v2591, %v2675
    %v2677 = vpop.f32.mrb[0].mxu0
    %v2678 = vpop.f32.mrb[0].mxu0
    %v2679 = vadd.f32 %v2591, %v2678
    %v2680 = vpop.f32.mrb[0].mxu0
    %2681 = vdwg.mxu0
    %s2682 = scalar_lea.vmem %s5, 64
    %v2683 = vld [vmem:[%s2682] sm:$0xff]
    %v2684 = vld [vmem:[%s2682 + $0x8] sm:$0xff]
    %v2685 = vadd.f32 %v2676, %v2683
    %v2686 = vadd.f32 %v2679, %v2684
    %s2687 = scalar_lea.vmem %s7, 64
    %v2688 = vld [vmem:[%s2687] sm:$0xff]
    %v2689 = vld [vmem:[%s2687 + $0x8] sm:$0xff]
    %v2690 = vmul.f32 %v2685, %v2688
    %v2691 = vmul.f32 %v2686, %v2689
    %s2692 = sld [smem:[#allocation2 + $0x5]]
    %v2693 = vpack.c.bf16 %v2691, %v2690
    %v2694 = vld [vmem:[%s73] sm:$0xff]
    %v2695 = vld [vmem:[%s73 + $0x8] sm:$0xff]
    %v2696 = vld [vmem:[%s73 + $0x10] sm:$0xff]
    %v2697 = vld [vmem:[%s73 + $0x18] sm:$0xff]
    %v2698 = vld [vmem:[%s73 + $0x20] sm:$0xff]
    %v2699 = vld [vmem:[%s73 + $0x28] sm:$0xff]
    %v2700 = vld [vmem:[%s73 + $0x30] sm:$0xff]
    %v2701 = vld [vmem:[%s73 + $0x38] sm:$0xff]
    %v2702 = vld [vmem:[%s73 + $0x40] sm:$0xff]
    %v2703 = vld [vmem:[%s73 + $0x48] sm:$0xff]
    %v2704 = vld [vmem:[%s73 + $0x50] sm:$0xff]
    %v2705 = vld [vmem:[%s73 + $0x58] sm:$0xff]
    %v2706 = vld [vmem:[%s73 + $0x60] sm:$0xff]
    %v2707 = vld [vmem:[%s73 + $0x68] sm:$0xff]
    %v2708 = vld [vmem:[%s73 + $0x70] sm:$0xff]
    %v2709 = vld [vmem:[%s73 + $0x78] sm:$0xff]
    %v2726 = vunpack.c.l.b16 %v2694
    %v2727 = vunpack.c.h.b16 %v2694
    %v2728 = vunpack.c.l.b16 %v2695
    %v2729 = vunpack.c.h.b16 %v2695
    %v2730 = vunpack.c.l.b16 %v2696
    %v2731 = vunpack.c.h.b16 %v2696
    %v2732 = vunpack.c.l.b16 %v2697
    %v2733 = vunpack.c.h.b16 %v2697
    %v2734 = vunpack.c.l.b16 %v2698
    %v2735 = vunpack.c.h.b16 %v2698
    %v2736 = vunpack.c.l.b16 %v2699
    %v2737 = vunpack.c.h.b16 %v2699
    %v2738 = vunpack.c.l.b16 %v2700
    %v2739 = vunpack.c.h.b16 %v2700
    %v2740 = vunpack.c.l.b16 %v2701
    %v2741 = vunpack.c.h.b16 %v2701
    %v2742 = vunpack.c.l.b16 %v2702
    %v2743 = vunpack.c.h.b16 %v2702
    %v2744 = vunpack.c.l.b16 %v2703
    %v2745 = vunpack.c.h.b16 %v2703
    %v2746 = vunpack.c.l.b16 %v2704
    %v2747 = vunpack.c.h.b16 %v2704
    %v2748 = vunpack.c.l.b16 %v2705
    %v2749 = vunpack.c.h.b16 %v2705
    %v2750 = vunpack.c.l.b16 %v2706
    %v2751 = vunpack.c.h.b16 %v2706
    %v2752 = vunpack.c.l.b16 %v2707
    %v2753 = vunpack.c.h.b16 %v2707
    %v2754 = vunpack.c.l.b16 %v2708
    %v2755 = vunpack.c.h.b16 %v2708
    %v2756 = vunpack.c.l.b16 %v2709
    %v2757 = vunpack.c.h.b16 %v2709
    %v2758 = vpack.c.b16 %v2728, %v2726
    %v2759 = vpack.c.b16 %v2729, %v2727
    %v2760 = vpack.c.b16 %v2732, %v2730
    %v2761 = vpack.c.b16 %v2733, %v2731
    %v2762 = vpack.c.b16 %v2736, %v2734
    %v2763 = vpack.c.b16 %v2737, %v2735
    %v2764 = vpack.c.b16 %v2740, %v2738
    %v2765 = vpack.c.b16 %v2741, %v2739
    %v2766 = vpack.c.b16 %v2744, %v2742
    %v2767 = vpack.c.b16 %v2745, %v2743
    %v2768 = vpack.c.b16 %v2748, %v2746
    %v2769 = vpack.c.b16 %v2749, %v2747
    %v2770 = vpack.c.b16 %v2752, %v2750
    %v2771 = vpack.c.b16 %v2753, %v2751
    %v2772 = vpack.c.b16 %v2756, %v2754
    %v2773 = vpack.c.b16 %v2757, %v2755
    %2790 = vmatprep.subr.bf16.mxu0 %v2759
    %2791 = vmatpush1.bf16.msra.mxu0 %v2758
    %2792 = vmatprep.subr.bf16.mxu0 %v2761
    %2793 = vmatpush1.bf16.msra.mxu0 %v2760
    %2794 = vmatprep.subr.bf16.mxu0 %v2763
    %2795 = vmatpush1.bf16.msra.mxu0 %v2762
    %2796 = vmatprep.subr.bf16.mxu0 %v2765
    %2797 = vmatpush1.bf16.msra.mxu0 %v2764
    %2798 = vmatprep.subr.bf16.mxu0 %v2767
    %2799 = vmatpush1.bf16.msra.mxu0 %v2766
    %2800 = vmatprep.subr.bf16.mxu0 %v2769
    %2801 = vmatpush1.bf16.msra.mxu0 %v2768
    %2802 = vmatprep.subr.bf16.mxu0 %v2771
    %2803 = vmatpush1.bf16.msra.mxu0 %v2770
    %2804 = vmatprep.subr.bf16.mxu0 %v2773
    %2805 = vmatpush1.bf16.msra.mxu0 %v2772
    %2806 = vmatprep.subr.bf16.mxu0 0
    %2807 = vmatpush1.bf16.msra.mxu0 0
    %2808 = vmatprep.subr.bf16.mxu0 0
    %2809 = vmatpush1.bf16.msra.mxu0 0
    %2810 = vmatprep.subr.bf16.mxu0 0
    %2811 = vmatpush1.bf16.msra.mxu0 0
    %2812 = vmatprep.subr.bf16.mxu0 0
    %2813 = vmatpush1.bf16.msra.mxu0 0
    %2814 = vmatprep.subr.bf16.mxu0 0
    %2815 = vmatpush1.bf16.msra.mxu0 0
    %2816 = vmatprep.subr.bf16.mxu0 0
    %2817 = vmatpush1.bf16.msra.mxu0 0
    %2818 = vmatprep.subr.bf16.mxu0 0
    %2819 = vmatpush1.bf16.msra.mxu0 0
    %2820 = vmatprep.subr.bf16.mxu0 0
    %2821 = vmatpush1.bf16.msra.mxu0 0
    %2822 = vmatprep.mubr.bf16.mxu0 0
    %2823 = vmatmul.mubr.bf16.gmra.mrb[0].mxu0 %v2693
    %v2824 = vpop.f32.mrb[0].mxu0
    %v2825 = vadd.f32 0.0, %v2824
    %v2826 = vpop.f32.mrb[0].mxu0
    %v2827 = vadd.f32 0.0, %v2826
    %v2828 = vpop.f32.mrb[0].mxu0
    %v2829 = vadd.f32 0.0, %v2828
    %v2830 = vpop.f32.mrb[0].mxu0
    %v2831 = vadd.f32 0.0, %v2830
    %2832 = vdwg.mxu0
    %v2833 = vmax.f32 %v2825, 0.0
    %v2834 = vmax.f32 %v2829, 0.0
    %v2835 = vadd.f32 %v2833, 1e-07
    %v2836 = vadd.f32 %v2834, 1e-07
    %v2837 = vstv %s2692
    %v2838 = vmul.f32 %v2835, %v2837
    %v2839 = vmul.f32 %v2836, %v2837
    %v2840 = vmax.f32 %v2838, %v2839
    %v2841 = vrot.slane %v2840, 4
    %v2842 = vmax.f32 %v2840, %v2841
    %v2843 = vrot.slane %v2842, 2
    %v2844 = vmax.f32 %v2842, %v2843
    %v2845 = vrot.slane %v2844, 1
    %v2846 = vmax.f32 %v2844, %v2845
    %v2847 = vsub.f32 %v2838, %v2846
    %v2848 = vsub.f32 %v2839, %v2846
    %v2849 = vmul.f32 %v2847, 1.442695
    %v2850 = vpow.pop %v2849
    %v2851 = vmul.f32 %v2848, 1.442695
    %v2852 = vpow.pop %v2851
    %v2853 = vmul.f32 %v2850, %v2835
    %v2854 = vmul.f32 %v2852, %v2836
    %v2855 = vpack.c.bf16 %v2854, %v2853
    %v2856 = vpack.c.bf16 %v2852, %v2850
    %2857 = vmatprep.subr.bf16.mxu0 %v2856
    %2858 = vmatpush1.bf16.msra.mxu0 %v2855
    %2859 = vmatprep.subr.bf16.mxu0 0
    %2860 = vmatpush1.bf16.msra.mxu0 0
    %2861 = vmatprep.subr.bf16.mxu0 0
    %2862 = vmatpush1.bf16.msra.mxu0 0
    %2863 = vmatprep.subr.bf16.mxu0 0
    %2864 = vmatpush1.bf16.msra.mxu0 0
    %2865 = vmatprep.subr.bf16.mxu0 0
    %2866 = vmatpush1.bf16.msra.mxu0 0
    %2867 = vmatprep.subr.bf16.mxu0 0
    %2868 = vmatpush1.bf16.msra.mxu0 0
    %2869 = vmatprep.subr.bf16.mxu0 0
    %2870 = vmatpush1.bf16.msra.mxu0 0
    %2871 = vmatprep.subr.bf16.mxu0 0
    %2872 = vmatpush1.bf16.msra.mxu0 0
    %2873 = vmatprep.subr.bf16.mxu0 0
    %2874 = vmatpush1.bf16.msra.mxu0 0
    %2875 = vmatprep.subr.bf16.mxu0 0
    %2876 = vmatpush1.bf16.msra.mxu0 0
    %2877 = vmatprep.subr.bf16.mxu0 0
    %2878 = vmatpush1.bf16.msra.mxu0 0
    %2879 = vmatprep.subr.bf16.mxu0 0
    %2880 = vmatpush1.bf16.msra.mxu0 0
    %2881 = vmatprep.subr.bf16.mxu0 0
    %2882 = vmatpush1.bf16.msra.mxu0 0
    %2883 = vmatprep.subr.bf16.mxu0 0
    %2884 = vmatpush1.bf16.msra.mxu0 0
    %2885 = vmatprep.subr.bf16.mxu0 0
    %2886 = vmatpush1.bf16.msra.mxu0 0
    %2887 = vmatprep.subr.bf16.mxu0 0
    %2888 = vmatpush1.bf16.msra.mxu0 0
    %2889 = vmatprep.mubr.bf16.mxu0 0
    %2890 = vmatmul.mubr.bf16.gmra.mrb[0].mxu0 %v396
    %v2891 = vpop.f32.mrb[0].mxu0
    %v2892 = vadd.f32 0.0, %v2891
    %v2893 = vpop.f32.mrb[0].mxu0
    %v2894 = vadd.f32 0.0, %v2893
    %v2895 = vpop.f32.mrb[0].mxu0
    %v2896 = vadd.f32 0.0, %v2895
    %v2897 = vpop.f32.mrb[0].mxu0
    %v2898 = vadd.f32 0.0, %v2897
    %2899 = vdwg.mxu0
    %v2900 = vadd.f32 %v2894, 1e-16
    %v2901 = vadd.f32 %v2898, 1e-16
    %v2902 = vrcp.pop %v2900
    %v2903 = vmul.f32 %v2892, %v2902
    %v2904 = vrcp.pop %v2901
    %v2905 = vmul.f32 %v2896, %v2904
    %v2906 = vadd.f32 %v2903, %v2827
    %v2907 = vadd.f32 %v2905, %v2831
    %v2908 = vpack.c.bf16 %v2907, %v2906
    %v2909 = vld [vmem:[%s75] sm:$0xf]
    %v2910 = vld [vmem:[%s75 + $0x4] sm:$0xf]
    %v2911 = vld [vmem:[%s75 + $0x8] sm:$0xf]
    %v2912 = vld [vmem:[%s75 + $0xc] sm:$0xf]
    %v2913 = vld [vmem:[%s75 + $0x10] sm:$0xf]
    %v2914 = vld [vmem:[%s75 + $0x14] sm:$0xf]
    %v2915 = vld [vmem:[%s75 + $0x18] sm:$0xf]
    %v2916 = vld [vmem:[%s75 + $0x1c] sm:$0xf]
    %v2917 = vld [vmem:[%s75 + $0x20] sm:$0xf]
    %v2918 = vld [vmem:[%s75 + $0x24] sm:$0xf]
    %v2919 = vld [vmem:[%s75 + $0x28] sm:$0xf]
    %v2920 = vld [vmem:[%s75 + $0x2c] sm:$0xf]
    %v2921 = vld [vmem:[%s75 + $0x30] sm:$0xf]
    %v2922 = vld [vmem:[%s75 + $0x34] sm:$0xf]
    %v2923 = vld [vmem:[%s75 + $0x38] sm:$0xf]
    %v2924 = vld [vmem:[%s75 + $0x3c] sm:$0xf]
    %v2941 = vunpack.c.l.b16 %v2909
    %v2942 = vunpack.c.l.b16 %v2910
    %v2943 = vunpack.c.l.b16 %v2911
    %v2944 = vunpack.c.l.b16 %v2912
    %v2945 = vunpack.c.l.b16 %v2913
    %v2946 = vunpack.c.l.b16 %v2914
    %v2947 = vunpack.c.l.b16 %v2915
    %v2948 = vunpack.c.l.b16 %v2916
    %v2949 = vunpack.c.l.b16 %v2917
    %v2950 = vunpack.c.l.b16 %v2918
    %v2951 = vunpack.c.l.b16 %v2919
    %v2952 = vunpack.c.l.b16 %v2920
    %v2953 = vunpack.c.l.b16 %v2921
    %v2954 = vunpack.c.l.b16 %v2922
    %v2955 = vunpack.c.l.b16 %v2923
    %v2956 = vunpack.c.l.b16 %v2924
    %v2957 = vpack.c.b16 %v2942, %v2941
    %v2958 = vpack.c.b16 %v2944, %v2943
    %v2959 = vpack.c.b16 %v2946, %v2945
    %v2960 = vpack.c.b16 %v2948, %v2947
    %v2961 = vpack.c.b16 %v2950, %v2949
    %v2962 = vpack.c.b16 %v2952, %v2951
    %v2963 = vpack.c.b16 %v2954, %v2953
    %v2964 = vpack.c.b16 %v2956, %v2955
    %2973 = vmatprep.subr.bf16.mxu0 0
    %2974 = vmatpush1.bf16.msra.mxu0 %v2957
    %2975 = vmatprep.subr.bf16.mxu0 0
    %2976 = vmatpush1.bf16.msra.mxu0 %v2958
    %2977 = vmatprep.subr.bf16.mxu0 0
    %2978 = vmatpush1.bf16.msra.mxu0 %v2959
    %2979 = vmatprep.subr.bf16.mxu0 0
    %2980 = vmatpush1.bf16.msra.mxu0 %v2960
    %2981 = vmatprep.subr.bf16.mxu0 0
    %2982 = vmatpush1.bf16.msra.mxu0 %v2961
    %2983 = vmatprep.subr.bf16.mxu0 0
    %2984 = vmatpush1.bf16.msra.mxu0 %v2962
    %2985 = vmatprep.subr.bf16.mxu0 0
    %2986 = vmatpush1.bf16.msra.mxu0 %v2963
    %2987 = vmatprep.subr.bf16.mxu0 0
    %2988 = vmatpush1.bf16.msra.mxu0 %v2964
    %2989 = vmatprep.subr.bf16.mxu0 0
    %2990 = vmatpush1.bf16.msra.mxu0 0
    %2991 = vmatprep.subr.bf16.mxu0 0
    %2992 = vmatpush1.bf16.msra.mxu0 0
    %2993 = vmatprep.subr.bf16.mxu0 0
    %2994 = vmatpush1.bf16.msra.mxu0 0
    %2995 = vmatprep.subr.bf16.mxu0 0
    %2996 = vmatpush1.bf16.msra.mxu0 0
    %2997 = vmatprep.subr.bf16.mxu0 0
    %2998 = vmatpush1.bf16.msra.mxu0 0
    %2999 = vmatprep.subr.bf16.mxu0 0
    %3000 = vmatpush1.bf16.msra.mxu0 0
    %3001 = vmatprep.subr.bf16.mxu0 0
    %3002 = vmatpush1.bf16.msra.mxu0 0
    %3003 = vmatprep.subr.bf16.mxu0 0
    %3004 = vmatpush1.bf16.msra.mxu0 0
    %3005 = vmatprep.mubr.bf16.mxu0 0
    %3006 = vmatmul.mubr.bf16.gmra.mrb[0].mxu0 %v2908
    %v3007 = vpop.f32.mrb[0].mxu0
    %v3008 = vadd.f32 0.0, %v3007
    %v3009 = vpop.f32.mrb[0].mxu0
    %v3010 = vpop.f32.mrb[0].mxu0
    %v3011 = vadd.f32 0.0, %v3010
    %v3012 = vpop.f32.mrb[0].mxu0
    %3013 = vdwg.mxu0
    %v3014 = vmul.f32 %v3008, %v3008
    %v3015 = vmul.f32 %v3011, %v3011
    %v3016 = vadd.f32 %v3008, %v3011
    %v3017 = vrot.slane %v3016, 4
    %v3018 = vadd.f32 %v3016, %v3017
    %v3019 = vrot.slane %v3018, 2
    %v3020 = vadd.f32 %v3018, %v3019
    %v3021 = vrot.slane %v3020, 1
    %v3022 = vadd.f32 %v3020, %v3021
    %v3023 = vadd.f32 %v3014, %v3015
    %v3024 = vrot.slane %v3023, 4
    %v3025 = vadd.f32 %v3023, %v3024
    %v3026 = vrot.slane %v3025, 2
    %v3027 = vadd.f32 %v3025, %v3026
    %v3028 = vrot.slane %v3027, 1
    %v3029 = vadd.f32 %v3027, %v3028
    %v3030 = vmul.f32 %v3022, %v571
    %v3031 = vmul.f32 %v3029, %v571
    %v3032 = vmul.f32 %v3030, %v3030
    %v3033 = vsub.f32 %v3031, %v3032
    %v3034 = vmax.f32 %v3033, 0.0
    %v3035 = vsub.f32 %v3008, %v3030
    %v3036 = vsub.f32 %v3011, %v3030
    %v3037 = vadd.f32 %v3034, 1e-05
    %v3038 = vrsqrt.pop %v3037
    %v3039 = vmul.f32 %v3035, %v3038
    %v3040 = vmul.f32 %v3036, %v3038
    %v3041 = vld [vmem:[%s77] sm:$0x1]
    %v3043 = vlaneseq
    %v3044 = vshrl.u32 %v3043, 7
    %v3045 = vsub.s32 0, %v3044
    %v3046 = vrot.slane %v3041, %v3045
    %v3048 = vmul.f32 %v3039, %v3046
    %v3049 = vmul.f32 %v3040, %v3046
    %v3050 = vld [vmem:[%s79] sm:$0x1]
    %v3052 = vlaneseq
    %v3053 = vshrl.u32 %v3052, 7
    %v3054 = vsub.s32 0, %v3053
    %v3055 = vrot.slane %v3050, %v3054
    %v3057 = vadd.f32 %v3048, %v3055
    %v3058 = vadd.f32 %v3049, %v3055
    %v3059 = vmax.f32 %v3057, 0.0
    %v3060 = vmax.f32 %v3058, 0.0
    %v3061 = vpack.c.bf16 %v3060, %v3059
    %v3062 = vld [vmem:[%s81] sm:$0xf]
    %v3063 = vld [vmem:[%s81 + $0x4] sm:$0xf]
    %v3064 = vld [vmem:[%s81 + $0x8] sm:$0xf]
    %v3065 = vld [vmem:[%s81 + $0xc] sm:$0xf]
    %v3066 = vld [vmem:[%s81 + $0x10] sm:$0xf]
    %v3067 = vld [vmem:[%s81 + $0x14] sm:$0xf]
    %v3068 = vld [vmem:[%s81 + $0x18] sm:$0xf]
    %v3069 = vld [vmem:[%s81 + $0x1c] sm:$0xf]
    %v3070 = vld [vmem:[%s81 + $0x20] sm:$0xf]
    %v3071 = vld [vmem:[%s81 + $0x24] sm:$0xf]
    %v3072 = vld [vmem:[%s81 + $0x28] sm:$0xf]
    %v3073 = vld [vmem:[%s81 + $0x2c] sm:$0xf]
    %v3074 = vld [vmem:[%s81 + $0x30] sm:$0xf]
    %v3075 = vld [vmem:[%s81 + $0x34] sm:$0xf]
    %v3076 = vld [vmem:[%s81 + $0x38] sm:$0xf]
    %v3077 = vld [vmem:[%s81 + $0x3c] sm:$0xf]
    %v3078 = vld [vmem:[%s83] sm:$0x1]
    %v3080 = vlaneseq
    %v3081 = vshrl.u32 %v3080, 7
    %v3082 = vsub.s32 0, %v3081
    %v3083 = vrot.slane %v3078, %v3082
    %v3101 = vunpack.c.l.b16 %v3062
    %v3102 = vunpack.c.l.b16 %v3063
    %v3103 = vunpack.c.l.b16 %v3064
    %v3104 = vunpack.c.l.b16 %v3065
    %v3105 = vunpack.c.l.b16 %v3066
    %v3106 = vunpack.c.l.b16 %v3067
    %v3107 = vunpack.c.l.b16 %v3068
    %v3108 = vunpack.c.l.b16 %v3069
    %v3109 = vunpack.c.l.b16 %v3070
    %v3110 = vunpack.c.l.b16 %v3071
    %v3111 = vunpack.c.l.b16 %v3072
    %v3112 = vunpack.c.l.b16 %v3073
    %v3113 = vunpack.c.l.b16 %v3074
    %v3114 = vunpack.c.l.b16 %v3075
    %v3115 = vunpack.c.l.b16 %v3076
    %v3116 = vunpack.c.l.b16 %v3077
    %v3117 = vpack.c.b16 %v3102, %v3101
    %v3118 = vpack.c.b16 %v3104, %v3103
    %v3119 = vpack.c.b16 %v3106, %v3105
    %v3120 = vpack.c.b16 %v3108, %v3107
    %v3121 = vpack.c.b16 %v3110, %v3109
    %v3122 = vpack.c.b16 %v3112, %v3111
    %v3123 = vpack.c.b16 %v3114, %v3113
    %v3124 = vpack.c.b16 %v3116, %v3115
    %3133 = vmatprep.subr.bf16.mxu0 0
    %3134 = vmatpush1.bf16.msra.mxu0 %v3117
    %3135 = vmatprep.subr.bf16.mxu0 0
    %3136 = vmatpush1.bf16.msra.mxu0 %v3118
    %3137 = vmatprep.subr.bf16.mxu0 0
    %3138 = vmatpush1.bf16.msra.mxu0 %v3119
    %3139 = vmatprep.subr.bf16.mxu0 0
    %3140 = vmatpush1.bf16.msra.mxu0 %v3120
    %3141 = vmatprep.subr.bf16.mxu0 0
    %3142 = vmatpush1.bf16.msra.mxu0 %v3121
    %3143 = vmatprep.subr.bf16.mxu0 0
    %3144 = vmatpush1.bf16.msra.mxu0 %v3122
    %3145 = vmatprep.subr.bf16.mxu0 0
    %3146 = vmatpush1.bf16.msra.mxu0 %v3123
    %3147 = vmatprep.subr.bf16.mxu0 0
    %3148 = vmatpush1.bf16.msra.mxu0 %v3124
    %3149 = vmatprep.subr.bf16.mxu0 0
    %3150 = vmatpush1.bf16.msra.mxu0 0
    %3151 = vmatprep.subr.bf16.mxu0 0
    %3152 = vmatpush1.bf16.msra.mxu0 0
    %3153 = vmatprep.subr.bf16.mxu0 0
    %3154 = vmatpush1.bf16.msra.mxu0 0
    %3155 = vmatprep.subr.bf16.mxu0 0
    %3156 = vmatpush1.bf16.msra.mxu0 0
    %3157 = vmatprep.subr.bf16.mxu0 0
    %3158 = vmatpush1.bf16.msra.mxu0 0
    %3159 = vmatprep.subr.bf16.mxu0 0
    %3160 = vmatpush1.bf16.msra.mxu0 0
    %3161 = vmatprep.subr.bf16.mxu0 0
    %3162 = vmatpush1.bf16.msra.mxu0 0
    %3163 = vmatprep.subr.bf16.mxu0 0
    %3164 = vmatpush1.bf16.msra.mxu0 0
    %3165 = vmatprep.mubr.bf16.mxu0 0
    %3166 = vmatmul.mubr.bf16.gmra.mrb[0].mxu0 %v3061
    %v3167 = vpop.f32.mrb[0].mxu0
    %v3168 = vadd.f32 %v3083, %v3167
    %v3169 = vpop.f32.mrb[0].mxu0
    %v3170 = vpop.f32.mrb[0].mxu0
    %v3171 = vadd.f32 %v3083, %v3170
    %v3172 = vpop.f32.mrb[0].mxu0
    %3173 = vdwg.mxu0
    %s3174 = scalar_lea.vmem %s5, 80
    %v3175 = vld [vmem:[%s3174] sm:$0xff]
    %v3176 = vld [vmem:[%s3174 + $0x8] sm:$0xff]
    %v3177 = vadd.f32 %v3168, %v3175
    %v3178 = vadd.f32 %v3171, %v3176
    %s3179 = scalar_lea.vmem %s7, 80
    %v3180 = vld [vmem:[%s3179] sm:$0xff]
    %v3181 = vld [vmem:[%s3179 + $0x8] sm:$0xff]
    %v3182 = vmul.f32 %v3177, %v3180
    %v3183 = vmul.f32 %v3178, %v3181
    %s3184 = sld [smem:[#allocation2 + $0x6]]
    %v3185 = vpack.c.bf16 %v3183, %v3182
    %v3186 = vld [vmem:[%s85] sm:$0xff]
    %v3187 = vld [vmem:[%s85 + $0x8] sm:$0xff]
    %v3188 = vld [vmem:[%s85 + $0x10] sm:$0xff]
    %v3189 = vld [vmem:[%s85 + $0x18] sm:$0xff]
    %v3190 = vld [vmem:[%s85 + $0x20] sm:$0xff]
    %v3191 = vld [vmem:[%s85 + $0x28] sm:$0xff]
    %v3192 = vld [vmem:[%s85 + $0x30] sm:$0xff]
    %v3193 = vld [vmem:[%s85 + $0x38] sm:$0xff]
    %v3194 = vld [vmem:[%s85 + $0x40] sm:$0xff]
    %v3195 = vld [vmem:[%s85 + $0x48] sm:$0xff]
    %v3196 = vld [vmem:[%s85 + $0x50] sm:$0xff]
    %v3197 = vld [vmem:[%s85 + $0x58] sm:$0xff]
    %v3198 = vld [vmem:[%s85 + $0x60] sm:$0xff]
    %v3199 = vld [vmem:[%s85 + $0x68] sm:$0xff]
    %v3200 = vld [vmem:[%s85 + $0x70] sm:$0xff]
    %v3201 = vld [vmem:[%s85 + $0x78] sm:$0xff]
    %v3218 = vunpack.c.l.b16 %v3186
    %v3219 = vunpack.c.h.b16 %v3186
    %v3220 = vunpack.c.l.b16 %v3187
    %v3221 = vunpack.c.h.b16 %v3187
    %v3222 = vunpack.c.l.b16 %v3188
    %v3223 = vunpack.c.h.b16 %v3188
    %v3224 = vunpack.c.l.b16 %v3189
    %v3225 = vunpack.c.h.b16 %v3189
    %v3226 = vunpack.c.l.b16 %v3190
    %v3227 = vunpack.c.h.b16 %v3190
    %v3228 = vunpack.c.l.b16 %v3191
    %v3229 = vunpack.c.h.b16 %v3191
    %v3230 = vunpack.c.l.b16 %v3192
    %v3231 = vunpack.c.h.b16 %v3192
    %v3232 = vunpack.c.l.b16 %v3193
    %v3233 = vunpack.c.h.b16 %v3193
    %v3234 = vunpack.c.l.b16 %v3194
    %v3235 = vunpack.c.h.b16 %v3194
    %v3236 = vunpack.c.l.b16 %v3195
    %v3237 = vunpack.c.h.b16 %v3195
    %v3238 = vunpack.c.l.b16 %v3196
    %v3239 = vunpack.c.h.b16 %v3196
    %v3240 = vunpack.c.l.b16 %v3197
    %v3241 = vunpack.c.h.b16 %v3197
    %v3242 = vunpack.c.l.b16 %v3198
    %v3243 = vunpack.c.h.b16 %v3198
    %v3244 = vunpack.c.l.b16 %v3199
    %v3245 = vunpack.c.h.b16 %v3199
    %v3246 = vunpack.c.l.b16 %v3200
    %v3247 = vunpack.c.h.b16 %v3200
    %v3248 = vunpack.c.l.b16 %v3201
    %v3249 = vunpack.c.h.b16 %v3201
    %v3250 = vpack.c.b16 %v3220, %v3218
    %v3251 = vpack.c.b16 %v3221, %v3219
    %v3252 = vpack.c.b16 %v3224, %v3222
    %v3253 = vpack.c.b16 %v3225, %v3223
    %v3254 = vpack.c.b16 %v3228, %v3226
    %v3255 = vpack.c.b16 %v3229, %v3227
    %v3256 = vpack.c.b16 %v3232, %v3230
    %v3257 = vpack.c.b16 %v3233, %v3231
    %v3258 = vpack.c.b16 %v3236, %v3234
    %v3259 = vpack.c.b16 %v3237, %v3235
    %v3260 = vpack.c.b16 %v3240, %v3238
    %v3261 = vpack.c.b16 %v3241, %v3239
    %v3262 = vpack.c.b16 %v3244, %v3242
    %v3263 = vpack.c.b16 %v3245, %v3243
    %v3264 = vpack.c.b16 %v3248, %v3246
    %v3265 = vpack.c.b16 %v3249, %v3247
    %3282 = vmatprep.subr.bf16.mxu0 %v3251
    %3283 = vmatpush1.bf16.msra.mxu0 %v3250
    %3284 = vmatprep.subr.bf16.mxu0 %v3253
    %3285 = vmatpush1.bf16.msra.mxu0 %v3252
    %3286 = vmatprep.subr.bf16.mxu0 %v3255
    %3287 = vmatpush1.bf16.msra.mxu0 %v3254
    %3288 = vmatprep.subr.bf16.mxu0 %v3257
    %3289 = vmatpush1.bf16.msra.mxu0 %v3256
    %3290 = vmatprep.subr.bf16.mxu0 %v3259
    %3291 = vmatpush1.bf16.msra.mxu0 %v3258
    %3292 = vmatprep.subr.bf16.mxu0 %v3261
    %3293 = vmatpush1.bf16.msra.mxu0 %v3260
    %3294 = vmatprep.subr.bf16.mxu0 %v3263
    %3295 = vmatpush1.bf16.msra.mxu0 %v3262
    %3296 = vmatprep.subr.bf16.mxu0 %v3265
    %3297 = vmatpush1.bf16.msra.mxu0 %v3264
    %3298 = vmatprep.subr.bf16.mxu0 0
    %3299 = vmatpush1.bf16.msra.mxu0 0
    %3300 = vmatprep.subr.bf16.mxu0 0
    %3301 = vmatpush1.bf16.msra.mxu0 0
    %3302 = vmatprep.subr.bf16.mxu0 0
    %3303 = vmatpush1.bf16.msra.mxu0 0
    %3304 = vmatprep.subr.bf16.mxu0 0
    %3305 = vmatpush1.bf16.msra.mxu0 0
    %3306 = vmatprep.subr.bf16.mxu0 0
    %3307 = vmatpush1.bf16.msra.mxu0 0
    %3308 = vmatprep.subr.bf16.mxu0 0
    %3309 = vmatpush1.bf16.msra.mxu0 0
    %3310 = vmatprep.subr.bf16.mxu0 0
    %3311 = vmatpush1.bf16.msra.mxu0 0
    %3312 = vmatprep.subr.bf16.mxu0 0
    %3313 = vmatpush1.bf16.msra.mxu0 0
    %3314 = vmatprep.mubr.bf16.mxu0 0
    %3315 = vmatmul.mubr.bf16.gmra.mrb[0].mxu0 %v3185
    %v3316 = vpop.f32.mrb[0].mxu0
    %v3317 = vadd.f32 0.0, %v3316
    %v3318 = vpop.f32.mrb[0].mxu0
    %v3319 = vadd.f32 0.0, %v3318
    %v3320 = vpop.f32.mrb[0].mxu0
    %v3321 = vadd.f32 0.0, %v3320
    %v3322 = vpop.f32.mrb[0].mxu0
    %v3323 = vadd.f32 0.0, %v3322
    %3324 = vdwg.mxu0
    %v3325 = vmax.f32 %v3317, 0.0
    %v3326 = vmax.f32 %v3321, 0.0
    %v3327 = vadd.f32 %v3325, 1e-07
    %v3328 = vadd.f32 %v3326, 1e-07
    %v3329 = vstv %s3184
    %v3330 = vmul.f32 %v3327, %v3329
    %v3331 = vmul.f32 %v3328, %v3329
    %v3332 = vmax.f32 %v3330, %v3331
    %v3333 = vrot.slane %v3332, 4
    %v3334 = vmax.f32 %v3332, %v3333
    %v3335 = vrot.slane %v3334, 2
    %v3336 = vmax.f32 %v3334, %v3335
    %v3337 = vrot.slane %v3336, 1
    %v3338 = vmax.f32 %v3336, %v3337
    %v3339 = vsub.f32 %v3330, %v3338
    %v3340 = vsub.f32 %v3331, %v3338
    %v3341 = vmul.f32 %v3339, 1.442695
    %v3342 = vpow.pop %v3341
    %v3343 = vmul.f32 %v3340, 1.442695
    %v3344 = vpow.pop %v3343
    %v3345 = vmul.f32 %v3342, %v3327
    %v3346 = vmul.f32 %v3344, %v3328
    %v3347 = vpack.c.bf16 %v3346, %v3345
    %v3348 = vpack.c.bf16 %v3344, %v3342
    %3349 = vmatprep.subr.bf16.mxu0 %v3348
    %3350 = vmatpush1.bf16.msra.mxu0 %v3347
    %3351 = vmatprep.subr.bf16.mxu0 0
    %3352 = vmatpush1.bf16.msra.mxu0 0
    %3353 = vmatprep.subr.bf16.mxu0 0
    %3354 = vmatpush1.bf16.msra.mxu0 0
    %3355 = vmatprep.subr.bf16.mxu0 0
    %3356 = vmatpush1.bf16.msra.mxu0 0
    %3357 = vmatprep.subr.bf16.mxu0 0
    %3358 = vmatpush1.bf16.msra.mxu0 0
    %3359 = vmatprep.subr.bf16.mxu0 0
    %3360 = vmatpush1.bf16.msra.mxu0 0
    %3361 = vmatprep.subr.bf16.mxu0 0
    %3362 = vmatpush1.bf16.msra.mxu0 0
    %3363 = vmatprep.subr.bf16.mxu0 0
    %3364 = vmatpush1.bf16.msra.mxu0 0
    %3365 = vmatprep.subr.bf16.mxu0 0
    %3366 = vmatpush1.bf16.msra.mxu0 0
    %3367 = vmatprep.subr.bf16.mxu0 0
    %3368 = vmatpush1.bf16.msra.mxu0 0
    %3369 = vmatprep.subr.bf16.mxu0 0
    %3370 = vmatpush1.bf16.msra.mxu0 0
    %3371 = vmatprep.subr.bf16.mxu0 0
    %3372 = vmatpush1.bf16.msra.mxu0 0
    %3373 = vmatprep.subr.bf16.mxu0 0
    %3374 = vmatpush1.bf16.msra.mxu0 0
    %3375 = vmatprep.subr.bf16.mxu0 0
    %3376 = vmatpush1.bf16.msra.mxu0 0
    %3377 = vmatprep.subr.bf16.mxu0 0
    %3378 = vmatpush1.bf16.msra.mxu0 0
    %3379 = vmatprep.subr.bf16.mxu0 0
    %3380 = vmatpush1.bf16.msra.mxu0 0
    %3381 = vmatprep.mubr.bf16.mxu0 0
    %3382 = vmatmul.mubr.bf16.gmra.mrb[0].mxu0 %v396
    %v3383 = vpop.f32.mrb[0].mxu0
    %v3384 = vadd.f32 0.0, %v3383
    %v3385 = vpop.f32.mrb[0].mxu0
    %v3386 = vadd.f32 0.0, %v3385
    %v3387 = vpop.f32.mrb[0].mxu0
    %v3388 = vadd.f32 0.0, %v3387
    %v3389 = vpop.f32.mrb[0].mxu0
    %v3390 = vadd.f32 0.0, %v3389
    %3391 = vdwg.mxu0
    %v3392 = vadd.f32 %v3386, 1e-16
    %v3393 = vadd.f32 %v3390, 1e-16
    %v3394 = vrcp.pop %v3392
    %v3395 = vmul.f32 %v3384, %v3394
    %v3396 = vrcp.pop %v3393
    %v3397 = vmul.f32 %v3388, %v3396
    %v3398 = vadd.f32 %v3395, %v3319
    %v3399 = vadd.f32 %v3397, %v3323
    %v3400 = vpack.c.bf16 %v3399, %v3398
    %v3401 = vld [vmem:[%s87] sm:$0xf]
    %v3402 = vld [vmem:[%s87 + $0x4] sm:$0xf]
    %v3403 = vld [vmem:[%s87 + $0x8] sm:$0xf]
    %v3404 = vld [vmem:[%s87 + $0xc] sm:$0xf]
    %v3405 = vld [vmem:[%s87 + $0x10] sm:$0xf]
    %v3406 = vld [vmem:[%s87 + $0x14] sm:$0xf]
    %v3407 = vld [vmem:[%s87 + $0x18] sm:$0xf]
    %v3408 = vld [vmem:[%s87 + $0x1c] sm:$0xf]
    %v3409 = vld [vmem:[%s87 + $0x20] sm:$0xf]
    %v3410 = vld [vmem:[%s87 + $0x24] sm:$0xf]
    %v3411 = vld [vmem:[%s87 + $0x28] sm:$0xf]
    %v3412 = vld [vmem:[%s87 + $0x2c] sm:$0xf]
    %v3413 = vld [vmem:[%s87 + $0x30] sm:$0xf]
    %v3414 = vld [vmem:[%s87 + $0x34] sm:$0xf]
    %v3415 = vld [vmem:[%s87 + $0x38] sm:$0xf]
    %v3416 = vld [vmem:[%s87 + $0x3c] sm:$0xf]
    %v3433 = vunpack.c.l.b16 %v3401
    %v3434 = vunpack.c.l.b16 %v3402
    %v3435 = vunpack.c.l.b16 %v3403
    %v3436 = vunpack.c.l.b16 %v3404
    %v3437 = vunpack.c.l.b16 %v3405
    %v3438 = vunpack.c.l.b16 %v3406
    %v3439 = vunpack.c.l.b16 %v3407
    %v3440 = vunpack.c.l.b16 %v3408
    %v3441 = vunpack.c.l.b16 %v3409
    %v3442 = vunpack.c.l.b16 %v3410
    %v3443 = vunpack.c.l.b16 %v3411
    %v3444 = vunpack.c.l.b16 %v3412
    %v3445 = vunpack.c.l.b16 %v3413
    %v3446 = vunpack.c.l.b16 %v3414
    %v3447 = vunpack.c.l.b16 %v3415
    %v3448 = vunpack.c.l.b16 %v3416
    %v3449 = vpack.c.b16 %v3434, %v3433
    %v3450 = vpack.c.b16 %v3436, %v3435
    %v3451 = vpack.c.b16 %v3438, %v3437
    %v3452 = vpack.c.b16 %v3440, %v3439
    %v3453 = vpack.c.b16 %v3442, %v3441
    %v3454 = vpack.c.b16 %v3444, %v3443
    %v3455 = vpack.c.b16 %v3446, %v3445
    %v3456 = vpack.c.b16 %v3448, %v3447
    %3465 = vmatprep.subr.bf16.mxu0 0
    %3466 = vmatpush1.bf16.msra.mxu0 %v3449
    %3467 = vmatprep.subr.bf16.mxu0 0
    %3468 = vmatpush1.bf16.msra.mxu0 %v3450
    %3469 = vmatprep.subr.bf16.mxu0 0
    %3470 = vmatpush1.bf16.msra.mxu0 %v3451
    %3471 = vmatprep.subr.bf16.mxu0 0
    %3472 = vmatpush1.bf16.msra.mxu0 %v3452
    %3473 = vmatprep.subr.bf16.mxu0 0
    %3474 = vmatpush1.bf16.msra.mxu0 %v3453
    %3475 = vmatprep.subr.bf16.mxu0 0
    %3476 = vmatpush1.bf16.msra.mxu0 %v3454
    %3477 = vmatprep.subr.bf16.mxu0 0
    %3478 = vmatpush1.bf16.msra.mxu0 %v3455
    %3479 = vmatprep.subr.bf16.mxu0 0
    %3480 = vmatpush1.bf16.msra.mxu0 %v3456
    %3481 = vmatprep.subr.bf16.mxu0 0
    %3482 = vmatpush1.bf16.msra.mxu0 0
    %3483 = vmatprep.subr.bf16.mxu0 0
    %3484 = vmatpush1.bf16.msra.mxu0 0
    %3485 = vmatprep.subr.bf16.mxu0 0
    %3486 = vmatpush1.bf16.msra.mxu0 0
    %3487 = vmatprep.subr.bf16.mxu0 0
    %3488 = vmatpush1.bf16.msra.mxu0 0
    %3489 = vmatprep.subr.bf16.mxu0 0
    %3490 = vmatpush1.bf16.msra.mxu0 0
    %3491 = vmatprep.subr.bf16.mxu0 0
    %3492 = vmatpush1.bf16.msra.mxu0 0
    %3493 = vmatprep.subr.bf16.mxu0 0
    %3494 = vmatpush1.bf16.msra.mxu0 0
    %3495 = vmatprep.subr.bf16.mxu0 0
    %3496 = vmatpush1.bf16.msra.mxu0 0
    %3497 = vmatprep.mubr.bf16.mxu0 0
    %3498 = vmatmul.mubr.bf16.gmra.mrb[0].mxu0 %v3400
    %v3499 = vpop.f32.mrb[0].mxu0
    %v3500 = vadd.f32 0.0, %v3499
    %v3501 = vpop.f32.mrb[0].mxu0
    %v3502 = vpop.f32.mrb[0].mxu0
    %v3503 = vadd.f32 0.0, %v3502
    %v3504 = vpop.f32.mrb[0].mxu0
    %3505 = vdwg.mxu0
    %v3506 = vmul.f32 %v3500, %v3500
    %v3507 = vmul.f32 %v3503, %v3503
    %v3508 = vadd.f32 %v3500, %v3503
    %v3509 = vrot.slane %v3508, 4
    %v3510 = vadd.f32 %v3508, %v3509
    %v3511 = vrot.slane %v3510, 2
    %v3512 = vadd.f32 %v3510, %v3511
    %v3513 = vrot.slane %v3512, 1
    %v3514 = vadd.f32 %v3512, %v3513
    %v3515 = vadd.f32 %v3506, %v3507
    %v3516 = vrot.slane %v3515, 4
    %v3517 = vadd.f32 %v3515, %v3516
    %v3518 = vrot.slane %v3517, 2
    %v3519 = vadd.f32 %v3517, %v3518
    %v3520 = vrot.slane %v3519, 1
    %v3521 = vadd.f32 %v3519, %v3520
    %v3522 = vmul.f32 %v3514, %v571
    %v3523 = vmul.f32 %v3521, %v571
    %v3524 = vmul.f32 %v3522, %v3522
    %v3525 = vsub.f32 %v3523, %v3524
    %v3526 = vmax.f32 %v3525, 0.0
    %v3527 = vsub.f32 %v3500, %v3522
    %v3528 = vsub.f32 %v3503, %v3522
    %v3529 = vadd.f32 %v3526, 1e-05
    %v3530 = vrsqrt.pop %v3529
    %v3531 = vmul.f32 %v3527, %v3530
    %v3532 = vmul.f32 %v3528, %v3530
    %v3533 = vld [vmem:[%s89] sm:$0x1]
    %v3535 = vlaneseq
    %v3536 = vshrl.u32 %v3535, 7
    %v3537 = vsub.s32 0, %v3536
    %v3538 = vrot.slane %v3533, %v3537
    %v3540 = vmul.f32 %v3531, %v3538
    %v3541 = vmul.f32 %v3532, %v3538
    %v3542 = vld [vmem:[%s91] sm:$0x1]
    %v3544 = vlaneseq
    %v3545 = vshrl.u32 %v3544, 7
    %v3546 = vsub.s32 0, %v3545
    %v3547 = vrot.slane %v3542, %v3546
    %v3549 = vadd.f32 %v3540, %v3547
    %v3550 = vadd.f32 %v3541, %v3547
    %v3551 = vmax.f32 %v3549, 0.0
    %v3552 = vmax.f32 %v3550, 0.0
    %v3553 = vpack.c.bf16 %v3552, %v3551
    %v3554 = vld [vmem:[%s93] sm:$0xf]
    %v3555 = vld [vmem:[%s93 + $0x4] sm:$0xf]
    %v3556 = vld [vmem:[%s93 + $0x8] sm:$0xf]
    %v3557 = vld [vmem:[%s93 + $0xc] sm:$0xf]
    %v3558 = vld [vmem:[%s93 + $0x10] sm:$0xf]
    %v3559 = vld [vmem:[%s93 + $0x14] sm:$0xf]
    %v3560 = vld [vmem:[%s93 + $0x18] sm:$0xf]
    %v3561 = vld [vmem:[%s93 + $0x1c] sm:$0xf]
    %v3562 = vld [vmem:[%s93 + $0x20] sm:$0xf]
    %v3563 = vld [vmem:[%s93 + $0x24] sm:$0xf]
    %v3564 = vld [vmem:[%s93 + $0x28] sm:$0xf]
    %v3565 = vld [vmem:[%s93 + $0x2c] sm:$0xf]
    %v3566 = vld [vmem:[%s93 + $0x30] sm:$0xf]
    %v3567 = vld [vmem:[%s93 + $0x34] sm:$0xf]
    %v3568 = vld [vmem:[%s93 + $0x38] sm:$0xf]
    %v3569 = vld [vmem:[%s93 + $0x3c] sm:$0xf]
    %v3570 = vld [vmem:[%s95] sm:$0x1]
    %v3572 = vlaneseq
    %v3573 = vshrl.u32 %v3572, 7
    %v3574 = vsub.s32 0, %v3573
    %v3575 = vrot.slane %v3570, %v3574
    %v3593 = vunpack.c.l.b16 %v3554
    %v3594 = vunpack.c.l.b16 %v3555
    %v3595 = vunpack.c.l.b16 %v3556
    %v3596 = vunpack.c.l.b16 %v3557
    %v3597 = vunpack.c.l.b16 %v3558
    %v3598 = vunpack.c.l.b16 %v3559
    %v3599 = vunpack.c.l.b16 %v3560
    %v3600 = vunpack.c.l.b16 %v3561
    %v3601 = vunpack.c.l.b16 %v3562
    %v3602 = vunpack.c.l.b16 %v3563
    %v3603 = vunpack.c.l.b16 %v3564
    %v3604 = vunpack.c.l.b16 %v3565
    %v3605 = vunpack.c.l.b16 %v3566
    %v3606 = vunpack.c.l.b16 %v3567
    %v3607 = vunpack.c.l.b16 %v3568
    %v3608 = vunpack.c.l.b16 %v3569
    %v3609 = vpack.c.b16 %v3594, %v3593
    %v3610 = vpack.c.b16 %v3596, %v3595
    %v3611 = vpack.c.b16 %v3598, %v3597
    %v3612 = vpack.c.b16 %v3600, %v3599
    %v3613 = vpack.c.b16 %v3602, %v3601
    %v3614 = vpack.c.b16 %v3604, %v3603
    %v3615 = vpack.c.b16 %v3606, %v3605
    %v3616 = vpack.c.b16 %v3608, %v3607
    %3625 = vmatprep.subr.bf16.mxu0 0
    %3626 = vmatpush1.bf16.msra.mxu0 %v3609
    %3627 = vmatprep.subr.bf16.mxu0 0
    %3628 = vmatpush1.bf16.msra.mxu0 %v3610
    %3629 = vmatprep.subr.bf16.mxu0 0
    %3630 = vmatpush1.bf16.msra.mxu0 %v3611
    %3631 = vmatprep.subr.bf16.mxu0 0
    %3632 = vmatpush1.bf16.msra.mxu0 %v3612
    %3633 = vmatprep.subr.bf16.mxu0 0
    %3634 = vmatpush1.bf16.msra.mxu0 %v3613
    %3635 = vmatprep.subr.bf16.mxu0 0
    %3636 = vmatpush1.bf16.msra.mxu0 %v3614
    %3637 = vmatprep.subr.bf16.mxu0 0
    %3638 = vmatpush1.bf16.msra.mxu0 %v3615
    %3639 = vmatprep.subr.bf16.mxu0 0
    %3640 = vmatpush1.bf16.msra.mxu0 %v3616
    %3641 = vmatprep.subr.bf16.mxu0 0
    %3642 = vmatpush1.bf16.msra.mxu0 0
    %3643 = vmatprep.subr.bf16.mxu0 0
    %3644 = vmatpush1.bf16.msra.mxu0 0
    %3645 = vmatprep.subr.bf16.mxu0 0
    %3646 = vmatpush1.bf16.msra.mxu0 0
    %3647 = vmatprep.subr.bf16.mxu0 0
    %3648 = vmatpush1.bf16.msra.mxu0 0
    %3649 = vmatprep.subr.bf16.mxu0 0
    %3650 = vmatpush1.bf16.msra.mxu0 0
    %3651 = vmatprep.subr.bf16.mxu0 0
    %3652 = vmatpush1.bf16.msra.mxu0 0
    %3653 = vmatprep.subr.bf16.mxu0 0
    %3654 = vmatpush1.bf16.msra.mxu0 0
    %3655 = vmatprep.subr.bf16.mxu0 0
    %3656 = vmatpush1.bf16.msra.mxu0 0
    %3657 = vmatprep.mubr.bf16.mxu0 0
    %3658 = vmatmul.mubr.bf16.gmra.mrb[0].mxu0 %v3553
    %v3659 = vpop.f32.mrb[0].mxu0
    %v3660 = vadd.f32 %v3575, %v3659
    %v3661 = vpop.f32.mrb[0].mxu0
    %v3662 = vpop.f32.mrb[0].mxu0
    %v3663 = vadd.f32 %v3575, %v3662
    %v3664 = vpop.f32.mrb[0].mxu0
    %3665 = vdwg.mxu0
    %s3666 = scalar_lea.vmem %s5, 96
    %v3667 = vld [vmem:[%s3666] sm:$0xff]
    %v3668 = vld [vmem:[%s3666 + $0x8] sm:$0xff]
    %v3669 = vadd.f32 %v3660, %v3667
    %v3670 = vadd.f32 %v3663, %v3668
    %s3671 = scalar_lea.vmem %s7, 96
    %v3672 = vld [vmem:[%s3671] sm:$0xff]
    %v3673 = vld [vmem:[%s3671 + $0x8] sm:$0xff]
    %v3674 = vmul.f32 %v3669, %v3672
    %v3675 = vmul.f32 %v3670, %v3673
    %v3676 = vpack.c.bf16 %v3675, %v3674
    %3677 = vmatprep.subr.bf16.mxu0 0
    %3678 = vmatpush1.bf16.msra.mxu0 %v3676
    %3679 = vmatprep.subr.bf16.mxu0 0
    %3680 = vmatpush1.bf16.msra.mxu0 0
    %3681 = vmatprep.subr.bf16.mxu0 0
    %3682 = vmatpush1.bf16.msra.mxu0 0
    %3683 = vmatprep.subr.bf16.mxu0 0
    %3684 = vmatpush1.bf16.msra.mxu0 0
    %3685 = vmatprep.subr.bf16.mxu0 0
    %3686 = vmatpush1.bf16.msra.mxu0 0
    %3687 = vmatprep.subr.bf16.mxu0 0
    %3688 = vmatpush1.bf16.msra.mxu0 0
    %3689 = vmatprep.subr.bf16.mxu0 0
    %3690 = vmatpush1.bf16.msra.mxu0 0
    %3691 = vmatprep.subr.bf16.mxu0 0
    %3692 = vmatpush1.bf16.msra.mxu0 0
    %3693 = vmatprep.subr.bf16.mxu0 0
    %3694 = vmatpush1.bf16.msra.mxu0 0
    %3695 = vmatprep.subr.bf16.mxu0 0
    %3696 = vmatpush1.bf16.msra.mxu0 0
    %3697 = vmatprep.subr.bf16.mxu0 0
    %3698 = vmatpush1.bf16.msra.mxu0 0
    %3699 = vmatprep.subr.bf16.mxu0 0
    %3700 = vmatpush1.bf16.msra.mxu0 0
    %3701 = vmatprep.subr.bf16.mxu0 0
    %3702 = vmatpush1.bf16.msra.mxu0 0
    %3703 = vmatprep.subr.bf16.mxu0 0
    %3704 = vmatpush1.bf16.msra.mxu0 0
    %3705 = vmatprep.subr.bf16.mxu0 0
    %3706 = vmatpush1.bf16.msra.mxu0 0
    %3707 = vmatprep.subr.bf16.mxu0 0
    %3708 = vmatpush1.bf16.msra.mxu0 0
    %3709 = vmatprep.mubr.bf16.mxu0 0
    %3710 = vmatmul.mubr.bf16.gmra.mrb[0].mxu0 %v396
    %v3711 = vpop.f32.mrb[0].mxu0
    %v3712 = vadd.f32 0.0, %v3711
    %v3713 = vpop.f32.mrb[0].mxu0
    %v3714 = vpop.f32.mrb[0].mxu0
    %v3715 = vadd.f32 0.0, %v3714
    %v3716 = vpop.f32.mrb[0].mxu0
    %3717 = vdwg.mxu0
    %v3718 = vld [vmem:[%s11] sm:$0xff]
    %v3719 = vld [vmem:[%s11 + $0x8] sm:$0xff]
    %v3720 = vmul.f32 %v3712, %v3718
    %v3721 = vmul.f32 %v3715, %v3719
    %v3722 = vpack.c.bf16 %v3721, %v3720
    %v3723 = vld [vmem:[%s97] sm:$0xf]
    %v3724 = vld [vmem:[%s97 + $0x4] sm:$0xf]
    %v3725 = vld [vmem:[%s97 + $0x8] sm:$0xf]
    %v3726 = vld [vmem:[%s97 + $0xc] sm:$0xf]
    %v3727 = vld [vmem:[%s97 + $0x10] sm:$0xf]
    %v3728 = vld [vmem:[%s97 + $0x14] sm:$0xf]
    %v3729 = vld [vmem:[%s97 + $0x18] sm:$0xf]
    %v3730 = vld [vmem:[%s97 + $0x1c] sm:$0xf]
    %v3731 = vld [vmem:[%s97 + $0x20] sm:$0xf]
    %v3732 = vld [vmem:[%s97 + $0x24] sm:$0xf]
    %v3733 = vld [vmem:[%s97 + $0x28] sm:$0xf]
    %v3734 = vld [vmem:[%s97 + $0x2c] sm:$0xf]
    %v3735 = vld [vmem:[%s97 + $0x30] sm:$0xf]
    %v3736 = vld [vmem:[%s97 + $0x34] sm:$0xf]
    %v3737 = vld [vmem:[%s97 + $0x38] sm:$0xf]
    %v3738 = vld [vmem:[%s97 + $0x3c] sm:$0xf]
    %v3739 = vld [vmem:[%s97 + $0x40] sm:$0xf]
    %v3740 = vld [vmem:[%s97 + $0x44] sm:$0xf]
    %v3741 = vld [vmem:[%s97 + $0x48] sm:$0xf]
    %v3742 = vld [vmem:[%s97 + $0x4c] sm:$0xf]
    %v3743 = vld [vmem:[%s97 + $0x50] sm:$0xf]
    %v3744 = vld [vmem:[%s97 + $0x54] sm:$0xf]
    %v3745 = vld [vmem:[%s97 + $0x58] sm:$0xf]
    %v3746 = vld [vmem:[%s97 + $0x5c] sm:$0xf]
    %v3747 = vld [vmem:[%s97 + $0x60] sm:$0xf]
    %v3748 = vld [vmem:[%s97 + $0x64] sm:$0xf]
    %v3749 = vld [vmem:[%s97 + $0x68] sm:$0xf]
    %v3750 = vld [vmem:[%s97 + $0x6c] sm:$0xf]
    %v3751 = vld [vmem:[%s97 + $0x70] sm:$0xf]
    %v3752 = vld [vmem:[%s97 + $0x74] sm:$0xf]
    %v3753 = vld [vmem:[%s97 + $0x78] sm:$0xf]
    %v3754 = vld [vmem:[%s97 + $0x7c] sm:$0xf]
    %v3755 = vld [vmem:[%s99] sm:$0x1]
    %v3757 = vlaneseq
    %v3758 = vshrl.u32 %v3757, 7
    %v3759 = vsub.s32 0, %v3758
    %v3760 = vrot.slane %v3755, %v3759
    %v3794 = vunpack.c.l.b16 %v3723
    %v3795 = vunpack.c.l.b16 %v3724
    %v3796 = vunpack.c.l.b16 %v3725
    %v3797 = vunpack.c.l.b16 %v3726
    %v3798 = vunpack.c.l.b16 %v3727
    %v3799 = vunpack.c.l.b16 %v3728
    %v3800 = vunpack.c.l.b16 %v3729
    %v3801 = vunpack.c.l.b16 %v3730
    %v3802 = vunpack.c.l.b16 %v3731
    %v3803 = vunpack.c.l.b16 %v3732
    %v3804 = vunpack.c.l.b16 %v3733
    %v3805 = vunpack.c.l.b16 %v3734
    %v3806 = vunpack.c.l.b16 %v3735
    %v3807 = vunpack.c.l.b16 %v3736
    %v3808 = vunpack.c.l.b16 %v3737
    %v3809 = vunpack.c.l.b16 %v3738
    %v3810 = vunpack.c.l.b16 %v3739
    %v3811 = vunpack.c.l.b16 %v3740
    %v3812 = vunpack.c.l.b16 %v3741
    %v3813 = vunpack.c.l.b16 %v3742
    %v3814 = vunpack.c.l.b16 %v3743
    %v3815 = vunpack.c.l.b16 %v3744
    %v3816 = vunpack.c.l.b16 %v3745
    %v3817 = vunpack.c.l.b16 %v3746
    %v3818 = vunpack.c.l.b16 %v3747
    %v3819 = vunpack.c.l.b16 %v3748
    %v3820 = vunpack.c.l.b16 %v3749
    %v3821 = vunpack.c.l.b16 %v3750
    %v3822 = vunpack.c.l.b16 %v3751
    %v3823 = vunpack.c.l.b16 %v3752
    %v3824 = vunpack.c.l.b16 %v3753
    %v3825 = vunpack.c.l.b16 %v3754
    %v3826 = vpack.c.b16 %v3795, %v3794
    %v3827 = vpack.c.b16 %v3797, %v3796
    %v3828 = vpack.c.b16 %v3799, %v3798
    %v3829 = vpack.c.b16 %v3801, %v3800
    %v3830 = vpack.c.b16 %v3803, %v3802
    %v3831 = vpack.c.b16 %v3805, %v3804
    %v3832 = vpack.c.b16 %v3807, %v3806
    %v3833 = vpack.c.b16 %v3809, %v3808
    %v3834 = vpack.c.b16 %v3811, %v3810
    %v3835 = vpack.c.b16 %v3813, %v3812
    %v3836 = vpack.c.b16 %v3815, %v3814
    %v3837 = vpack.c.b16 %v3817, %v3816
    %v3838 = vpack.c.b16 %v3819, %v3818
    %v3839 = vpack.c.b16 %v3821, %v3820
    %v3840 = vpack.c.b16 %v3823, %v3822
    %v3841 = vpack.c.b16 %v3825, %v3824
    %3858 = vmatprep.subr.bf16.mxu0 0
    %3859 = vmatpush1.bf16.msra.mxu0 %v3826
    %3860 = vmatprep.subr.bf16.mxu0 0
    %3861 = vmatpush1.bf16.msra.mxu0 %v3827
    %3862 = vmatprep.subr.bf16.mxu0 0
    %3863 = vmatpush1.bf16.msra.mxu0 %v3828
    %3864 = vmatprep.subr.bf16.mxu0 0
    %3865 = vmatpush1.bf16.msra.mxu0 %v3829
    %3866 = vmatprep.subr.bf16.mxu0 0
    %3867 = vmatpush1.bf16.msra.mxu0 %v3830
    %3868 = vmatprep.subr.bf16.mxu0 0
    %3869 = vmatpush1.bf16.msra.mxu0 %v3831
    %3870 = vmatprep.subr.bf16.mxu0 0
    %3871 = vmatpush1.bf16.msra.mxu0 %v3832
    %3872 = vmatprep.subr.bf16.mxu0 0
    %3873 = vmatpush1.bf16.msra.mxu0 %v3833
    %3874 = vmatprep.subr.bf16.mxu0 0
    %3875 = vmatpush1.bf16.msra.mxu0 %v3834
    %3876 = vmatprep.subr.bf16.mxu0 0
    %3877 = vmatpush1.bf16.msra.mxu0 %v3835
    %3878 = vmatprep.subr.bf16.mxu0 0
    %3879 = vmatpush1.bf16.msra.mxu0 %v3836
    %3880 = vmatprep.subr.bf16.mxu0 0
    %3881 = vmatpush1.bf16.msra.mxu0 %v3837
    %3882 = vmatprep.subr.bf16.mxu0 0
    %3883 = vmatpush1.bf16.msra.mxu0 %v3838
    %3884 = vmatprep.subr.bf16.mxu0 0
    %3885 = vmatpush1.bf16.msra.mxu0 %v3839
    %3886 = vmatprep.subr.bf16.mxu0 0
    %3887 = vmatpush1.bf16.msra.mxu0 %v3840
    %3888 = vmatprep.subr.bf16.mxu0 0
    %3889 = vmatpush1.bf16.msra.mxu0 %v3841
    %3890 = vmatprep.mubr.bf16.mxu0 %v3676
    %3891 = vmatmul.mubr.bf16.gmra.mrb[0].mxu0 %v3722
    %v3892 = vpop.f32.mrb[0].mxu0
    %v3893 = vadd.f32 %v3760, %v3892
    %v3894 = vpop.f32.mrb[0].mxu0
    %v3895 = vpop.f32.mrb[0].mxu0
    %v3896 = vadd.f32 %v3760, %v3895
    %v3897 = vpop.f32.mrb[0].mxu0
    %3898 = vdwg.mxu0
    %3899 = vst [vmem:[%s101] sm:$0xff] %v3893
    %3900 = vst [vmem:[%s101 + $0x8] sm:$0xff] %v3896
    // Predicated region
    $region206: #{gcn_forward.1} parent=1 // pred_check
      _
    $region207: #{gcn_forward.1} parent=1 // pred_check_branch
      %3902 = sbr.rel (0) target = $region209
    $region208: #{gcn_forward.1} parent=1 // pred_region
      _
    $region209: #{gcn_forward.1} parent=1 // pred_fallthru
      _
    // Predicated region
    $region210: #{gcn_forward.1} parent=1 // pred_check
      _
    $region211: #{gcn_forward.1} parent=1 // pred_check_branch
      %3904 = sbr.rel (0) target = $region213
    $region212: #{gcn_forward.1} parent=1 // pred_region
      _
    $region213: #{gcn_forward.1} parent=1 // pred_fallthru
      _
    %3905 = vsyncpa [#allocation3], 1

</llo_original>
